<compile_context>
chip_gen: v6e
topology: v6e:2x2x1
jax: 0.10.0
libtpu: 0.0.40
codegen_flags: <defaults>
</compile_context>

<pallas_src>
import numpy as np
import jax
import jax.numpy as jnp
from jax import lax
from jax.experimental import pallas as pl
from jax.experimental.pallas import tpu as pltpu

# Deterministic "parameters" (same values as the nn.Parameter init in __init__).
KEY_P, A_P, B_P, C_P, D_P, E_P = 0.18, 2.51, 0.03, 2.43, 0.59, 0.14
WHITE_NITS = 200.0
GAMMA = 2.2
CS_RATIO = 2.0
NUM_SCALES = 13
W_DINOS = 0.9
B_DINOS = 1.0
KERNEL_SIGMAS = 2

# MXU operand dtype for the blur matmuls (accumulation stays f32).  Set to
# jnp.float32 for a bit-closer match against the PyTorch float reference.
MATMUL_DTYPE = jnp.bfloat16


# ------------------------------------------------------------ host helpers --

def generate_scales(width, cs_ratio=CS_RATIO, num_scales=NUM_SCALES):
    # TODO(synk): generate_scales is not defined in the reference source;
    # implemented as a geometric progression sigma_i = cs_ratio**i
    # (matching its (width, cs_ratio, num_scales) signature).
    del width
    return [float(cs_ratio) ** i for i in range(num_scales)]


def _gaussian_kernel1d(kernel_size, sigma):
    # Matches torchvision's _get_gaussian_kernel1d.
    half = (kernel_size - 1) * 0.5
    xs = np.linspace(-half, half, kernel_size)
    pdf = np.exp(-0.5 * (xs / float(sigma)) ** 2)
    return pdf / pdf.sum()


def _reflect_blur_matrix(n, k1d):
    """n x n operator B with (B @ v) == 1-D Gaussian blur of v under reflect
    padding (no edge repeat); the padding is folded into the matrix."""
    K = len(k1d)
    p = K // 2
    idx = np.arange(n)[:, None] - p + np.arange(K)[None, :]   # tap source index
    if n > 1:
        period = 2 * (n - 1)
        idx = np.abs(idx) % period
        idx = np.where(idx >= n, period - idx, idx)
    else:
        idx = np.zeros_like(idx)
    M = np.zeros((n, n), np.float64)
    np.add.at(M, (np.repeat(np.arange(n), K), idx.ravel()), np.tile(k1d, n))
    return M


def _build_blur_operators(H, W, scales):
    """Vertical operators (S, H, H) and (if H != W) horizontal operators
    (S, W, W).  The horizontal pass uses tmp @ B^T via dot_general, so no
    pre-transposed copy is built."""
    cap = 2 * min(H, W) - 1          # reference: min(*image.size())*2 - 1
    bv, bh = [], []
    for sigma in scales:
        ksize = int(2 * KERNEL_SIGMAS * sigma + 1) | 1
        ksize = min(ksize, cap)
        k1d = _gaussian_kernel1d(ksize, sigma)
        bv.append(_reflect_blur_matrix(H, k1d))
        if W != H:
            bh.append(_reflect_blur_matrix(W, k1d))
    bv = np.stack(bv, axis=0).astype(np.float32)               # (S, H, H)
    bh = None if W == H else np.stack(bh, axis=0).astype(np.float32)
    return bv, bh


def _pick_row_tile(H):
    for tm in (128, 64, 32, 16, 8):
        if H % tm == 0:
            return tm
    return H   # ragged H: fall back to a single full-height tile


# ---------------------------------------------------------------- kernels ---

def _tonemap_kernel(scale_ref, x_ref, lg_ref):
    """ACES tonemap + clip + Fairchild luminance + white_nits + gamma -> Lg."""
    xn = scale_ref[0] * x_ref[...]                   # key / rms(x) * x
    num = xn * (A_P * xn + B_P)
    den = xn * (C_P * xn + D_P) + E_P
    t = jnp.clip(num / den, 0.0, 1.0)                # ACES curve + clip [0,1]
    L = (0.1904 * t[0] + 0.7646 * t[1] + 0.045 * t[2]) * WHITE_NITS
    lg_ref[...] = (L ** jnp.float32(1.0 / GAMMA)).astype(lg_ref.dtype)


def _make_dinos_kernel(S):
    def kernel(consts_ref, lg_ref, bv_ref, bh_ref, o_ref, center_ref):
        s = pl.program_id(1)

        # Vertical reflect-padded blur of this output row tile: (TM,H)@(H,W).
        tmp = jnp.dot(bv_ref[...], lg_ref[...],
                      preferred_element_type=jnp.float32)          # (TM, W) f32
        # Horizontal pass: tmp @ Bh_s^T (contract last axes; no transposed copy).
        blurred = lax.dot_general(
            tmp.astype(bh_ref.dtype), bh_ref[...],
            dimension_numbers=(((1,), (1,)), ((), ())),
            preferred_element_type=jnp.float32)                    # (TM, W) f32

        @pl.when(s == 0)
        def _():
            o_ref[...] = jnp.zeros_like(o_ref)       # DINOS accumulator init

        @pl.when(s > 0)
        def _():
            bd = consts_ref[s]          # _b == _d == b / scales[s]**2
            wt = consts_ref[S + s]      # weights[s-1] == w**(s-1)
            # Exact division (correctness review); _b/_d == 1.0 exactly.
            ratio = (center_ref[...] + bd) / (blurred + bd)
            o_ref[...] += wt * (ratio - 1.0)

        center_ref[...] = blurred       # carry this scale's blur to next step

    return kernel


# ------------------------------------------------------------------ wrapper -

def aces_forward(x):
    x = jnp.asarray(x, jnp.float32)

    # Global RMS reduction hoisted out of the kernels (perf review): one
    # scalar, handed to the tonemap prologue through SMEM.
    msq = jnp.mean(x * x)
    scale = (KEY_P * lax.rsqrt(msq)).reshape(1).astype(jnp.float32)

    xs = jnp.squeeze(x)                              # (H, W, 3)
    H, W, C = xs.shape
    assert C == 3
    x_chw = jnp.transpose(xs, (2, 0, 1))             # (3, H, W): W on lanes

    TM = _pick_row_tile(H)
    n_rows = H // TM
    opb = jnp.dtype(MATMUL_DTYPE).itemsize

    # ---- prologue: per-pixel tonemap/luminance, row-tiled & parallel --------
    vmem_p = 2 * (3 * TM * W * 4) + 2 * (TM * W * opb)
    lg = pl.pallas_call(
        _tonemap_kernel,
        grid=(n_rows,),
        in_specs=[pl.BlockSpec(memory_space=pltpu.MemorySpace.SMEM),   # scale
                  pl.BlockSpec((3, TM, W), lambda i: (0, i, 0))],      # x rows
        out_specs=pl.BlockSpec((TM, W), lambda i: (i, 0)),
        out_shape=jax.ShapeDtypeStruct((H, W), MATMUL_DTYPE),
        compiler_params=pltpu.CompilerParams(
            dimension_semantics=("parallel",),
            vmem_limit_bytes=int(min(64 << 20, max(16 << 20, vmem_p + (8 << 20))))),
    )(scale, x_chw)

    # ---- DINOS: (row-tile parallel) x (scale arbitrary) ---------------------
    scales = generate_scales(W, CS_RATIO, NUM_SCALES)
    S = len(scales)

    bd_np = np.zeros(S, np.float32)
    wt_np = np.zeros(S, np.float32)
    for i in range(1, S):
        bd_np[i] = B_DINOS / float(scales[i]) ** 2
        wt_np[i] = W_DINOS ** (i - 1)
    consts = jnp.asarray(np.concatenate([bd_np, wt_np]))   # (2S,) f32 -> SMEM

    bv_np, bh_np = _build_blur_operators(H, W, scales)     # host-side constants
    bv = jnp.asarray(bv_np, MATMUL_DTYPE)                  # (S, H, H) bf16
    bh = bv if bh_np is None else jnp.asarray(bh_np, MATMUL_DTYPE)  # (S, W, W)

    # Resident footprint: Lg + double-buffered operator blocks + output block
    # + center scratch (review: stay well under v7x's 64 MiB VMEM).
    vmem_est = (2 * H * W * opb          # Lg (bf16), resident
                + 2 * TM * H * opb       # Bv row block, double-buffered
                + 2 * W * W * opb        # Bh scale block, double-buffered
                + 2 * TM * W * 4         # output block
                + TM * W * 4)            # center scratch
    vmem_limit = int(min(64 << 20, max(16 << 20, vmem_est + (8 << 20))))

    flops = 2 * S * H * W * (H + W) + 12 * S * H * W
    bytes_accessed = (H * W * (opb + 4) + S * H * H * opb
                      + n_rows * S * W * W * opb)

    wsum = pl.pallas_call(
        _make_dinos_kernel(S),
        grid=(n_rows, S),
        in_specs=[
            pl.BlockSpec(memory_space=pltpu.MemorySpace.SMEM),        # bd/wt
            pl.BlockSpec((H, W), lambda i, s: (0, 0)),                # Lg, resident
            pl.BlockSpec((None, TM, H), lambda i, s: (s, i, 0)),      # Bv rows/scale
            pl.BlockSpec((None, W, W), lambda i, s: (s, 0, 0)),       # Bh per scale
        ],
        out_specs=pl.BlockSpec((TM, W), lambda i, s: (i, 0)),         # accumulator
        out_shape=jax.ShapeDtypeStruct((H, W), jnp.float32),
        scratch_shapes=[pltpu.VMEM((TM, W), jnp.float32)],            # center
        compiler_params=pltpu.CompilerParams(
            dimension_semantics=("parallel", "arbitrary"),
            vmem_limit_bytes=vmem_limit),
        cost_estimate=pl.CostEstimate(
            flops=int(flops),
            transcendentals=int(S * H * W),
            bytes_accessed=int(bytes_accessed)),
    )(consts, lg, bv, bh)

    return wsum[None, :, :]                           # unsqueeze(0) -> (1, H, W)


if __name__ == "__main__":
    key = jax.random.PRNGKey(0)
    H = W = 256                                       # lane-aligned, 2 row tiles
    x = jax.random.uniform(key, (1, H, W, 3), dtype=jnp.float32,
                           minval=0.0, maxval=4.0)
    out = jax.jit(aces_forward)(x)
    out = jax.block_until_ready(out)
    assert out.shape == (1, H, W)
    assert bool(jnp.all(jnp.isfinite(out)))
    print("KERNEL_OK")
</pallas_src>

<mosaic_0001>
module attributes {stable_mosaic.version = 11 : i64} {
  func.func @kernel(%arg0: i32, %arg1: i32, %arg2: memref<26xf32, #tpu.memory_space<smem>>, %arg3: memref<256x256xbf16, #tpu.memory_space<vmem>>, %arg4: memref<1x128x256xbf16, #tpu.memory_space<vmem>>, %arg5: memref<1x256x256xbf16, #tpu.memory_space<vmem>>, %arg6: memref<128x256xf32, #tpu.memory_space<vmem>>, %arg7: memref<128x256xf32, #tpu.memory_space<vmem>>) attributes {dimension_semantics = [#tpu.dimension_semantics<parallel>, #tpu.dimension_semantics<arbitrary>], iteration_bounds = array<i64: 2, 13>, scalar_prefetch = 0 : i64, scratch_operands = 1 : i64, tpu.core_type = #tpu.core_type<tc>, window_params = [{transform_indices = @transform_0, window_bounds = array<i64: 26>}, {pipeline_mode = #tpu.pipeline_mode<synchronous>, transform_indices = @transform_1, window_bounds = array<i64: 256, 256>}, {transform_indices = @transform_2, window_bounds = array<i64: 1, 128, 256>}, {transform_indices = @transform_3, window_bounds = array<i64: 1, 256, 256>}, {transform_indices = @transform_4, window_bounds = array<i64: 128, 256>}]} {
    %c0 = arith.constant 0 : index
    %c0_0 = arith.constant 0 : index
    %c0_1 = arith.constant 0 : index
    %0 = vector.load %arg4[%c0, %c0_0, %c0_1] : memref<1x128x256xbf16, #tpu.memory_space<vmem>>, vector<1x128x256xbf16>
    %1 = vector.shape_cast %0 : vector<1x128x256xbf16> to vector<128x256xbf16>
    %c0_2 = arith.constant 0 : index
    %c0_3 = arith.constant 0 : index
    %2 = vector.load %arg3[%c0_2, %c0_3] : memref<256x256xbf16, #tpu.memory_space<vmem>>, vector<256x256xbf16>
    %cst = arith.constant dense<0.000000e+00> : vector<128x256xf32>
    %3 = tpu.matmul %1, %2, %cst {dimension_numbers = #tpu.dot_dimension_numbers<[1], [0], [0], [1], [0, 0, 1, 1], [], []>} : vector<128x256xbf16>, vector<256x256xbf16>, vector<128x256xf32> -> vector<128x256xf32>
    %4 = arith.truncf %3 : vector<128x256xf32> to vector<128x256xbf16>
    %c0_4 = arith.constant 0 : index
    %c0_5 = arith.constant 0 : index
    %c0_6 = arith.constant 0 : index
    %5 = vector.load %arg5[%c0_4, %c0_5, %c0_6] : memref<1x256x256xbf16, #tpu.memory_space<vmem>>, vector<1x256x256xbf16>
    %6 = vector.shape_cast %5 : vector<1x256x256xbf16> to vector<256x256xbf16>
    %cst_7 = arith.constant dense<0.000000e+00> : vector<128x256xf32>
    %7 = tpu.matmul %4, %6, %cst_7 {dimension_numbers = #tpu.dot_dimension_numbers<[1], [1], [0], [0], [0, 0, 1, 0], [], []>} : vector<128x256xbf16>, vector<256x256xbf16>, vector<128x256xf32> -> vector<128x256xf32>
    %c0_i32 = arith.constant 0 : i32
    %8 = arith.cmpi eq, %arg1, %c0_i32 : i32
    %9 = arith.extui %8 : i1 to i32
    %c0_i32_8 = arith.constant 0 : i32
    %10 = arith.cmpi ne, %9, %c0_i32_8 : i32
    scf.if %10 {
      %cst_13 = arith.constant 0.000000e+00 : f32
      %15 = vector.broadcast %cst_13 : f32 to vector<128x256xf32>
      %c0_14 = arith.constant 0 : index
      %c0_15 = arith.constant 0 : index
      %16 = vector.load %arg6[%c0_14, %c0_15] : memref<128x256xf32, #tpu.memory_space<vmem>>, vector<128x256xf32>
      tpu.vector_store %arg6[%c0_14, %c0_15], %15 {strides = array<i32>} : memref<128x256xf32, #tpu.memory_space<vmem>>, vector<128x256xf32>,
    } else {
    }
    %c0_i32_9 = arith.constant 0 : i32
    %11 = arith.cmpi sgt, %arg1, %c0_i32_9 : i32
    %12 = arith.extui %11 : i1 to i32
    %c0_i32_10 = arith.constant 0 : i32
    %13 = arith.cmpi ne, %12, %c0_i32_10 : i32
    scf.if %13 {
      %15 = arith.index_cast %arg1 : i32 to index
      %16 = memref.load %arg2[%15] : memref<26xf32, #tpu.memory_space<smem>>
      %c13_i32 = arith.constant 13 : i32
      %17 = arith.addi %c13_i32, %arg1 : i32
      %18 = arith.index_cast %17 : i32 to index
      %19 = memref.load %arg2[%18] : memref<26xf32, #tpu.memory_space<smem>>
      %c0_13 = arith.constant 0 : index
      %c0_14 = arith.constant 0 : index
      %20 = vector.load %arg7[%c0_13, %c0_14] : memref<128x256xf32, #tpu.memory_space<vmem>>, vector<128x256xf32>
      %21 = vector.broadcast %16 : f32 to vector<128x256xf32>
      %22 = arith.addf %20, %21 : vector<128x256xf32>
      %23 = vector.broadcast %16 : f32 to vector<128x256xf32>
      %24 = arith.addf %7, %23 : vector<128x256xf32>
      %25 = arith.divf %22, %24 : vector<128x256xf32>
      %c0_15 = arith.constant 0 : index
      %c0_16 = arith.constant 0 : index
      %26 = vector.load %arg6[%c0_15, %c0_16] : memref<128x256xf32, #tpu.memory_space<vmem>>, vector<128x256xf32>
      %cst_17 = arith.constant 1.000000e+00 : f32
      %27 = vector.broadcast %cst_17 : f32 to vector<128x256xf32>
      %28 = arith.subf %25, %27 : vector<128x256xf32>
      %29 = vector.broadcast %19 : f32 to vector<128x256xf32>
      %30 = arith.mulf %29, %28 : vector<128x256xf32>
      %31 = arith.addf %26, %30 : vector<128x256xf32>
      %c0_18 = arith.constant 0 : index
      %c0_19 = arith.constant 0 : index
      %32 = vector.load %arg6[%c0_18, %c0_19] : memref<128x256xf32, #tpu.memory_space<vmem>>, vector<128x256xf32>
      tpu.vector_store %arg6[%c0_18, %c0_19], %31 {strides = array<i32>} : memref<128x256xf32, #tpu.memory_space<vmem>>, vector<128x256xf32>,
    } else {
    }
    %c0_11 = arith.constant 0 : index
    %c0_12 = arith.constant 0 : index
    %14 = vector.load %arg7[%c0_11, %c0_12] : memref<128x256xf32, #tpu.memory_space<vmem>>, vector<128x256xf32>
    tpu.vector_store %arg7[%c0_11, %c0_12], %7 {strides = array<i32>} : memref<128x256xf32, #tpu.memory_space<vmem>>, vector<128x256xf32>,
    return
  }
  func.func @transform_0(%arg0: i32, %arg1: i32) -> i32 {
    %c0_i32 = arith.constant 0 : i32
    %c0_i32_0 = arith.constant 0 : i32
    return %c0_i32 : i32
  }
  func.func @transform_1(%arg0: i32, %arg1: i32) -> (i32, i32) {
    %c0_i32 = arith.constant 0 : i32
    %c0_i32_0 = arith.constant 0 : i32
    %c0_i32_1 = arith.constant 0 : i32
    return %c0_i32, %c0_i32_0 : i32, i32
  }
  func.func @transform_2(%arg0: i32, %arg1: i32) -> (i32, i32, i32) {
    %c0_i32 = arith.constant 0 : i32
    %c0_i32_0 = arith.constant 0 : i32
    return %arg1, %arg0, %c0_i32 : i32, i32, i32
  }
  func.func @transform_3(%arg0: i32, %arg1: i32) -> (i32, i32, i32) {
    %c0_i32 = arith.constant 0 : i32
    %c0_i32_0 = arith.constant 0 : i32
    %c0_i32_1 = arith.constant 0 : i32
    return %arg1, %c0_i32, %c0_i32_0 : i32, i32, i32
  }
  func.func @transform_4(%arg0: i32, %arg1: i32) -> (i32, i32) {
    %c0_i32 = arith.constant 0 : i32
    %c0_i32_0 = arith.constant 0 : i32
    return %arg0, %c0_i32 : i32, i32
  }
}

module attributes {stable_mosaic.version = 11 : i64} {
  func.func @_tonemap_kernel(%arg0: i32, %arg1: memref<1xf32, #tpu.memory_space<smem>>, %arg2: memref<3x128x256xf32, #tpu.memory_space<vmem>>, %arg3: memref<128x256xbf16, #tpu.memory_space<vmem>>) attributes {dimension_semantics = [#tpu.dimension_semantics<parallel>], iteration_bounds = array<i64: 2>, scalar_prefetch = 0 : i64, scratch_operands = 0 : i64, tpu.core_type = #tpu.core_type<tc>, window_params = [{transform_indices = @transform_0, window_bounds = array<i64: 1>}, {transform_indices = @transform_1, window_bounds = array<i64: 3, 128, 256>}, {transform_indices = @transform_2, window_bounds = array<i64: 128, 256>}]} {
    %c0 = arith.constant 0 : index
    %0 = memref.load %arg1[%c0] : memref<1xf32, #tpu.memory_space<smem>>
    %c0_0 = arith.constant 0 : index
    %c0_1 = arith.constant 0 : index
    %c0_2 = arith.constant 0 : index
    %1 = vector.load %arg2[%c0_0, %c0_1, %c0_2] : memref<3x128x256xf32, #tpu.memory_space<vmem>>, vector<3x128x256xf32>
    %2 = vector.broadcast %0 : f32 to vector<3x128x256xf32>
    %3 = arith.mulf %2, %1 : vector<3x128x256xf32>
    %cst = arith.constant 2.510000e+00 : f32
    %4 = vector.broadcast %cst : f32 to vector<3x128x256xf32>
    %5 = arith.mulf %4, %3 : vector<3x128x256xf32>
    %cst_3 = arith.constant 3.000000e-02 : f32
    %6 = vector.broadcast %cst_3 : f32 to vector<3x128x256xf32>
    %7 = arith.addf %5, %6 : vector<3x128x256xf32>
    %8 = arith.mulf %3, %7 : vector<3x128x256xf32>
    %cst_4 = arith.constant 2.430000e+00 : f32
    %9 = vector.broadcast %cst_4 : f32 to vector<3x128x256xf32>
    %10 = arith.mulf %9, %3 : vector<3x128x256xf32>
    %cst_5 = arith.constant 5.900000e-01 : f32
    %11 = vector.broadcast %cst_5 : f32 to vector<3x128x256xf32>
    %12 = arith.addf %10, %11 : vector<3x128x256xf32>
    %13 = arith.mulf %3, %12 : vector<3x128x256xf32>
    %cst_6 = arith.constant 1.400000e-01 : f32
    %14 = vector.broadcast %cst_6 : f32 to vector<3x128x256xf32>
    %15 = arith.addf %13, %14 : vector<3x128x256xf32>
    %16 = arith.divf %8, %15 : vector<3x128x256xf32>
    %cst_7 = arith.constant 0.000000e+00 : f32
    %cst_8 = arith.constant 1.000000e+00 : f32
    %17 = vector.broadcast %cst_7 : f32 to vector<3x128x256xf32>
    %18 = arith.maximumf %17, %16 : vector<3x128x256xf32>
    %19 = vector.broadcast %cst_8 : f32 to vector<3x128x256xf32>
    %20 = arith.minimumf %19, %18 : vector<3x128x256xf32>
    %21 = vector.extract_strided_slice %20 {offsets = [0, 0, 0], sizes = [1, 128, 256], strides = [1, 1, 1]} : vector<3x128x256xf32> to vector<1x128x256xf32>
    %22 = vector.shape_cast %21 : vector<1x128x256xf32> to vector<128x256xf32>
    %cst_9 = arith.constant 1.904000e-01 : f32
    %23 = vector.broadcast %cst_9 : f32 to vector<128x256xf32>
    %24 = arith.mulf %23, %22 : vector<128x256xf32>
    %25 = vector.extract_strided_slice %20 {offsets = [1, 0, 0], sizes = [1, 128, 256], strides = [1, 1, 1]} : vector<3x128x256xf32> to vector<1x128x256xf32>
    %26 = vector.shape_cast %25 : vector<1x128x256xf32> to vector<128x256xf32>
    %cst_10 = arith.constant 0.764599978 : f32
    %27 = vector.broadcast %cst_10 : f32 to vector<128x256xf32>
    %28 = arith.mulf %27, %26 : vector<128x256xf32>
    %29 = arith.addf %24, %28 : vector<128x256xf32>
    %30 = vector.extract_strided_slice %20 {offsets = [2, 0, 0], sizes = [1, 128, 256], strides = [1, 1, 1]} : vector<3x128x256xf32> to vector<1x128x256xf32>
    %31 = vector.shape_cast %30 : vector<1x128x256xf32> to vector<128x256xf32>
    %cst_11 = arith.constant 4.500000e-02 : f32
    %32 = vector.broadcast %cst_11 : f32 to vector<128x256xf32>
    %33 = arith.mulf %32, %31 : vector<128x256xf32>
    %34 = arith.addf %29, %33 : vector<128x256xf32>
    %cst_12 = arith.constant 2.000000e+02 : f32
    %35 = vector.broadcast %cst_12 : f32 to vector<128x256xf32>
    %36 = arith.mulf %34, %35 : vector<128x256xf32>
    %cst_13 = arith.constant 0.454545468 : f32
    %37 = vector.broadcast %cst_13 : f32 to vector<128x256xf32>
    %38 = math.powf %36, %37 : vector<128x256xf32>
    %39 = arith.truncf %38 : vector<128x256xf32> to vector<128x256xbf16>
    %c0_14 = arith.constant 0 : index
    %c0_15 = arith.constant 0 : index
    %40 = vector.load %arg3[%c0_14, %c0_15] : memref<128x256xbf16, #tpu.memory_space<vmem>>, vector<128x256xbf16>
    tpu.vector_store %arg3[%c0_14, %c0_15], %39 {strides = array<i32>} : memref<128x256xbf16, #tpu.memory_space<vmem>>, vector<128x256xbf16>,
    return
  }
  func.func @transform_0(%arg0: i32) -> i32 {
    %c0_i32 = arith.constant 0 : i32
    %c0_i32_0 = arith.constant 0 : i32
    return %c0_i32 : i32
  }
  func.func @transform_1(%arg0: i32) -> (i32, i32, i32) {
    %c0_i32 = arith.constant 0 : i32
    %c0_i32_0 = arith.constant 0 : i32
    %c0_i32_1 = arith.constant 0 : i32
    return %c0_i32, %arg0, %c0_i32_0 : i32, i32, i32
  }
  func.func @transform_2(%arg0: i32) -> (i32, i32) {
    %c0_i32 = arith.constant 0 : i32
    %c0_i32_0 = arith.constant 0 : i32
    return %arg0, %c0_i32 : i32, i32
  }
}

</mosaic_0001>

<llo_original>
// kernel: aces_forward.3
$region0: #{aces_forward.3}
  #allocation0 [shape = 'u32[]', space=smem, size = 0x4, offset = 0x4, fixed_abs, tag = 'smem constant byte address 0x4 - core index']
  #allocation1 [shape = 'u32[144,128]{1,0:T(1,128)}', space=vmem, size = 0x12000, scoped, tag = 'internal scratch']
  #allocation2 [shape = 'f32[128,256]{1,0:T(8,128)}', space=vmem, size = 0x20000, scoped, tag = 'scratch operand']
  %s0 = inlined_call_operand.vmem [shape: f32[26], index: 0, kind: input, shape index: {}]
  %s1 = inlined_call_operand.vmem [shape: bf16[256,256], index: 1, kind: input, shape index: {}]
  %s2 = inlined_call_operand.vmem [shape: bf16[13,256,256], index: 2, kind: input, shape index: {}, may-alias: {2,3}]
  %s3 = inlined_call_operand.vmem [shape: bf16[13,256,256], index: 3, kind: input, shape index: {}, may-alias: {2,3}]
  %s4 = inlined_call_operand.hbm [shape: f32[256,256], index: 4, kind: output, shape index: {}]
  %s5 = sld [smem:[#allocation0]]
  $region61: #{aces_forward.3} parent=0
    _
  %s7 = ssub.s32 1, %s5
  %s8 = scalar_select 0, %s7, %s5
  $region1: #{aces_forward.3} parent=0
    #allocation3 [shape = 'u8[512]{0}', space=smem, size = 0x200, scoped, tag = 'input window, operand 0, single buffered']
    #allocation4 [shape = 's32[2]{0}', space=sflag, size = 0x8, scoped, tag = 'scoped memory for aces_forward.3']
    #allocation5 [shape = 's32[2]{0}', space=sflag, size = 0x8, scoped, tag = 'scoped memory for aces_forward.3']
    #allocation6 [shape = 'u8[262144]{0}', space=vmem, size = 0x40000, scoped, tag = 'output window, operand 0']
    %9 = vsyncpa [#allocation5], 0
    %10 = vsyncpa [#allocation4], 0
    %s11 = scalar_lea.sflag [#allocation4], 1
    %12 = vsyncpa %s11, 0
    loop: start=0, step=1, limit=28
    $region2: #{aces_forward.3} parent=1 // loop_pre_header
      _
    $region3: #{aces_forward.3} parent=1 // loop_header
      %s14 = sphi 0, %s18
      %p15 = scmp.ge.s32.totalorder %s14, 28
      %s21 = sphi 0, %s33
      %s22 = sphi 0, %s29
      %s23 = sphi 0, %s21
      %s24 = sphi 0, %s22
      %s25 = sphi 0, %s23
      %s26 = sphi 0, %s24
      %s34 = sphi 0, %s34
      %s36 = sphi 0, %s34
      %s37 = sphi 0, %s36
      %s51 = sphi 0, %s37
      %s55 = sphi 0, %s55
      %s57 = sphi 0, %s55
      %s58 = sphi 0, %s57
      %s72 = sphi 0, %s58
      %s80 = sphi 0, %s82
      %s83 = sphi 0, %s80
      %s84 = sphi 0, %s83
      %s100 = sphi 0, %s84
      %s106 = sphi 0, %s108
      %s109 = sphi 0, %s106
      %s110 = sphi 0, %s109
      %s126 = sphi 0, %s110
      %s132 = sphi 0, %s134
      %s135 = sphi 0, %s132
      %s136 = sphi 0, %s135
      %s152 = sphi 0, %s136
    $region4: #{aces_forward.3} parent=1 // loop_header_branch
      %17 = sbr.rel (%p15) target = $region8
    $region5: #{aces_forward.3} parent=1 // loop_body
      %s19 = ssub.s32 %s14, 1
      %s20 = ssub.s32 %s14, 2
      %s27 = sadd.s32 1, %s22
      %p28 = scmp.ge.s32.totalorder %s27, 13
      %s29 = scalar_select %p28, 0, %s27
      %s30 = sadd.s32 1, %s21
      %s31 = scalar_select %p28, %s30, %s21
      %p32 = scmp.ge.s32.totalorder %s31, 2
      %s33 = scalar_select %p32, 0, %s31
      %s35 = sadd.s32 %s34, 1
      %p38 = scmp.eq.s32.totalorder %s14, 25
      %p39 = scmp.ne.s32.totalorder %s34, %s36
      %p40 = scmp.eq.s32.totalorder %s14, 0
      %p41 = por %p39, %p40
      %p42 = scmp.ne.s32.totalorder %s34, %s36
      %p43 = scmp.eq.s32.totalorder %s19, 25
      %p44 = por %p42, %p43
      %p45 = scmp.ne.s32.totalorder %s36, %s37
      %p46 = scmp.eq.s32.totalorder %s19, 0
      %p47 = por %p45, %p46
      %p48 = scmp.ne.s32.totalorder %s36, %s37
      %p49 = scmp.eq.s32.totalorder %s20, 25
      %p50 = por %p48, %p49
      %p52 = scmp.ne.s32.totalorder %s37, %s51
      %p53 = scmp.eq.s32.totalorder %s20, 0
      %p54 = por %p52, %p53
      %s56 = sadd.s32 %s55, 1
      %p59 = scmp.eq.s32.totalorder %s14, 25
      %p60 = scmp.ne.s32.totalorder %s55, %s57
      %p61 = scmp.eq.s32.totalorder %s14, 0
      %p62 = por %p60, %p61
      %p63 = scmp.ne.s32.totalorder %s55, %s57
      %p64 = scmp.eq.s32.totalorder %s19, 25
      %p65 = por %p63, %p64
      %p66 = scmp.ne.s32.totalorder %s57, %s58
      %p67 = scmp.eq.s32.totalorder %s19, 0
      %p68 = por %p66, %p67
      %p69 = scmp.ne.s32.totalorder %s57, %s58
      %p70 = scmp.eq.s32.totalorder %s20, 25
      %p71 = por %p69, %p70
      %p73 = scmp.ne.s32.totalorder %s58, %s72
      %p74 = scmp.eq.s32.totalorder %s20, 0
      %p75 = por %p73, %p74
      %s76 = ssub.s32 %s22, %s29
      %s77 = ssub.s32 %s21, %s33
      %s78 = sor.u32 %s76, %s77
      %p79 = scmp.eq.s32.totalorder %s78, 0
      %s81 = sadd.s32 %s80, 1
      %s82 = scalar_select %p79, %s80, %s81
      %p85 = pneg %p79
      %p86 = scmp.eq.s32.totalorder %s14, 25
      %p87 = por %p85, %p86
      %p88 = scmp.ne.s32.totalorder %s80, %s83
      %p89 = scmp.eq.s32.totalorder %s14, 0
      %p90 = por %p88, %p89
      %p91 = scmp.ne.s32.totalorder %s80, %s83
      %p92 = scmp.eq.s32.totalorder %s19, 25
      %p93 = por %p91, %p92
      %p94 = scmp.ne.s32.totalorder %s83, %s84
      %p95 = scmp.eq.s32.totalorder %s19, 0
      %p96 = por %p94, %p95
      %p97 = scmp.ne.s32.totalorder %s83, %s84
      %p98 = scmp.eq.s32.totalorder %s20, 25
      %p99 = por %p97, %p98
      %p101 = scmp.ne.s32.totalorder %s84, %s100
      %p102 = scmp.eq.s32.totalorder %s20, 0
      %p103 = por %p101, %p102
      %s104 = ssub.s32 %s22, %s29
      %p105 = scmp.eq.s32.totalorder %s104, 0
      %s107 = sadd.s32 %s106, 1
      %s108 = scalar_select %p105, %s106, %s107
      %p111 = pneg %p105
      %p112 = scmp.eq.s32.totalorder %s14, 25
      %p113 = por %p111, %p112
      %p114 = scmp.ne.s32.totalorder %s106, %s109
      %p115 = scmp.eq.s32.totalorder %s14, 0
      %p116 = por %p114, %p115
      %p117 = scmp.ne.s32.totalorder %s106, %s109
      %p118 = scmp.eq.s32.totalorder %s19, 25
      %p119 = por %p117, %p118
      %p120 = scmp.ne.s32.totalorder %s109, %s110
      %p121 = scmp.eq.s32.totalorder %s19, 0
      %p122 = por %p120, %p121
      %p123 = scmp.ne.s32.totalorder %s109, %s110
      %p124 = scmp.eq.s32.totalorder %s20, 25
      %p125 = por %p123, %p124
      %p127 = scmp.ne.s32.totalorder %s110, %s126
      %p128 = scmp.eq.s32.totalorder %s20, 0
      %p129 = por %p127, %p128
      %s130 = ssub.s32 %s21, %s33
      %p131 = scmp.eq.s32.totalorder %s130, 0
      %s133 = sadd.s32 %s132, 1
      %s134 = scalar_select %p131, %s132, %s133
      %p137 = pneg %p131
      %p138 = scmp.eq.s32.totalorder %s14, 25
      %p139 = por %p137, %p138
      %p140 = scmp.ne.s32.totalorder %s132, %s135
      %p141 = scmp.eq.s32.totalorder %s14, 0
      %p142 = por %p140, %p141
      %p143 = scmp.ne.s32.totalorder %s132, %s135
      %p144 = scmp.eq.s32.totalorder %s19, 25
      %p145 = por %p143, %p144
      %p146 = scmp.ne.s32.totalorder %s135, %s136
      %p147 = scmp.eq.s32.totalorder %s19, 0
      %p148 = por %p146, %p147
      %p149 = scmp.ne.s32.totalorder %s135, %s136
      %p150 = scmp.eq.s32.totalorder %s20, 25
      %p151 = por %p149, %p150
      %p153 = scmp.ne.s32.totalorder %s136, %s152
      %p154 = scmp.eq.s32.totalorder %s20, 0
      %p155 = por %p153, %p154
      %p156 = scmp.le.s32.totalorder 1, %s14
      %p157 = scmp.lt.s32.totalorder %s14, 27
      %p158 = pnand %p156, %p157
      %p159 = pneg %p158
      // Predicated region
      $region9: #{aces_forward.3} parent=5 // pred_check
        _
      $region10: #{aces_forward.3} parent=5 // pred_check_branch
        %161 = sbr.rel (%p158) target = $region12
      $region11: #{aces_forward.3} parent=5 // pred_region
        %s162 = ssub.s32 %s14, 1
        // Predicated region
        $region13: #{aces_forward.3} parent=11 // pred_check
          %p163 = pneg %p47
        $region14: #{aces_forward.3} parent=11 // pred_check_branch
          %165 = sbr.rel (%p163) target = $region16
        $region15: #{aces_forward.3} parent=11 // pred_region
          %s167 = ssub.s32 16, 16
          %168 = vsyncadd [#allocation5], %s167
          %s170 = sshll.u32 %s0, 4
          %s171 = int_to_ptr.vmem [resolvable:$true] %s170
          %173 = dma.vmem_to_smem %s171, 16, [#allocation3], [#allocation5]
        $region16: #{aces_forward.3} parent=11 // pred_fallthru
          _
        // Predicated region
        $region17: #{aces_forward.3} parent=11 // pred_check
          %p174 = pneg %p68
        $region18: #{aces_forward.3} parent=11 // pred_check_branch
          %176 = sbr.rel (%p174) target = $region20
        $region19: #{aces_forward.3} parent=11 // pred_region
          _
        $region20: #{aces_forward.3} parent=11 // pred_fallthru
          _
      $region12: #{aces_forward.3} parent=5 // pred_fallthru
        _
      %p177 = scmp.lt.s32.totalorder %s14, 26
      // Predicated region
      $region21: #{aces_forward.3} parent=5 // pred_check
        %p178 = pneg %p177
      $region22: #{aces_forward.3} parent=5 // pred_check_branch
        %180 = sbr.rel (%p178) target = $region24
      $region23: #{aces_forward.3} parent=5 // pred_region
        // Predicated region
        $region25: #{aces_forward.3} parent=23 // pred_check
          %p181 = pneg %p90
        $region26: #{aces_forward.3} parent=23 // pred_check_branch
          %183 = sbr.rel (%p181) target = $region28
        $region27: #{aces_forward.3} parent=23 // pred_region
          %s184 = smul.u32 16, %s21
          %p185 = scmp.lt.s32.totalorder %s22, 12
          %s186 = scalar_select %p185, %s22, 12
          %p187 = scmp.lt.s32.totalorder %s184, 31
          %s188 = scalar_select %p187, %s184, 31
          %s189 = smul.addr %s188, 2
          %s190 = smul.addr %s186, 64
          %s191 = sadd.s32 %s189, %s190
          %s192 = smul.addr %s191, 4
          %s193 = scalar_lea.vmem %s2, %s192
          %s194 = smul.u32 16, %s21
        $region28: #{aces_forward.3} parent=23 // pred_fallthru
          _
        // Predicated region
        $region29: #{aces_forward.3} parent=23 // pred_check
          %p195 = pneg %p116
        $region30: #{aces_forward.3} parent=23 // pred_check_branch
          %197 = sbr.rel (%p195) target = $region32
        $region31: #{aces_forward.3} parent=23 // pred_region
          %p198 = scmp.lt.s32.totalorder %s22, 12
          %s199 = scalar_select %p198, %s22, 12
          %s200 = smul.addr %s199, 64
          %s201 = smul.addr %s200, 4
          %s202 = scalar_lea.vmem %s3, %s201
        $region32: #{aces_forward.3} parent=23 // pred_fallthru
          _
      $region24: #{aces_forward.3} parent=5 // pred_fallthru
        _
      %p203 = scmp.le.s32.totalorder 1, %s14
      %p204 = scmp.lt.s32.totalorder %s14, 27
      %p205 = pnand %p203, %p204
      %p206 = pneg %p205
      // Predicated region
      $region33: #{aces_forward.3} parent=5 // pred_check
        _
      $region34: #{aces_forward.3} parent=5 // pred_check_branch
        %208 = sbr.rel (%p205) target = $region36
      $region35: #{aces_forward.3} parent=5 // pred_region
        %s209 = ssub.s32 %s14, 1
        // Predicated region
        $region37: #{aces_forward.3} parent=35 // pred_check
          %p210 = pneg %p47
        $region38: #{aces_forward.3} parent=35 // pred_check_branch
          %212 = sbr.rel (%p210) target = $region40
        $region39: #{aces_forward.3} parent=35 // pred_region
          %213 = dma.done [#allocation5], 16
        $region40: #{aces_forward.3} parent=35 // pred_fallthru
          _
        %214 = sfence
        %p215 = pneg %p47
        %p216 = pneg %p44
        %p217 = pneg %p68
        %p218 = pneg %p65
        %s219 = smul.u32 16, %s23
        %p220 = scmp.lt.s32.totalorder %s24, 12
        %s221 = scalar_select %p220, %s24, 12
        %p222 = scmp.lt.s32.totalorder %s219, 31
        %s223 = scalar_select %p222, %s219, 31
        %s224 = smul.addr %s223, 2
        %s225 = smul.addr %s221, 64
        %s226 = sadd.s32 %s224, %s225
        %s227 = smul.addr %s226, 4
        %s228 = scalar_lea.vmem %s2, %s227
        %p229 = pneg %p96
        %p230 = pneg %p93
        %p231 = scmp.lt.s32.totalorder %s24, 12
        %s232 = scalar_select %p231, %s24, 12
        %s233 = smul.addr %s232, 64
        %s234 = smul.addr %s233, 4
        %s235 = scalar_lea.vmem %s3, %s234
        %p236 = pneg %p122
        %p237 = pneg %p119
        %p238 = pneg %p148
        %p239 = pneg %p145
        %s240 = sand.u32 %s135, 1
        %s241 = scalar_lea.sflag [#allocation4], %s240
        %s242 = sand.u32 %s135, 1
        %s243 = smul.addr %s242, 256
        %s244 = scalar_lea.vmem [#allocation6], %s243
        %s245 = smul.u32 16, %s23
        %p246 = scmp.lt.s32.totalorder %s24, 12
        %s247 = scalar_select %p246, %s24, 12
        %p248 = scmp.lt.s32.totalorder %s245, 31
        %s249 = scalar_select %p248, %s245, 31
        %s250 = smul.addr %s249, 2
        %s251 = smul.addr %s247, 64
        %s252 = sadd.s32 %s250, %s251
        %s253 = smul.addr %s252, 4
        %s254 = scalar_lea.vmem %s2, %s253
        %s255 = smul.u32 16, %s23
        %p256 = scmp.lt.s32.totalorder %s24, 12
        %s257 = scalar_select %p256, %s24, 12
        %s258 = smul.addr %s257, 64
        %s259 = smul.addr %s258, 4
        %s260 = scalar_lea.vmem %s3, %s259
        %s261 = smul.u32 16, %s23
        %v262 = vld [vmem:[%s254] sm:$0xff]
        %v263 = vld [vmem:[%s254 + $0x8] sm:$0xff]
        %v264 = vld [vmem:[%s254 + $0x10] sm:$0xff]
        %v265 = vld [vmem:[%s254 + $0x18] sm:$0xff]
        %v266 = vld [vmem:[%s254 + $0x20] sm:$0xff]
        %v267 = vld [vmem:[%s254 + $0x28] sm:$0xff]
        %v268 = vld [vmem:[%s254 + $0x30] sm:$0xff]
        %v269 = vld [vmem:[%s254 + $0x38] sm:$0xff]
        %v270 = vld [vmem:[%s254 + $0x40] sm:$0xff]
        %v271 = vld [vmem:[%s254 + $0x48] sm:$0xff]
        %v272 = vld [vmem:[%s254 + $0x50] sm:$0xff]
        %v273 = vld [vmem:[%s254 + $0x58] sm:$0xff]
        %v274 = vld [vmem:[%s254 + $0x60] sm:$0xff]
        %v275 = vld [vmem:[%s254 + $0x68] sm:$0xff]
        %v276 = vld [vmem:[%s254 + $0x70] sm:$0xff]
        %v277 = vld [vmem:[%s254 + $0x78] sm:$0xff]
        %v278 = vld [vmem:[%s1] sm:$0xff]
        %v279 = vld [vmem:[%s1 + $0x8] sm:$0xff]
        %v280 = vld [vmem:[%s1 + $0x10] sm:$0xff]
        %v281 = vld [vmem:[%s1 + $0x18] sm:$0xff]
        %v282 = vld [vmem:[%s1 + $0x20] sm:$0xff]
        %v283 = vld [vmem:[%s1 + $0x28] sm:$0xff]
        %v284 = vld [vmem:[%s1 + $0x30] sm:$0xff]
        %v285 = vld [vmem:[%s1 + $0x38] sm:$0xff]
        %v286 = vld [vmem:[%s1 + $0x40] sm:$0xff]
        %v287 = vld [vmem:[%s1 + $0x48] sm:$0xff]
        %v288 = vld [vmem:[%s1 + $0x50] sm:$0xff]
        %v289 = vld [vmem:[%s1 + $0x58] sm:$0xff]
        %v290 = vld [vmem:[%s1 + $0x60] sm:$0xff]
        %v291 = vld [vmem:[%s1 + $0x68] sm:$0xff]
        %v292 = vld [vmem:[%s1 + $0x70] sm:$0xff]
        %v293 = vld [vmem:[%s1 + $0x78] sm:$0xff]
        %v294 = vld [vmem:[%s1 + $0x80] sm:$0xff]
        %v295 = vld [vmem:[%s1 + $0x88] sm:$0xff]
        %v296 = vld [vmem:[%s1 + $0x90] sm:$0xff]
        %v297 = vld [vmem:[%s1 + $0x98] sm:$0xff]
        %v298 = vld [vmem:[%s1 + $0xa0] sm:$0xff]
        %v299 = vld [vmem:[%s1 + $0xa8] sm:$0xff]
        %v300 = vld [vmem:[%s1 + $0xb0] sm:$0xff]
        %v301 = vld [vmem:[%s1 + $0xb8] sm:$0xff]
        %v302 = vld [vmem:[%s1 + $0xc0] sm:$0xff]
        %v303 = vld [vmem:[%s1 + $0xc8] sm:$0xff]
        %v304 = vld [vmem:[%s1 + $0xd0] sm:$0xff]
        %v305 = vld [vmem:[%s1 + $0xd8] sm:$0xff]
        %v306 = vld [vmem:[%s1 + $0xe0] sm:$0xff]
        %v307 = vld [vmem:[%s1 + $0xe8] sm:$0xff]
        %v308 = vld [vmem:[%s1 + $0xf0] sm:$0xff]
        %v309 = vld [vmem:[%s1 + $0xf8] sm:$0xff]
        %v326 = vunpack.c.l.b16 %v262
        %v327 = vunpack.c.h.b16 %v262
        %v328 = vunpack.c.l.b16 %v263
        %v329 = vunpack.c.h.b16 %v263
        %v330 = vunpack.c.l.b16 %v264
        %v331 = vunpack.c.h.b16 %v264
        %v332 = vunpack.c.l.b16 %v265
        %v333 = vunpack.c.h.b16 %v265
        %v334 = vunpack.c.l.b16 %v266
        %v335 = vunpack.c.h.b16 %v266
        %v336 = vunpack.c.l.b16 %v267
        %v337 = vunpack.c.h.b16 %v267
        %v338 = vunpack.c.l.b16 %v268
        %v339 = vunpack.c.h.b16 %v268
        %v340 = vunpack.c.l.b16 %v269
        %v341 = vunpack.c.h.b16 %v269
        %v342 = vunpack.c.l.b16 %v270
        %v343 = vunpack.c.h.b16 %v270
        %v344 = vunpack.c.l.b16 %v271
        %v345 = vunpack.c.h.b16 %v271
        %v346 = vunpack.c.l.b16 %v272
        %v347 = vunpack.c.h.b16 %v272
        %v348 = vunpack.c.l.b16 %v273
        %v349 = vunpack.c.h.b16 %v273
        %v350 = vunpack.c.l.b16 %v274
        %v351 = vunpack.c.h.b16 %v274
        %v352 = vunpack.c.l.b16 %v275
        %v353 = vunpack.c.h.b16 %v275
        %v354 = vunpack.c.l.b16 %v276
        %v355 = vunpack.c.h.b16 %v276
        %v356 = vunpack.c.l.b16 %v277
        %v357 = vunpack.c.h.b16 %v277
        %v358 = vpack.c.b16 %v328, %v326
        %v359 = vpack.c.b16 %v329, %v327
        %v360 = vpack.c.b16 %v332, %v330
        %v361 = vpack.c.b16 %v333, %v331
        %v362 = vpack.c.b16 %v336, %v334
        %v363 = vpack.c.b16 %v337, %v335
        %v364 = vpack.c.b16 %v340, %v338
        %v365 = vpack.c.b16 %v341, %v339
        %v366 = vpack.c.b16 %v344, %v342
        %v367 = vpack.c.b16 %v345, %v343
        %v368 = vpack.c.b16 %v348, %v346
        %v369 = vpack.c.b16 %v349, %v347
        %v370 = vpack.c.b16 %v352, %v350
        %v371 = vpack.c.b16 %v353, %v351
        %v372 = vpack.c.b16 %v356, %v354
        %v373 = vpack.c.b16 %v357, %v355
        %v422 = vunpack.c.l.b16 %v278
        %v423 = vunpack.c.h.b16 %v278
        %v424 = vunpack.c.l.b16 %v279
        %v425 = vunpack.c.h.b16 %v279
        %v426 = vunpack.c.l.b16 %v280
        %v427 = vunpack.c.h.b16 %v280
        %v428 = vunpack.c.l.b16 %v281
        %v429 = vunpack.c.h.b16 %v281
        %v430 = vunpack.c.l.b16 %v282
        %v431 = vunpack.c.h.b16 %v282
        %v432 = vunpack.c.l.b16 %v283
        %v433 = vunpack.c.h.b16 %v283
        %v434 = vunpack.c.l.b16 %v284
        %v435 = vunpack.c.h.b16 %v284
        %v436 = vunpack.c.l.b16 %v285
        %v437 = vunpack.c.h.b16 %v285
        %v438 = vunpack.c.l.b16 %v286
        %v439 = vunpack.c.h.b16 %v286
        %v440 = vunpack.c.l.b16 %v287
        %v441 = vunpack.c.h.b16 %v287
        %v442 = vunpack.c.l.b16 %v288
        %v443 = vunpack.c.h.b16 %v288
        %v444 = vunpack.c.l.b16 %v289
        %v445 = vunpack.c.h.b16 %v289
        %v446 = vunpack.c.l.b16 %v290
        %v447 = vunpack.c.h.b16 %v290
        %v448 = vunpack.c.l.b16 %v291
        %v449 = vunpack.c.h.b16 %v291
        %v450 = vunpack.c.l.b16 %v292
        %v451 = vunpack.c.h.b16 %v292
        %v452 = vunpack.c.l.b16 %v293
        %v453 = vunpack.c.h.b16 %v293
        %v454 = vunpack.c.l.b16 %v294
        %v455 = vunpack.c.h.b16 %v294
        %v456 = vunpack.c.l.b16 %v295
        %v457 = vunpack.c.h.b16 %v295
        %v458 = vunpack.c.l.b16 %v296
        %v459 = vunpack.c.h.b16 %v296
        %v460 = vunpack.c.l.b16 %v297
        %v461 = vunpack.c.h.b16 %v297
        %v462 = vunpack.c.l.b16 %v298
        %v463 = vunpack.c.h.b16 %v298
        %v464 = vunpack.c.l.b16 %v299
        %v465 = vunpack.c.h.b16 %v299
        %v466 = vunpack.c.l.b16 %v300
        %v467 = vunpack.c.h.b16 %v300
        %v468 = vunpack.c.l.b16 %v301
        %v469 = vunpack.c.h.b16 %v301
        %v470 = vunpack.c.l.b16 %v302
        %v471 = vunpack.c.h.b16 %v302
        %v472 = vunpack.c.l.b16 %v303
        %v473 = vunpack.c.h.b16 %v303
        %v474 = vunpack.c.l.b16 %v304
        %v475 = vunpack.c.h.b16 %v304
        %v476 = vunpack.c.l.b16 %v305
        %v477 = vunpack.c.h.b16 %v305
        %v478 = vunpack.c.l.b16 %v306
        %v479 = vunpack.c.h.b16 %v306
        %v480 = vunpack.c.l.b16 %v307
        %v481 = vunpack.c.h.b16 %v307
        %v482 = vunpack.c.l.b16 %v308
        %v483 = vunpack.c.h.b16 %v308
        %v484 = vunpack.c.l.b16 %v309
        %v485 = vunpack.c.h.b16 %v309
        %v486 = vpack.c.b16 %v424, %v422
        %v487 = vpack.c.b16 %v425, %v423
        %v488 = vpack.c.b16 %v428, %v426
        %v489 = vpack.c.b16 %v429, %v427
        %v490 = vpack.c.b16 %v432, %v430
        %v491 = vpack.c.b16 %v433, %v431
        %v492 = vpack.c.b16 %v436, %v434
        %v493 = vpack.c.b16 %v437, %v435
        %v494 = vpack.c.b16 %v440, %v438
        %v495 = vpack.c.b16 %v441, %v439
        %v496 = vpack.c.b16 %v444, %v442
        %v497 = vpack.c.b16 %v445, %v443
        %v498 = vpack.c.b16 %v448, %v446
        %v499 = vpack.c.b16 %v449, %v447
        %v500 = vpack.c.b16 %v452, %v450
        %v501 = vpack.c.b16 %v453, %v451
        %v502 = vpack.c.b16 %v456, %v454
        %v503 = vpack.c.b16 %v457, %v455
        %v504 = vpack.c.b16 %v460, %v458
        %v505 = vpack.c.b16 %v461, %v459
        %v506 = vpack.c.b16 %v464, %v462
        %v507 = vpack.c.b16 %v465, %v463
        %v508 = vpack.c.b16 %v468, %v466
        %v509 = vpack.c.b16 %v469, %v467
        %v510 = vpack.c.b16 %v472, %v470
        %v511 = vpack.c.b16 %v473, %v471
        %v512 = vpack.c.b16 %v476, %v474
        %v513 = vpack.c.b16 %v477, %v475
        %v514 = vpack.c.b16 %v480, %v478
        %v515 = vpack.c.b16 %v481, %v479
        %v516 = vpack.c.b16 %v484, %v482
        %v517 = vpack.c.b16 %v485, %v483
        %550 = vmatprep.subr.bf16.mxu0 %v501
        %551 = vmatpush1.bf16.msra.mxu0 %v500
        %552 = vmatprep.subr.bf16.mxu0 %v499
        %553 = vmatpush1.bf16.msra.mxu0 %v498
        %554 = vmatprep.subr.bf16.mxu0 %v497
        %555 = vmatpush1.bf16.msra.mxu0 %v496
        %556 = vmatprep.subr.bf16.mxu0 %v495
        %557 = vmatpush1.bf16.msra.mxu0 %v494
        %558 = vmatprep.subr.bf16.mxu0 %v493
        %559 = vmatpush1.bf16.msra.mxu0 %v492
        %560 = vmatprep.subr.bf16.mxu0 %v491
        %561 = vmatpush1.bf16.msra.mxu0 %v490
        %562 = vmatprep.subr.bf16.mxu0 %v489
        %563 = vmatpush1.bf16.msra.mxu0 %v488
        %564 = vmatprep.subr.bf16.mxu0 %v487
        %565 = vmatpush1.bf16.msra.mxu0 %v486
        %566 = vmatprep.subr.bf16.mxu0 %v517
        %567 = vmatpush2.bf16.msra.mxu0 %v516
        %568 = vmatprep.subr.bf16.mxu0 %v515
        %569 = vmatpush2.bf16.msra.mxu0 %v514
        %570 = vmatprep.subr.bf16.mxu0 %v513
        %571 = vmatpush2.bf16.msra.mxu0 %v512
        %572 = vmatprep.subr.bf16.mxu0 %v511
        %573 = vmatpush2.bf16.msra.mxu0 %v510
        %574 = vmatprep.subr.bf16.mxu0 %v509
        %575 = vmatpush2.bf16.msra.mxu0 %v508
        %576 = vmatprep.subr.bf16.mxu0 %v507
        %577 = vmatpush2.bf16.msra.mxu0 %v506
        %578 = vmatprep.subr.bf16.mxu0 %v505
        %579 = vmatpush2.bf16.msra.mxu0 %v504
        %580 = vmatprep.subr.bf16.mxu0 %v503
        %581 = vmatpush2.bf16.msra.mxu0 %v502
        %582 = vmatprep.mubr.bf16.mxu0 %v359
        %583 = vmatmul.mubr.bf16.gmra.mxu0 %v358
        %v584 = vpop.f32.mrf.mxu0
        %v585 = vadd.f32 0.0, %v584
        %v586 = vpop.f32.mrf.mxu0
        %v587 = vadd.f32 0.0, %v586
        %v588 = vpop.f32.mrf.mxu0
        %v589 = vadd.f32 0.0, %v588
        %v590 = vpop.f32.mrf.mxu0
        %v591 = vadd.f32 0.0, %v590
        %592 = vmatprep.mubr.bf16.mxu0 %v361
        %593 = vmatmul.mubr.bf16.gmra.mxu0 %v360
        %v594 = vpop.f32.mrf.mxu0
        %v595 = vadd.f32 0.0, %v594
        %v596 = vpop.f32.mrf.mxu0
        %v597 = vadd.f32 0.0, %v596
        %v598 = vpop.f32.mrf.mxu0
        %v599 = vadd.f32 0.0, %v598
        %v600 = vpop.f32.mrf.mxu0
        %v601 = vadd.f32 0.0, %v600
        %602 = vmatprep.mubr.bf16.mxu0 %v363
        %603 = vmatmul.mubr.bf16.gmra.mxu0 %v362
        %v604 = vpop.f32.mrf.mxu0
        %v605 = vadd.f32 0.0, %v604
        %v606 = vpop.f32.mrf.mxu0
        %v607 = vadd.f32 0.0, %v606
        %v608 = vpop.f32.mrf.mxu0
        %v609 = vadd.f32 0.0, %v608
        %v610 = vpop.f32.mrf.mxu0
        %v611 = vadd.f32 0.0, %v610
        %612 = vmatprep.mubr.bf16.mxu0 %v365
        %613 = vmatmul.mubr.bf16.gmra.mxu0 %v364
        %v614 = vpop.f32.mrf.mxu0
        %v615 = vadd.f32 0.0, %v614
        %v616 = vpop.f32.mrf.mxu0
        %v617 = vadd.f32 0.0, %v616
        %v618 = vpop.f32.mrf.mxu0
        %v619 = vadd.f32 0.0, %v618
        %v620 = vpop.f32.mrf.mxu0
        %v621 = vadd.f32 0.0, %v620
        %622 = vmatprep.mubr.bf16.mxu0 %v367
        %623 = vmatmul.mubr.bf16.gmra.mxu0 %v366
        %v624 = vpop.f32.mrf.mxu0
        %v625 = vadd.f32 0.0, %v624
        %v626 = vpop.f32.mrf.mxu0
        %v627 = vadd.f32 0.0, %v626
        %v628 = vpop.f32.mrf.mxu0
        %v629 = vadd.f32 0.0, %v628
        %v630 = vpop.f32.mrf.mxu0
        %v631 = vadd.f32 0.0, %v630
        %632 = vmatprep.mubr.bf16.mxu0 %v369
        %633 = vmatmul.mubr.bf16.gmra.mxu0 %v368
        %v634 = vpop.f32.mrf.mxu0
        %v635 = vadd.f32 0.0, %v634
        %v636 = vpop.f32.mrf.mxu0
        %v637 = vadd.f32 0.0, %v636
        %v638 = vpop.f32.mrf.mxu0
        %v639 = vadd.f32 0.0, %v638
        %v640 = vpop.f32.mrf.mxu0
        %v641 = vadd.f32 0.0, %v640
        %642 = vmatprep.mubr.bf16.mxu0 %v371
        %643 = vmatmul.mubr.bf16.gmra.mxu0 %v370
        %v644 = vpop.f32.mrf.mxu0
        %v645 = vadd.f32 0.0, %v644
        %v646 = vpop.f32.mrf.mxu0
        %v647 = vadd.f32 0.0, %v646
        %v648 = vpop.f32.mrf.mxu0
        %v649 = vadd.f32 0.0, %v648
        %v650 = vpop.f32.mrf.mxu0
        %v651 = vadd.f32 0.0, %v650
        %652 = vmatprep.mubr.bf16.mxu0 %v373
        %653 = vmatmul.mubr.bf16.gmra.mxu0 %v372
        %v654 = vpop.f32.mrf.mxu0
        %v655 = vadd.f32 0.0, %v654
        %v656 = vpop.f32.mrf.mxu0
        %v657 = vadd.f32 0.0, %v656
        %v658 = vpop.f32.mrf.mxu0
        %v659 = vadd.f32 0.0, %v658
        %v660 = vpop.f32.mrf.mxu0
        %v661 = vadd.f32 0.0, %v660
        %662 = vdwg.mxu0
        %v663 = vpack.c.bf16 %v589, %v585
        %v664 = vpack.c.bf16 %v591, %v587
        %v665 = vpack.c.bf16 %v599, %v595
        %v666 = vpack.c.bf16 %v601, %v597
        %v667 = vpack.c.bf16 %v609, %v605
        %v668 = vpack.c.bf16 %v611, %v607
        %v669 = vpack.c.bf16 %v619, %v615
        %v670 = vpack.c.bf16 %v621, %v617
        %v671 = vpack.c.bf16 %v629, %v625
        %v672 = vpack.c.bf16 %v631, %v627
        %v673 = vpack.c.bf16 %v639, %v635
        %v674 = vpack.c.bf16 %v641, %v637
        %v675 = vpack.c.bf16 %v649, %v645
        %v676 = vpack.c.bf16 %v651, %v647
        %v677 = vpack.c.bf16 %v659, %v655
        %v678 = vpack.c.bf16 %v661, %v657
        %v679 = vld [vmem:[%s260] sm:$0xff]
        %v680 = vld [vmem:[%s260 + $0x8] sm:$0xff]
        %v681 = vld [vmem:[%s260 + $0x10] sm:$0xff]
        %v682 = vld [vmem:[%s260 + $0x18] sm:$0xff]
        %v683 = vld [vmem:[%s260 + $0x20] sm:$0xff]
        %v684 = vld [vmem:[%s260 + $0x28] sm:$0xff]
        %v685 = vld [vmem:[%s260 + $0x30] sm:$0xff]
        %v686 = vld [vmem:[%s260 + $0x38] sm:$0xff]
        %v687 = vld [vmem:[%s260 + $0x40] sm:$0xff]
        %v688 = vld [vmem:[%s260 + $0x48] sm:$0xff]
        %v689 = vld [vmem:[%s260 + $0x50] sm:$0xff]
        %v690 = vld [vmem:[%s260 + $0x58] sm:$0xff]
        %v691 = vld [vmem:[%s260 + $0x60] sm:$0xff]
        %v692 = vld [vmem:[%s260 + $0x68] sm:$0xff]
        %v693 = vld [vmem:[%s260 + $0x70] sm:$0xff]
        %v694 = vld [vmem:[%s260 + $0x78] sm:$0xff]
        %v695 = vld [vmem:[%s260 + $0x80] sm:$0xff]
        %v696 = vld [vmem:[%s260 + $0x88] sm:$0xff]
        %v697 = vld [vmem:[%s260 + $0x90] sm:$0xff]
        %v698 = vld [vmem:[%s260 + $0x98] sm:$0xff]
        %v699 = vld [vmem:[%s260 + $0xa0] sm:$0xff]
        %v700 = vld [vmem:[%s260 + $0xa8] sm:$0xff]
        %v701 = vld [vmem:[%s260 + $0xb0] sm:$0xff]
        %v702 = vld [vmem:[%s260 + $0xb8] sm:$0xff]
        %v703 = vld [vmem:[%s260 + $0xc0] sm:$0xff]
        %v704 = vld [vmem:[%s260 + $0xc8] sm:$0xff]
        %v705 = vld [vmem:[%s260 + $0xd0] sm:$0xff]
        %v706 = vld [vmem:[%s260 + $0xd8] sm:$0xff]
        %v707 = vld [vmem:[%s260 + $0xe0] sm:$0xff]
        %v708 = vld [vmem:[%s260 + $0xe8] sm:$0xff]
        %v709 = vld [vmem:[%s260 + $0xf0] sm:$0xff]
        %v710 = vld [vmem:[%s260 + $0xf8] sm:$0xff]
        %v743 = vunpack.c.l.b16 %v679
        %v744 = vunpack.c.h.b16 %v679
        %v745 = vunpack.c.l.b16 %v680
        %v746 = vunpack.c.h.b16 %v680
        %v747 = vunpack.c.l.b16 %v681
        %v748 = vunpack.c.h.b16 %v681
        %v749 = vunpack.c.l.b16 %v682
        %v750 = vunpack.c.h.b16 %v682
        %v751 = vunpack.c.l.b16 %v683
        %v752 = vunpack.c.h.b16 %v683
        %v753 = vunpack.c.l.b16 %v684
        %v754 = vunpack.c.h.b16 %v684
        %v755 = vunpack.c.l.b16 %v685
        %v756 = vunpack.c.h.b16 %v685
        %v757 = vunpack.c.l.b16 %v686
        %v758 = vunpack.c.h.b16 %v686
        %v759 = vunpack.c.l.b16 %v687
        %v760 = vunpack.c.h.b16 %v687
        %v761 = vunpack.c.l.b16 %v688
        %v762 = vunpack.c.h.b16 %v688
        %v763 = vunpack.c.l.b16 %v689
        %v764 = vunpack.c.h.b16 %v689
        %v765 = vunpack.c.l.b16 %v690
        %v766 = vunpack.c.h.b16 %v690
        %v767 = vunpack.c.l.b16 %v691
        %v768 = vunpack.c.h.b16 %v691
        %v769 = vunpack.c.l.b16 %v692
        %v770 = vunpack.c.h.b16 %v692
        %v771 = vunpack.c.l.b16 %v693
        %v772 = vunpack.c.h.b16 %v693
        %v773 = vunpack.c.l.b16 %v694
        %v774 = vunpack.c.h.b16 %v694
        %v775 = vunpack.c.l.b16 %v695
        %v776 = vunpack.c.h.b16 %v695
        %v777 = vunpack.c.l.b16 %v696
        %v778 = vunpack.c.h.b16 %v696
        %v779 = vunpack.c.l.b16 %v697
        %v780 = vunpack.c.h.b16 %v697
        %v781 = vunpack.c.l.b16 %v698
        %v782 = vunpack.c.h.b16 %v698
        %v783 = vunpack.c.l.b16 %v699
        %v784 = vunpack.c.h.b16 %v699
        %v785 = vunpack.c.l.b16 %v700
        %v786 = vunpack.c.h.b16 %v700
        %v787 = vunpack.c.l.b16 %v701
        %v788 = vunpack.c.h.b16 %v701
        %v789 = vunpack.c.l.b16 %v702
        %v790 = vunpack.c.h.b16 %v702
        %v791 = vunpack.c.l.b16 %v703
        %v792 = vunpack.c.h.b16 %v703
        %v793 = vunpack.c.l.b16 %v704
        %v794 = vunpack.c.h.b16 %v704
        %v795 = vunpack.c.l.b16 %v705
        %v796 = vunpack.c.h.b16 %v705
        %v797 = vunpack.c.l.b16 %v706
        %v798 = vunpack.c.h.b16 %v706
        %v799 = vunpack.c.l.b16 %v707
        %v800 = vunpack.c.h.b16 %v707
        %v801 = vunpack.c.l.b16 %v708
        %v802 = vunpack.c.h.b16 %v708
        %v803 = vunpack.c.l.b16 %v709
        %v804 = vunpack.c.h.b16 %v709
        %v805 = vunpack.c.l.b16 %v710
        %v806 = vunpack.c.h.b16 %v710
        %v807 = vpack.c.b16 %v745, %v743
        %v808 = vpack.c.b16 %v746, %v744
        %v809 = vpack.c.b16 %v749, %v747
        %v810 = vpack.c.b16 %v750, %v748
        %v811 = vpack.c.b16 %v753, %v751
        %v812 = vpack.c.b16 %v754, %v752
        %v813 = vpack.c.b16 %v757, %v755
        %v814 = vpack.c.b16 %v758, %v756
        %v815 = vpack.c.b16 %v761, %v759
        %v816 = vpack.c.b16 %v762, %v760
        %v817 = vpack.c.b16 %v765, %v763
        %v818 = vpack.c.b16 %v766, %v764
        %v819 = vpack.c.b16 %v769, %v767
        %v820 = vpack.c.b16 %v770, %v768
        %v821 = vpack.c.b16 %v773, %v771
        %v822 = vpack.c.b16 %v774, %v772
        %v823 = vpack.c.b16 %v777, %v775
        %v824 = vpack.c.b16 %v778, %v776
        %v825 = vpack.c.b16 %v781, %v779
        %v826 = vpack.c.b16 %v782, %v780
        %v827 = vpack.c.b16 %v785, %v783
        %v828 = vpack.c.b16 %v786, %v784
        %v829 = vpack.c.b16 %v789, %v787
        %v830 = vpack.c.b16 %v790, %v788
        %v831 = vpack.c.b16 %v793, %v791
        %v832 = vpack.c.b16 %v794, %v792
        %v833 = vpack.c.b16 %v797, %v795
        %v834 = vpack.c.b16 %v798, %v796
        %v835 = vpack.c.b16 %v801, %v799
        %v836 = vpack.c.b16 %v802, %v800
        %v837 = vpack.c.b16 %v805, %v803
        %v838 = vpack.c.b16 %v806, %v804
        %871 = vmatprep.subr.bf16.mxu0 %v822
        %872 = vmatpush1.bf16.xpose.msra.mxu0 %v821
        %873 = vmatprep.subr.bf16.mxu0 %v820
        %874 = vmatpush1.bf16.xpose.msra.mxu0 %v819
        %875 = vmatprep.subr.bf16.mxu0 %v818
        %876 = vmatpush1.bf16.xpose.msra.mxu0 %v817
        %877 = vmatprep.subr.bf16.mxu0 %v816
        %878 = vmatpush1.bf16.xpose.msra.mxu0 %v815
        %879 = vmatprep.subr.bf16.mxu0 %v814
        %880 = vmatpush1.bf16.xpose.msra.mxu0 %v813
        %881 = vmatprep.subr.bf16.mxu0 %v812
        %882 = vmatpush1.bf16.xpose.msra.mxu0 %v811
        %883 = vmatprep.subr.bf16.mxu0 %v810
        %884 = vmatpush1.bf16.xpose.msra.mxu0 %v809
        %885 = vmatprep.subr.bf16.mxu0 %v808
        %886 = vmatpush1.bf16.xpose.msra.mxu0 %v807
        %887 = vmatprep.subr.bf16.mxu0 %v838
        %888 = vmatpush2.bf16.xpose.msra.mxu0 %v837
        %889 = vmatprep.subr.bf16.mxu0 %v836
        %890 = vmatpush2.bf16.xpose.msra.mxu0 %v835
        %891 = vmatprep.subr.bf16.mxu0 %v834
        %892 = vmatpush2.bf16.xpose.msra.mxu0 %v833
        %893 = vmatprep.subr.bf16.mxu0 %v832
        %894 = vmatpush2.bf16.xpose.msra.mxu0 %v831
        %895 = vmatprep.subr.bf16.mxu0 %v830
        %896 = vmatpush2.bf16.xpose.msra.mxu0 %v829
        %897 = vmatprep.subr.bf16.mxu0 %v828
        %898 = vmatpush2.bf16.xpose.msra.mxu0 %v827
        %899 = vmatprep.subr.bf16.mxu0 %v826
        %900 = vmatpush2.bf16.xpose.msra.mxu0 %v825
        %901 = vmatprep.subr.bf16.mxu0 %v824
        %902 = vmatpush2.bf16.xpose.msra.mxu0 %v823
        %903 = vmatprep.mubr.bf16.mxu0 %v664
        %904 = vmatmul.mubr.bf16.gmra.mxu0 %v663
        %v905 = vpop.f32.mrf.mxu0
        %v906 = vadd.f32 0.0, %v905
        %v907 = vpop.f32.mrf.mxu0
        %v908 = vadd.f32 0.0, %v907
        %v909 = vpop.f32.mrf.mxu0
        %v910 = vadd.f32 0.0, %v909
        %v911 = vpop.f32.mrf.mxu0
        %v912 = vadd.f32 0.0, %v911
        %913 = vmatprep.mubr.bf16.mxu0 %v666
        %914 = vmatmul.mubr.bf16.gmra.mxu0 %v665
        %v915 = vpop.f32.mrf.mxu0
        %v916 = vadd.f32 0.0, %v915
        %v917 = vpop.f32.mrf.mxu0
        %v918 = vadd.f32 0.0, %v917
        %v919 = vpop.f32.mrf.mxu0
        %v920 = vadd.f32 0.0, %v919
        %v921 = vpop.f32.mrf.mxu0
        %v922 = vadd.f32 0.0, %v921
        %923 = vmatprep.mubr.bf16.mxu0 %v668
        %924 = vmatmul.mubr.bf16.gmra.mxu0 %v667
        %v925 = vpop.f32.mrf.mxu0
        %v926 = vadd.f32 0.0, %v925
        %v927 = vpop.f32.mrf.mxu0
        %v928 = vadd.f32 0.0, %v927
        %v929 = vpop.f32.mrf.mxu0
        %v930 = vadd.f32 0.0, %v929
        %v931 = vpop.f32.mrf.mxu0
        %v932 = vadd.f32 0.0, %v931
        %933 = vmatprep.mubr.bf16.mxu0 %v670
        %934 = vmatmul.mubr.bf16.gmra.mxu0 %v669
        %v935 = vpop.f32.mrf.mxu0
        %v936 = vadd.f32 0.0, %v935
        %v937 = vpop.f32.mrf.mxu0
        %v938 = vadd.f32 0.0, %v937
        %v939 = vpop.f32.mrf.mxu0
        %v940 = vadd.f32 0.0, %v939
        %v941 = vpop.f32.mrf.mxu0
        %v942 = vadd.f32 0.0, %v941
        %943 = vmatprep.mubr.bf16.mxu0 %v672
        %944 = vmatmul.mubr.bf16.gmra.mxu0 %v671
        %v945 = vpop.f32.mrf.mxu0
        %v946 = vadd.f32 0.0, %v945
        %v947 = vpop.f32.mrf.mxu0
        %v948 = vadd.f32 0.0, %v947
        %v949 = vpop.f32.mrf.mxu0
        %v950 = vadd.f32 0.0, %v949
        %v951 = vpop.f32.mrf.mxu0
        %v952 = vadd.f32 0.0, %v951
        %953 = vmatprep.mubr.bf16.mxu0 %v674
        %954 = vmatmul.mubr.bf16.gmra.mxu0 %v673
        %v955 = vpop.f32.mrf.mxu0
        %v956 = vadd.f32 0.0, %v955
        %v957 = vpop.f32.mrf.mxu0
        %v958 = vadd.f32 0.0, %v957
        %v959 = vpop.f32.mrf.mxu0
        %v960 = vadd.f32 0.0, %v959
        %v961 = vpop.f32.mrf.mxu0
        %v962 = vadd.f32 0.0, %v961
        %963 = vmatprep.mubr.bf16.mxu0 %v676
        %964 = vmatmul.mubr.bf16.gmra.mxu0 %v675
        %v965 = vpop.f32.mrf.mxu0
        %v966 = vadd.f32 0.0, %v965
        %v967 = vpop.f32.mrf.mxu0
        %v968 = vadd.f32 0.0, %v967
        %v969 = vpop.f32.mrf.mxu0
        %v970 = vadd.f32 0.0, %v969
        %v971 = vpop.f32.mrf.mxu0
        %v972 = vadd.f32 0.0, %v971
        %973 = vmatprep.mubr.bf16.mxu0 %v678
        %974 = vmatmul.mubr.bf16.gmra.mxu0 %v677
        %v975 = vpop.f32.mrf.mxu0
        %v976 = vadd.f32 0.0, %v975
        %v977 = vpop.f32.mrf.mxu0
        %v978 = vadd.f32 0.0, %v977
        %v979 = vpop.f32.mrf.mxu0
        %v980 = vadd.f32 0.0, %v979
        %v981 = vpop.f32.mrf.mxu0
        %v982 = vadd.f32 0.0, %v981
        %983 = vdwg.mxu0
        %p984 = scmp.eq.s32.totalorder %s24, 0
        // Predicated region
        $region41: #{aces_forward.3} parent=35 // pred_check
          %p985 = pneg %p984
        $region42: #{aces_forward.3} parent=35 // pred_check_branch
          %987 = sbr.rel (%p985) target = $region44
        $region43: #{aces_forward.3} parent=35 // pred_region
          %988 = vst [vmem:[%s244] sm:$0xff] 0.0
          %989 = vst [vmem:[%s244 + $0x8] sm:$0xff] 0.0
          %990 = vst [vmem:[%s244 + $0x10] sm:$0xff] 0.0
          %991 = vst [vmem:[%s244 + $0x18] sm:$0xff] 0.0
          %992 = vst [vmem:[%s244 + $0x20] sm:$0xff] 0.0
          %993 = vst [vmem:[%s244 + $0x28] sm:$0xff] 0.0
          %994 = vst [vmem:[%s244 + $0x30] sm:$0xff] 0.0
          %995 = vst [vmem:[%s244 + $0x38] sm:$0xff] 0.0
          %996 = vst [vmem:[%s244 + $0x40] sm:$0xff] 0.0
          %997 = vst [vmem:[%s244 + $0x48] sm:$0xff] 0.0
          %998 = vst [vmem:[%s244 + $0x50] sm:$0xff] 0.0
          %999 = vst [vmem:[%s244 + $0x58] sm:$0xff] 0.0
          %1000 = vst [vmem:[%s244 + $0x60] sm:$0xff] 0.0
          %1001 = vst [vmem:[%s244 + $0x68] sm:$0xff] 0.0
          %1002 = vst [vmem:[%s244 + $0x70] sm:$0xff] 0.0
          %1003 = vst [vmem:[%s244 + $0x78] sm:$0xff] 0.0
          %1004 = vst [vmem:[%s244 + $0x80] sm:$0xff] 0.0
          %1005 = vst [vmem:[%s244 + $0x88] sm:$0xff] 0.0
          %1006 = vst [vmem:[%s244 + $0x90] sm:$0xff] 0.0
          %1007 = vst [vmem:[%s244 + $0x98] sm:$0xff] 0.0
          %1008 = vst [vmem:[%s244 + $0xa0] sm:$0xff] 0.0
          %1009 = vst [vmem:[%s244 + $0xa8] sm:$0xff] 0.0
          %1010 = vst [vmem:[%s244 + $0xb0] sm:$0xff] 0.0
          %1011 = vst [vmem:[%s244 + $0xb8] sm:$0xff] 0.0
          %1012 = vst [vmem:[%s244 + $0xc0] sm:$0xff] 0.0
          %1013 = vst [vmem:[%s244 + $0xc8] sm:$0xff] 0.0
          %1014 = vst [vmem:[%s244 + $0xd0] sm:$0xff] 0.0
          %1015 = vst [vmem:[%s244 + $0xd8] sm:$0xff] 0.0
          %1016 = vst [vmem:[%s244 + $0xe0] sm:$0xff] 0.0
          %1017 = vst [vmem:[%s244 + $0xe8] sm:$0xff] 0.0
          %1018 = vst [vmem:[%s244 + $0xf0] sm:$0xff] 0.0
          %1019 = vst [vmem:[%s244 + $0xf8] sm:$0xff] 0.0
        $region44: #{aces_forward.3} parent=35 // pred_fallthru
          _
        %p1020 = scmp.gt.s32.totalorder %s24, 0
        // Predicated region
        $region45: #{aces_forward.3} parent=35 // pred_check
          %p1021 = pneg %p1020
        $region46: #{aces_forward.3} parent=35 // pred_check_branch
          %1023 = sbr.rel (%p1021) target = $region48
        $region47: #{aces_forward.3} parent=35 // pred_region
          %s1024 = sld [smem:[#allocation3 + %s24]]
          %s1025 = sadd.s32 %s24, 13
          %s1026 = sld [smem:[#allocation3 + %s1025]]
          %v1027 = vld [vmem:[#allocation2] sm:$0xff]
          %v1028 = vld [vmem:[#allocation2 + $0x8] sm:$0xff]
          %v1029 = vld [vmem:[#allocation2 + $0x10] sm:$0xff]
          %v1030 = vld [vmem:[#allocation2 + $0x18] sm:$0xff]
          %v1031 = vld [vmem:[#allocation2 + $0x20] sm:$0xff]
          %v1032 = vld [vmem:[#allocation2 + $0x28] sm:$0xff]
          %v1033 = vld [vmem:[#allocation2 + $0x30] sm:$0xff]
          %v1034 = vld [vmem:[#allocation2 + $0x38] sm:$0xff]
          %v1035 = vld [vmem:[#allocation2 + $0x40] sm:$0xff]
          %v1036 = vld [vmem:[#allocation2 + $0x48] sm:$0xff]
          %v1037 = vld [vmem:[#allocation2 + $0x50] sm:$0xff]
          %v1038 = vld [vmem:[#allocation2 + $0x58] sm:$0xff]
          %v1039 = vld [vmem:[#allocation2 + $0x60] sm:$0xff]
          %v1040 = vld [vmem:[#allocation2 + $0x68] sm:$0xff]
          %v1041 = vld [vmem:[#allocation2 + $0x70] sm:$0xff]
          %v1042 = vld [vmem:[#allocation2 + $0x78] sm:$0xff]
          %v1043 = vld [vmem:[#allocation2 + $0x80] sm:$0xff]
          %v1044 = vld [vmem:[#allocation2 + $0x88] sm:$0xff]
          %v1045 = vld [vmem:[#allocation2 + $0x90] sm:$0xff]
          %v1046 = vld [vmem:[#allocation2 + $0x98] sm:$0xff]
          %v1047 = vld [vmem:[#allocation2 + $0xa0] sm:$0xff]
          %v1048 = vld [vmem:[#allocation2 + $0xa8] sm:$0xff]
          %v1049 = vld [vmem:[#allocation2 + $0xb0] sm:$0xff]
          %v1050 = vld [vmem:[#allocation2 + $0xb8] sm:$0xff]
          %v1051 = vld [vmem:[#allocation2 + $0xc0] sm:$0xff]
          %v1052 = vld [vmem:[#allocation2 + $0xc8] sm:$0xff]
          %v1053 = vld [vmem:[#allocation2 + $0xd0] sm:$0xff]
          %v1054 = vld [vmem:[#allocation2 + $0xd8] sm:$0xff]
          %v1055 = vld [vmem:[#allocation2 + $0xe0] sm:$0xff]
          %v1056 = vld [vmem:[#allocation2 + $0xe8] sm:$0xff]
          %v1057 = vld [vmem:[#allocation2 + $0xf0] sm:$0xff]
          %v1058 = vld [vmem:[#allocation2 + $0xf8] sm:$0xff]
          %v1059 = vstv %s1024
          %v1060 = vadd.f32 %v1027, %v1059
          %v1061 = vadd.f32 %v1028, %v1059
          %v1062 = vadd.f32 %v1029, %v1059
          %v1063 = vadd.f32 %v1030, %v1059
          %v1064 = vadd.f32 %v1031, %v1059
          %v1065 = vadd.f32 %v1032, %v1059
          %v1066 = vadd.f32 %v1033, %v1059
          %v1067 = vadd.f32 %v1034, %v1059
          %v1068 = vadd.f32 %v1035, %v1059
          %v1069 = vadd.f32 %v1036, %v1059
          %v1070 = vadd.f32 %v1037, %v1059
          %v1071 = vadd.f32 %v1038, %v1059
          %v1072 = vadd.f32 %v1039, %v1059
          %v1073 = vadd.f32 %v1040, %v1059
          %v1074 = vadd.f32 %v1041, %v1059
          %v1075 = vadd.f32 %v1042, %v1059
          %v1076 = vadd.f32 %v1043, %v1059
          %v1077 = vadd.f32 %v1044, %v1059
          %v1078 = vadd.f32 %v1045, %v1059
          %v1079 = vadd.f32 %v1046, %v1059
          %v1080 = vadd.f32 %v1047, %v1059
          %v1081 = vadd.f32 %v1048, %v1059
          %v1082 = vadd.f32 %v1049, %v1059
          %v1083 = vadd.f32 %v1050, %v1059
          %v1084 = vadd.f32 %v1051, %v1059
          %v1085 = vadd.f32 %v1052, %v1059
          %v1086 = vadd.f32 %v1053, %v1059
          %v1087 = vadd.f32 %v1054, %v1059
          %v1088 = vadd.f32 %v1055, %v1059
          %v1089 = vadd.f32 %v1056, %v1059
          %v1090 = vadd.f32 %v1057, %v1059
          %v1091 = vadd.f32 %v1058, %v1059
          %v1092 = vadd.f32 %v906, %v1059
          %v1093 = vadd.f32 %v908, %v1059
          %v1094 = vadd.f32 %v910, %v1059
          %v1095 = vadd.f32 %v912, %v1059
          %v1096 = vadd.f32 %v916, %v1059
          %v1097 = vadd.f32 %v918, %v1059
          %v1098 = vadd.f32 %v920, %v1059
          %v1099 = vadd.f32 %v922, %v1059
          %v1100 = vadd.f32 %v926, %v1059
          %v1101 = vadd.f32 %v928, %v1059
          %v1102 = vadd.f32 %v930, %v1059
          %v1103 = vadd.f32 %v932, %v1059
          %v1104 = vadd.f32 %v936, %v1059
          %v1105 = vadd.f32 %v938, %v1059
          %v1106 = vadd.f32 %v940, %v1059
          %v1107 = vadd.f32 %v942, %v1059
          %v1108 = vadd.f32 %v946, %v1059
          %v1109 = vadd.f32 %v948, %v1059
          %v1110 = vadd.f32 %v950, %v1059
          %v1111 = vadd.f32 %v952, %v1059
          %v1112 = vadd.f32 %v956, %v1059
          %v1113 = vadd.f32 %v958, %v1059
          %v1114 = vadd.f32 %v960, %v1059
          %v1115 = vadd.f32 %v962, %v1059
          %v1116 = vadd.f32 %v966, %v1059
          %v1117 = vadd.f32 %v968, %v1059
          %v1118 = vadd.f32 %v970, %v1059
          %v1119 = vadd.f32 %v972, %v1059
          %v1120 = vadd.f32 %v976, %v1059
          %v1121 = vadd.f32 %v978, %v1059
          %v1122 = vadd.f32 %v980, %v1059
          %v1123 = vadd.f32 %v982, %v1059
          %v1124 = vrcp.pop %v1092
          %v1125 = vmul.f32 %v1060, %v1124
          %v1126 = vrcp.pop %v1093
          %v1127 = vmul.f32 %v1061, %v1126
          %v1128 = vrcp.pop %v1094
          %v1129 = vmul.f32 %v1062, %v1128
          %v1130 = vrcp.pop %v1095
          %v1131 = vmul.f32 %v1063, %v1130
          %v1132 = vrcp.pop %v1096
          %v1133 = vmul.f32 %v1064, %v1132
          %v1134 = vrcp.pop %v1097
          %v1135 = vmul.f32 %v1065, %v1134
          %v1136 = vrcp.pop %v1098
          %v1137 = vmul.f32 %v1066, %v1136
          %v1138 = vrcp.pop %v1099
          %v1139 = vmul.f32 %v1067, %v1138
          %v1140 = vrcp.pop %v1100
          %v1141 = vmul.f32 %v1068, %v1140
          %v1142 = vrcp.pop %v1101
          %v1143 = vmul.f32 %v1069, %v1142
          %v1144 = vrcp.pop %v1102
          %v1145 = vmul.f32 %v1070, %v1144
          %v1146 = vrcp.pop %v1103
          %v1147 = vmul.f32 %v1071, %v1146
          %v1148 = vrcp.pop %v1104
          %v1149 = vmul.f32 %v1072, %v1148
          %v1150 = vrcp.pop %v1105
          %v1151 = vmul.f32 %v1073, %v1150
          %v1152 = vrcp.pop %v1106
          %v1153 = vmul.f32 %v1074, %v1152
          %v1154 = vrcp.pop %v1107
          %v1155 = vmul.f32 %v1075, %v1154
          %v1156 = vrcp.pop %v1108
          %v1157 = vmul.f32 %v1076, %v1156
          %v1158 = vrcp.pop %v1109
          %v1159 = vmul.f32 %v1077, %v1158
          %v1160 = vrcp.pop %v1110
          %v1161 = vmul.f32 %v1078, %v1160
          %v1162 = vrcp.pop %v1111
          %v1163 = vmul.f32 %v1079, %v1162
          %v1164 = vrcp.pop %v1112
          %v1165 = vmul.f32 %v1080, %v1164
          %v1166 = vrcp.pop %v1113
          %v1167 = vmul.f32 %v1081, %v1166
          %v1168 = vrcp.pop %v1114
          %v1169 = vmul.f32 %v1082, %v1168
          %v1170 = vrcp.pop %v1115
          %v1171 = vmul.f32 %v1083, %v1170
          %v1172 = vrcp.pop %v1116
          %v1173 = vmul.f32 %v1084, %v1172
          %v1174 = vrcp.pop %v1117
          %v1175 = vmul.f32 %v1085, %v1174
          %v1176 = vrcp.pop %v1118
          %v1177 = vmul.f32 %v1086, %v1176
          %v1178 = vrcp.pop %v1119
          %v1179 = vmul.f32 %v1087, %v1178
          %v1180 = vrcp.pop %v1120
          %v1181 = vmul.f32 %v1088, %v1180
          %v1182 = vrcp.pop %v1121
          %v1183 = vmul.f32 %v1089, %v1182
          %v1184 = vrcp.pop %v1122
          %v1185 = vmul.f32 %v1090, %v1184
          %v1186 = vrcp.pop %v1123
          %v1187 = vmul.f32 %v1091, %v1186
          %v1188 = vld [vmem:[%s244] sm:$0xff]
          %v1189 = vld [vmem:[%s244 + $0x8] sm:$0xff]
          %v1190 = vld [vmem:[%s244 + $0x10] sm:$0xff]
          %v1191 = vld [vmem:[%s244 + $0x18] sm:$0xff]
          %v1192 = vld [vmem:[%s244 + $0x20] sm:$0xff]
          %v1193 = vld [vmem:[%s244 + $0x28] sm:$0xff]
          %v1194 = vld [vmem:[%s244 + $0x30] sm:$0xff]
          %v1195 = vld [vmem:[%s244 + $0x38] sm:$0xff]
          %v1196 = vld [vmem:[%s244 + $0x40] sm:$0xff]
          %v1197 = vld [vmem:[%s244 + $0x48] sm:$0xff]
          %v1198 = vld [vmem:[%s244 + $0x50] sm:$0xff]
          %v1199 = vld [vmem:[%s244 + $0x58] sm:$0xff]
          %v1200 = vld [vmem:[%s244 + $0x60] sm:$0xff]
          %v1201 = vld [vmem:[%s244 + $0x68] sm:$0xff]
          %v1202 = vld [vmem:[%s244 + $0x70] sm:$0xff]
          %v1203 = vld [vmem:[%s244 + $0x78] sm:$0xff]
          %v1204 = vld [vmem:[%s244 + $0x80] sm:$0xff]
          %v1205 = vld [vmem:[%s244 + $0x88] sm:$0xff]
          %v1206 = vld [vmem:[%s244 + $0x90] sm:$0xff]
          %v1207 = vld [vmem:[%s244 + $0x98] sm:$0xff]
          %v1208 = vld [vmem:[%s244 + $0xa0] sm:$0xff]
          %v1209 = vld [vmem:[%s244 + $0xa8] sm:$0xff]
          %v1210 = vld [vmem:[%s244 + $0xb0] sm:$0xff]
          %v1211 = vld [vmem:[%s244 + $0xb8] sm:$0xff]
          %v1212 = vld [vmem:[%s244 + $0xc0] sm:$0xff]
          %v1213 = vld [vmem:[%s244 + $0xc8] sm:$0xff]
          %v1214 = vld [vmem:[%s244 + $0xd0] sm:$0xff]
          %v1215 = vld [vmem:[%s244 + $0xd8] sm:$0xff]
          %v1216 = vld [vmem:[%s244 + $0xe0] sm:$0xff]
          %v1217 = vld [vmem:[%s244 + $0xe8] sm:$0xff]
          %v1218 = vld [vmem:[%s244 + $0xf0] sm:$0xff]
          %v1219 = vld [vmem:[%s244 + $0xf8] sm:$0xff]
          %v1220 = vsub.f32 %v1125, 1.0
          %v1221 = vsub.f32 %v1127, 1.0
          %v1222 = vsub.f32 %v1129, 1.0
          %v1223 = vsub.f32 %v1131, 1.0
          %v1224 = vsub.f32 %v1133, 1.0
          %v1225 = vsub.f32 %v1135, 1.0
          %v1226 = vsub.f32 %v1137, 1.0
          %v1227 = vsub.f32 %v1139, 1.0
          %v1228 = vsub.f32 %v1141, 1.0
          %v1229 = vsub.f32 %v1143, 1.0
          %v1230 = vsub.f32 %v1145, 1.0
          %v1231 = vsub.f32 %v1147, 1.0
          %v1232 = vsub.f32 %v1149, 1.0
          %v1233 = vsub.f32 %v1151, 1.0
          %v1234 = vsub.f32 %v1153, 1.0
          %v1235 = vsub.f32 %v1155, 1.0
          %v1236 = vsub.f32 %v1157, 1.0
          %v1237 = vsub.f32 %v1159, 1.0
          %v1238 = vsub.f32 %v1161, 1.0
          %v1239 = vsub.f32 %v1163, 1.0
          %v1240 = vsub.f32 %v1165, 1.0
          %v1241 = vsub.f32 %v1167, 1.0
          %v1242 = vsub.f32 %v1169, 1.0
          %v1243 = vsub.f32 %v1171, 1.0
          %v1244 = vsub.f32 %v1173, 1.0
          %v1245 = vsub.f32 %v1175, 1.0
          %v1246 = vsub.f32 %v1177, 1.0
          %v1247 = vsub.f32 %v1179, 1.0
          %v1248 = vsub.f32 %v1181, 1.0
          %v1249 = vsub.f32 %v1183, 1.0
          %v1250 = vsub.f32 %v1185, 1.0
          %v1251 = vsub.f32 %v1187, 1.0
          %v1252 = vstv %s1026
          %v1253 = vmul.f32 %v1252, %v1220
          %v1254 = vmul.f32 %v1252, %v1221
          %v1255 = vmul.f32 %v1252, %v1222
          %v1256 = vmul.f32 %v1252, %v1223
          %v1257 = vmul.f32 %v1252, %v1224
          %v1258 = vmul.f32 %v1252, %v1225
          %v1259 = vmul.f32 %v1252, %v1226
          %v1260 = vmul.f32 %v1252, %v1227
          %v1261 = vmul.f32 %v1252, %v1228
          %v1262 = vmul.f32 %v1252, %v1229
          %v1263 = vmul.f32 %v1252, %v1230
          %v1264 = vmul.f32 %v1252, %v1231
          %v1265 = vmul.f32 %v1252, %v1232
          %v1266 = vmul.f32 %v1252, %v1233
          %v1267 = vmul.f32 %v1252, %v1234
          %v1268 = vmul.f32 %v1252, %v1235
          %v1269 = vmul.f32 %v1252, %v1236
          %v1270 = vmul.f32 %v1252, %v1237
          %v1271 = vmul.f32 %v1252, %v1238
          %v1272 = vmul.f32 %v1252, %v1239
          %v1273 = vmul.f32 %v1252, %v1240
          %v1274 = vmul.f32 %v1252, %v1241
          %v1275 = vmul.f32 %v1252, %v1242
          %v1276 = vmul.f32 %v1252, %v1243
          %v1277 = vmul.f32 %v1252, %v1244
          %v1278 = vmul.f32 %v1252, %v1245
          %v1279 = vmul.f32 %v1252, %v1246
          %v1280 = vmul.f32 %v1252, %v1247
          %v1281 = vmul.f32 %v1252, %v1248
          %v1282 = vmul.f32 %v1252, %v1249
          %v1283 = vmul.f32 %v1252, %v1250
          %v1284 = vmul.f32 %v1252, %v1251
          %v1285 = vadd.f32 %v1188, %v1253
          %v1286 = vadd.f32 %v1189, %v1254
          %v1287 = vadd.f32 %v1190, %v1255
          %v1288 = vadd.f32 %v1191, %v1256
          %v1289 = vadd.f32 %v1192, %v1257
          %v1290 = vadd.f32 %v1193, %v1258
          %v1291 = vadd.f32 %v1194, %v1259
          %v1292 = vadd.f32 %v1195, %v1260
          %v1293 = vadd.f32 %v1196, %v1261
          %v1294 = vadd.f32 %v1197, %v1262
          %v1295 = vadd.f32 %v1198, %v1263
          %v1296 = vadd.f32 %v1199, %v1264
          %v1297 = vadd.f32 %v1200, %v1265
          %v1298 = vadd.f32 %v1201, %v1266
          %v1299 = vadd.f32 %v1202, %v1267
          %v1300 = vadd.f32 %v1203, %v1268
          %v1301 = vadd.f32 %v1204, %v1269
          %v1302 = vadd.f32 %v1205, %v1270
          %v1303 = vadd.f32 %v1206, %v1271
          %v1304 = vadd.f32 %v1207, %v1272
          %v1305 = vadd.f32 %v1208, %v1273
          %v1306 = vadd.f32 %v1209, %v1274
          %v1307 = vadd.f32 %v1210, %v1275
          %v1308 = vadd.f32 %v1211, %v1276
          %v1309 = vadd.f32 %v1212, %v1277
          %v1310 = vadd.f32 %v1213, %v1278
          %v1311 = vadd.f32 %v1214, %v1279
          %v1312 = vadd.f32 %v1215, %v1280
          %v1313 = vadd.f32 %v1216, %v1281
          %v1314 = vadd.f32 %v1217, %v1282
          %v1315 = vadd.f32 %v1218, %v1283
          %v1316 = vadd.f32 %v1219, %v1284
          %1317 = vst [vmem:[%s244] sm:$0xff] %v1285
          %1318 = vst [vmem:[%s244 + $0x8] sm:$0xff] %v1286
          %1319 = vst [vmem:[%s244 + $0x10] sm:$0xff] %v1287
          %1320 = vst [vmem:[%s244 + $0x18] sm:$0xff] %v1288
          %1321 = vst [vmem:[%s244 + $0x20] sm:$0xff] %v1289
          %1322 = vst [vmem:[%s244 + $0x28] sm:$0xff] %v1290
          %1323 = vst [vmem:[%s244 + $0x30] sm:$0xff] %v1291
          %1324 = vst [vmem:[%s244 + $0x38] sm:$0xff] %v1292
          %1325 = vst [vmem:[%s244 + $0x40] sm:$0xff] %v1293
          %1326 = vst [vmem:[%s244 + $0x48] sm:$0xff] %v1294
          %1327 = vst [vmem:[%s244 + $0x50] sm:$0xff] %v1295
          %1328 = vst [vmem:[%s244 + $0x58] sm:$0xff] %v1296
          %1329 = vst [vmem:[%s244 + $0x60] sm:$0xff] %v1297
          %1330 = vst [vmem:[%s244 + $0x68] sm:$0xff] %v1298
          %1331 = vst [vmem:[%s244 + $0x70] sm:$0xff] %v1299
          %1332 = vst [vmem:[%s244 + $0x78] sm:$0xff] %v1300
          %1333 = vst [vmem:[%s244 + $0x80] sm:$0xff] %v1301
          %1334 = vst [vmem:[%s244 + $0x88] sm:$0xff] %v1302
          %1335 = vst [vmem:[%s244 + $0x90] sm:$0xff] %v1303
          %1336 = vst [vmem:[%s244 + $0x98] sm:$0xff] %v1304
          %1337 = vst [vmem:[%s244 + $0xa0] sm:$0xff] %v1305
          %1338 = vst [vmem:[%s244 + $0xa8] sm:$0xff] %v1306
          %1339 = vst [vmem:[%s244 + $0xb0] sm:$0xff] %v1307
          %1340 = vst [vmem:[%s244 + $0xb8] sm:$0xff] %v1308
          %1341 = vst [vmem:[%s244 + $0xc0] sm:$0xff] %v1309
          %1342 = vst [vmem:[%s244 + $0xc8] sm:$0xff] %v1310
          %1343 = vst [vmem:[%s244 + $0xd0] sm:$0xff] %v1311
          %1344 = vst [vmem:[%s244 + $0xd8] sm:$0xff] %v1312
          %1345 = vst [vmem:[%s244 + $0xe0] sm:$0xff] %v1313
          %1346 = vst [vmem:[%s244 + $0xe8] sm:$0xff] %v1314
          %1347 = vst [vmem:[%s244 + $0xf0] sm:$0xff] %v1315
          %1348 = vst [vmem:[%s244 + $0xf8] sm:$0xff] %v1316
        $region48: #{aces_forward.3} parent=35 // pred_fallthru
          _
        %1349 = vst [vmem:[#allocation2] sm:$0xff] %v906
        %1350 = vst [vmem:[#allocation2 + $0x8] sm:$0xff] %v908
        %1351 = vst [vmem:[#allocation2 + $0x10] sm:$0xff] %v910
        %1352 = vst [vmem:[#allocation2 + $0x18] sm:$0xff] %v912
        %1353 = vst [vmem:[#allocation2 + $0x20] sm:$0xff] %v916
        %1354 = vst [vmem:[#allocation2 + $0x28] sm:$0xff] %v918
        %1355 = vst [vmem:[#allocation2 + $0x30] sm:$0xff] %v920
        %1356 = vst [vmem:[#allocation2 + $0x38] sm:$0xff] %v922
        %1357 = vst [vmem:[#allocation2 + $0x40] sm:$0xff] %v926
        %1358 = vst [vmem:[#allocation2 + $0x48] sm:$0xff] %v928
        %1359 = vst [vmem:[#allocation2 + $0x50] sm:$0xff] %v930
        %1360 = vst [vmem:[#allocation2 + $0x58] sm:$0xff] %v932
        %1361 = vst [vmem:[#allocation2 + $0x60] sm:$0xff] %v936
        %1362 = vst [vmem:[#allocation2 + $0x68] sm:$0xff] %v938
        %1363 = vst [vmem:[#allocation2 + $0x70] sm:$0xff] %v940
        %1364 = vst [vmem:[#allocation2 + $0x78] sm:$0xff] %v942
        %1365 = vst [vmem:[#allocation2 + $0x80] sm:$0xff] %v946
        %1366 = vst [vmem:[#allocation2 + $0x88] sm:$0xff] %v948
        %1367 = vst [vmem:[#allocation2 + $0x90] sm:$0xff] %v950
        %1368 = vst [vmem:[#allocation2 + $0x98] sm:$0xff] %v952
        %1369 = vst [vmem:[#allocation2 + $0xa0] sm:$0xff] %v956
        %1370 = vst [vmem:[#allocation2 + $0xa8] sm:$0xff] %v958
        %1371 = vst [vmem:[#allocation2 + $0xb0] sm:$0xff] %v960
        %1372 = vst [vmem:[#allocation2 + $0xb8] sm:$0xff] %v962
        %1373 = vst [vmem:[#allocation2 + $0xc0] sm:$0xff] %v966
        %1374 = vst [vmem:[#allocation2 + $0xc8] sm:$0xff] %v968
        %1375 = vst [vmem:[#allocation2 + $0xd0] sm:$0xff] %v970
        %1376 = vst [vmem:[#allocation2 + $0xd8] sm:$0xff] %v972
        %1377 = vst [vmem:[#allocation2 + $0xe0] sm:$0xff] %v976
        %1378 = vst [vmem:[#allocation2 + $0xe8] sm:$0xff] %v978
        %1379 = vst [vmem:[#allocation2 + $0xf0] sm:$0xff] %v980
        %1380 = vst [vmem:[#allocation2 + $0xf8] sm:$0xff] %v982
        %s1381 = sand.u32 %s135, 1
        %s1382 = scalar_lea.sflag [#allocation4], %s1381
        %s1383 = sand.u32 %s135, 1
        %s1384 = smul.addr %s1383, 256
        %s1385 = scalar_lea.vmem [#allocation6], %s1384
        // Predicated region
        $region49: #{aces_forward.3} parent=35 // pred_check
          %p1386 = pneg %p145
        $region50: #{aces_forward.3} parent=35 // pred_check_branch
          %1388 = sbr.rel (%p1386) target = $region52
        $region51: #{aces_forward.3} parent=35 // pred_region
          %s1389 = smul.u32 16, %s23
          %s1391 = ssub.s32 4096, 4096
          %1392 = vsyncadd %s1382, %s1391
          %s1393 = smul.addr %s1389, 2
          %s1394 = smul.addr %s1393, 128
          %s1395 = scalar_lea.hbm %s4, %s1394
          %s1396 = sshll.u32 %s1385, 4
          %s1397 = int_to_ptr.vmem [resolvable:$true] %s1396
          %1402 = dma.vmem_to_hbm [thread:$0]  %s1397, 4096, %s1395, %s1382, 256, 256, 16
        $region52: #{aces_forward.3} parent=35 // pred_fallthru
          _
      $region36: #{aces_forward.3} parent=5 // pred_fallthru
        _
      %p1403 = scmp.le.s32.totalorder 2, %s14
      // Predicated region
      $region53: #{aces_forward.3} parent=5 // pred_check
        %p1404 = pneg %p1403
      $region54: #{aces_forward.3} parent=5 // pred_check_branch
        %1406 = sbr.rel (%p1404) target = $region56
      $region55: #{aces_forward.3} parent=5 // pred_region
        %s1407 = ssub.s32 %s14, 2
        // Predicated region
        $region57: #{aces_forward.3} parent=55 // pred_check
          %p1408 = pneg %p151
        $region58: #{aces_forward.3} parent=55 // pred_check_branch
          %1410 = sbr.rel (%p1408) target = $region60
        $region59: #{aces_forward.3} parent=55 // pred_region
          %s1411 = sand.u32 %s136, 1
          %s1412 = scalar_lea.sflag [#allocation4], %s1411
          %s1413 = sand.u32 %s136, 1
          %s1414 = smul.addr %s1413, 256
          %s1415 = scalar_lea.vmem [#allocation6], %s1414
          %1416 = dma.done %s1412, 4096
        $region60: #{aces_forward.3} parent=55 // pred_fallthru
          _
      $region56: #{aces_forward.3} parent=5 // pred_fallthru
        _
    $region6: #{aces_forward.3} parent=1 // loop_footer
      %s18 = sadd.s32 1, %s14
    $region7: #{aces_forward.3} parent=1 // loop_footer_branch
      %13 = sbr.rel target = $region3
    $region8: #{aces_forward.3} parent=1 // loop_exit
      _
    %1417 = vsyncpa [#allocation4], 1
    %s1418 = scalar_lea.sflag [#allocation4], 1
    %1419 = vsyncpa %s1418, 1
    %1420 = vsyncpa [#allocation5], 1
    %s1421 = scalar_lea.sflag [#allocation5], 1
    %1422 = vsyncpa %s1421, 1

// kernel: aces_forward.2
$region0: #{aces_forward.2}
  #allocation0 [shape = 'u32[]', space=smem, size = 0x4, offset = 0x4, fixed_abs, tag = 'smem constant byte address 0x4 - core index']
  #allocation1 [shape = 'u32[144,128]{1,0:T(1,128)}', space=vmem, size = 0x12000, scoped, tag = 'internal scratch']
  #allocation2 [shape = 'f32[1]{0:T(128)S(6)}', space=smem, size = 0x200, scoped, tag = 'scoped memory for aces_forward.2']
  #allocation5 [shape = 's32[]', space=sflag, size = 0x4, offset = 0, fixed_abs, tag = 'sflag constant byte address 0x0 - dummy sync flag']
  %s0 = inlined_call_operand.<no memory space> [shape: f32[1], index: 0, kind: input, shape index: {}]
  %s1 = inlined_call_operand.hbm [shape: f32[3,256,256], index: 1, kind: input, shape index: {}]
  %s2 = inlined_call_operand.vmem [shape: bf16[256,256], index: 2, kind: output, shape index: {}]
  %s3 = sld [smem:[#allocation0]]
  $region45: #{aces_forward.2} parent=0
    _
  %s5 = ssub.s32 1, %s3
  %s6 = scalar_select 0, %s5, %s3
  %7 = sst [smem:[#allocation2]] %s0
  $region1: #{aces_forward.2} parent=0
    #allocation3 [shape = 'u8[786432]{0}', space=vmem, size = 0xc0000, scoped, tag = 'input window, operand 1']
    #allocation4 [shape = 's32[2]{0}', space=sflag, size = 0x8, scoped, tag = 'scoped memory for aces_forward.2']
    %8 = vsyncpa [#allocation4], 0
    %s9 = scalar_lea.sflag [#allocation4], 1
    %10 = vsyncpa %s9, 0
    loop: start=0, step=1, limit=4
    $region2: #{aces_forward.2} parent=1 // loop_pre_header
      _
    $region3: #{aces_forward.2} parent=1 // loop_header
      %s12 = sphi 0, %s16
      %p13 = scmp.ge.s32.totalorder %s12, 4
      %s20 = sphi 0, %s20
      %s22 = sphi 0, %s20
      %s23 = sphi 0, %s22
      %s37 = sphi 0, %s23
      %s43 = sphi 0, %s45
      %s46 = sphi 0, %s43
      %s47 = sphi 0, %s46
      %s63 = sphi 0, %s47
      %s69 = sphi 0, %s71
      %s72 = sphi 0, %s69
      %s73 = sphi 0, %s72
      %s89 = sphi 0, %s73
    $region4: #{aces_forward.2} parent=1 // loop_header_branch
      %15 = sbr.rel (%p13) target = $region8
    $region5: #{aces_forward.2} parent=1 // loop_body
      %s17 = ssub.s32 %s12, 1
      %s18 = ssub.s32 %s12, 2
      %s19 = sadd.s32 %s12, 1
      %s21 = sadd.s32 %s20, 1
      %p24 = scmp.eq.s32.totalorder %s12, 1
      %p25 = scmp.ne.s32.totalorder %s20, %s22
      %p26 = scmp.eq.s32.totalorder %s12, 0
      %p27 = por %p25, %p26
      %p28 = scmp.ne.s32.totalorder %s20, %s22
      %p29 = scmp.eq.s32.totalorder %s17, 1
      %p30 = por %p28, %p29
      %p31 = scmp.ne.s32.totalorder %s22, %s23
      %p32 = scmp.eq.s32.totalorder %s17, 0
      %p33 = por %p31, %p32
      %p34 = scmp.ne.s32.totalorder %s22, %s23
      %p35 = scmp.eq.s32.totalorder %s18, 1
      %p36 = por %p34, %p35
      %p38 = scmp.ne.s32.totalorder %s23, %s37
      %p39 = scmp.eq.s32.totalorder %s18, 0
      %p40 = por %p38, %p39
      %s41 = ssub.s32 %s12, %s19
      %p42 = scmp.eq.s32.totalorder %s41, 0
      %s44 = sadd.s32 %s43, 1
      %s45 = scalar_select %p42, %s43, %s44
      %p48 = pneg %p42
      %p49 = scmp.eq.s32.totalorder %s12, 1
      %p50 = por %p48, %p49
      %p51 = scmp.ne.s32.totalorder %s43, %s46
      %p52 = scmp.eq.s32.totalorder %s12, 0
      %p53 = por %p51, %p52
      %p54 = scmp.ne.s32.totalorder %s43, %s46
      %p55 = scmp.eq.s32.totalorder %s17, 1
      %p56 = por %p54, %p55
      %p57 = scmp.ne.s32.totalorder %s46, %s47
      %p58 = scmp.eq.s32.totalorder %s17, 0
      %p59 = por %p57, %p58
      %p60 = scmp.ne.s32.totalorder %s46, %s47
      %p61 = scmp.eq.s32.totalorder %s18, 1
      %p62 = por %p60, %p61
      %p64 = scmp.ne.s32.totalorder %s47, %s63
      %p65 = scmp.eq.s32.totalorder %s18, 0
      %p66 = por %p64, %p65
      %s67 = ssub.s32 %s12, %s19
      %p68 = scmp.eq.s32.totalorder %s67, 0
      %s70 = sadd.s32 %s69, 1
      %s71 = scalar_select %p68, %s69, %s70
      %p74 = pneg %p68
      %p75 = scmp.eq.s32.totalorder %s12, 1
      %p76 = por %p74, %p75
      %p77 = scmp.ne.s32.totalorder %s69, %s72
      %p78 = scmp.eq.s32.totalorder %s12, 0
      %p79 = por %p77, %p78
      %p80 = scmp.ne.s32.totalorder %s69, %s72
      %p81 = scmp.eq.s32.totalorder %s17, 1
      %p82 = por %p80, %p81
      %p83 = scmp.ne.s32.totalorder %s72, %s73
      %p84 = scmp.eq.s32.totalorder %s17, 0
      %p85 = por %p83, %p84
      %p86 = scmp.ne.s32.totalorder %s72, %s73
      %p87 = scmp.eq.s32.totalorder %s18, 1
      %p88 = por %p86, %p87
      %p90 = scmp.ne.s32.totalorder %s73, %s89
      %p91 = scmp.eq.s32.totalorder %s18, 0
      %p92 = por %p90, %p91
      %p93 = scmp.le.s32.totalorder 1, %s12
      %p94 = scmp.lt.s32.totalorder %s12, 3
      %p95 = pnand %p93, %p94
      %p96 = pneg %p95
      // Predicated region
      $region9: #{aces_forward.2} parent=5 // pred_check
        _
      $region10: #{aces_forward.2} parent=5 // pred_check_branch
        %98 = sbr.rel (%p95) target = $region12
      $region11: #{aces_forward.2} parent=5 // pred_region
        %s99 = ssub.s32 %s12, 1
        // Predicated region
        $region13: #{aces_forward.2} parent=11 // pred_check
          %p100 = pneg %p33
        $region14: #{aces_forward.2} parent=11 // pred_check_branch
          %102 = sbr.rel (%p100) target = $region16
        $region15: #{aces_forward.2} parent=11 // pred_region
          _
        $region16: #{aces_forward.2} parent=11 // pred_fallthru
          _
      $region12: #{aces_forward.2} parent=5 // pred_fallthru
        _
      %p103 = scmp.lt.s32.totalorder %s12, 2
      // Predicated region
      $region17: #{aces_forward.2} parent=5 // pred_check
        %p104 = pneg %p103
      $region18: #{aces_forward.2} parent=5 // pred_check_branch
        %106 = sbr.rel (%p104) target = $region20
      $region19: #{aces_forward.2} parent=5 // pred_region
        // Predicated region
        $region21: #{aces_forward.2} parent=19 // pred_check
          %p107 = pneg %p53
        $region22: #{aces_forward.2} parent=19 // pred_check_branch
          %109 = sbr.rel (%p107) target = $region24
        $region23: #{aces_forward.2} parent=19 // pred_region
          #allocation6 [shape = 'u32[6]{0}', space=smem, size = 0x18, scoped, tag = 'DMA stride descriptor']
          %s110 = sand.u32 %s43, 1
          %s111 = scalar_lea.sflag [#allocation4], %s110
          %s112 = sand.u32 %s43, 1
          %s113 = smul.addr %s112, 768
          %s114 = scalar_lea.vmem [#allocation3], %s113
          %s115 = smul.u32 16, %s12
          %s117 = ssub.s32 12288, 12288
          %118 = vsyncadd %s111, %s117
          %s119 = smul.addr %s115, 2
          %s120 = smul.addr %s119, 128
          %s121 = scalar_lea.hbm %s1, %s120
          %s123 = sshll.u32 1, 14
          %s124 = sxor.u32 4294967295, %s123
          %s126 = sld [smem:[#allocation0]]
          %s127 = sadd.s32 2, %s126
          %s129 = sshll.u32 7, 26
          %s130 = sxor.u32 4294967295, %s129
          %s131 = sand.u32 0, %s130
          %s132 = sshll.u32 %s127, 26
          %s133 = sor.u32 %s131, %s132
          %s134 = sshll.u32 %s114, 4
          %s135 = int_to_ptr.vmem [resolvable:$true] %s134
          %141 = sst [smem:[#allocation6]] 8192
          %s142 = scalar_lea.smem [#allocation6], 1
          %143 = sst [smem:[%s142]] 4096
          %s144 = scalar_lea.smem [#allocation6], 2
          %145 = sst [smem:[%s144]] 16
          %s146 = scalar_lea.smem [#allocation6], 3
          %147 = sst [smem:[%s146]] 256
          %s148 = scalar_lea.smem [#allocation6], 4
          %149 = sst [smem:[%s148]] 256
          %s150 = scalar_lea.smem [#allocation6], 5
          %151 = sst [smem:[%s150]] 16
          %153 = dma.general %s121, 12288, %s135, %s111, 131072, [#allocation6], %s133, 0
        $region24: #{aces_forward.2} parent=19 // pred_fallthru
          _
      $region20: #{aces_forward.2} parent=5 // pred_fallthru
        _
      %p154 = scmp.le.s32.totalorder 1, %s12
      %p155 = scmp.lt.s32.totalorder %s12, 3
      %p156 = pnand %p154, %p155
      %p157 = pneg %p156
      // Predicated region
      $region25: #{aces_forward.2} parent=5 // pred_check
        _
      $region26: #{aces_forward.2} parent=5 // pred_check_branch
        %159 = sbr.rel (%p156) target = $region28
      $region27: #{aces_forward.2} parent=5 // pred_region
        %s160 = ssub.s32 %s12, 1
        %s161 = sand.u32 %s46, 1
        %s162 = scalar_lea.sflag [#allocation4], %s161
        %s163 = sand.u32 %s46, 1
        %s164 = smul.addr %s163, 768
        %s165 = scalar_lea.vmem [#allocation3], %s164
        // Predicated region
        $region29: #{aces_forward.2} parent=27 // pred_check
          %p166 = pneg %p59
        $region30: #{aces_forward.2} parent=27 // pred_check_branch
          %168 = sbr.rel (%p166) target = $region32
        $region31: #{aces_forward.2} parent=27 // pred_region
          %169 = dma.done %s162, 12288
        $region32: #{aces_forward.2} parent=27 // pred_fallthru
          _
        %p170 = pneg %p33
        %p171 = pneg %p30
        %s172 = sand.u32 %s46, 1
        %s173 = scalar_lea.sflag [#allocation4], %s172
        %s174 = sand.u32 %s46, 1
        %s175 = smul.addr %s174, 768
        %s176 = scalar_lea.vmem [#allocation3], %s175
        %p177 = pneg %p59
        %p178 = pneg %p56
        %p179 = pneg %p85
        %p180 = pneg %p82
        %s181 = smul.u32 16, %s17
        %p182 = scmp.lt.s32.totalorder %s181, 31
        %s183 = scalar_select %p182, %s181, 31
        %s184 = smul.addr %s183, 2
        %s185 = smul.addr %s184, 4
        %s186 = scalar_lea.vmem %s2, %s185
        %s187 = smul.u32 16, %s17
        %s188 = smul.u32 16, %s17
        %p189 = scmp.lt.s32.totalorder %s188, 31
        %s190 = scalar_select %p189, %s188, 31
        %s191 = smul.addr %s190, 2
        %s192 = smul.addr %s191, 4
        %s193 = scalar_lea.vmem %s2, %s192
        %s194 = smul.u32 16, %s17
        %s195 = sld [smem:[#allocation2]]
        %v196 = vld [vmem:[%s165] sm:$0xff]
        %v197 = vld [vmem:[%s165 + $0x8] sm:$0xff]
        %v198 = vld [vmem:[%s165 + $0x10] sm:$0xff]
        %v199 = vld [vmem:[%s165 + $0x18] sm:$0xff]
        %v200 = vld [vmem:[%s165 + $0x20] sm:$0xff]
        %v201 = vld [vmem:[%s165 + $0x28] sm:$0xff]
        %v202 = vld [vmem:[%s165 + $0x30] sm:$0xff]
        %v203 = vld [vmem:[%s165 + $0x38] sm:$0xff]
        %v204 = vld [vmem:[%s165 + $0x40] sm:$0xff]
        %v205 = vld [vmem:[%s165 + $0x48] sm:$0xff]
        %v206 = vld [vmem:[%s165 + $0x50] sm:$0xff]
        %v207 = vld [vmem:[%s165 + $0x58] sm:$0xff]
        %v208 = vld [vmem:[%s165 + $0x60] sm:$0xff]
        %v209 = vld [vmem:[%s165 + $0x68] sm:$0xff]
        %v210 = vld [vmem:[%s165 + $0x70] sm:$0xff]
        %v211 = vld [vmem:[%s165 + $0x78] sm:$0xff]
        %v212 = vld [vmem:[%s165 + $0x80] sm:$0xff]
        %v213 = vld [vmem:[%s165 + $0x88] sm:$0xff]
        %v214 = vld [vmem:[%s165 + $0x90] sm:$0xff]
        %v215 = vld [vmem:[%s165 + $0x98] sm:$0xff]
        %v216 = vld [vmem:[%s165 + $0xa0] sm:$0xff]
        %v217 = vld [vmem:[%s165 + $0xa8] sm:$0xff]
        %v218 = vld [vmem:[%s165 + $0xb0] sm:$0xff]
        %v219 = vld [vmem:[%s165 + $0xb8] sm:$0xff]
        %v220 = vld [vmem:[%s165 + $0xc0] sm:$0xff]
        %v221 = vld [vmem:[%s165 + $0xc8] sm:$0xff]
        %v222 = vld [vmem:[%s165 + $0xd0] sm:$0xff]
        %v223 = vld [vmem:[%s165 + $0xd8] sm:$0xff]
        %v224 = vld [vmem:[%s165 + $0xe0] sm:$0xff]
        %v225 = vld [vmem:[%s165 + $0xe8] sm:$0xff]
        %v226 = vld [vmem:[%s165 + $0xf0] sm:$0xff]
        %v227 = vld [vmem:[%s165 + $0xf8] sm:$0xff]
        %v228 = vld [vmem:[%s165 + $0x100] sm:$0xff]
        %v229 = vld [vmem:[%s165 + $0x108] sm:$0xff]
        %v230 = vld [vmem:[%s165 + $0x110] sm:$0xff]
        %v231 = vld [vmem:[%s165 + $0x118] sm:$0xff]
        %v232 = vld [vmem:[%s165 + $0x120] sm:$0xff]
        %v233 = vld [vmem:[%s165 + $0x128] sm:$0xff]
        %v234 = vld [vmem:[%s165 + $0x130] sm:$0xff]
        %v235 = vld [vmem:[%s165 + $0x138] sm:$0xff]
        %v236 = vld [vmem:[%s165 + $0x140] sm:$0xff]
        %v237 = vld [vmem:[%s165 + $0x148] sm:$0xff]
        %v238 = vld [vmem:[%s165 + $0x150] sm:$0xff]
        %v239 = vld [vmem:[%s165 + $0x158] sm:$0xff]
        %v240 = vld [vmem:[%s165 + $0x160] sm:$0xff]
        %v241 = vld [vmem:[%s165 + $0x168] sm:$0xff]
        %v242 = vld [vmem:[%s165 + $0x170] sm:$0xff]
        %v243 = vld [vmem:[%s165 + $0x178] sm:$0xff]
        %v244 = vld [vmem:[%s165 + $0x180] sm:$0xff]
        %v245 = vld [vmem:[%s165 + $0x188] sm:$0xff]
        %v246 = vld [vmem:[%s165 + $0x190] sm:$0xff]
        %v247 = vld [vmem:[%s165 + $0x198] sm:$0xff]
        %v248 = vld [vmem:[%s165 + $0x1a0] sm:$0xff]
        %v249 = vld [vmem:[%s165 + $0x1a8] sm:$0xff]
        %v250 = vld [vmem:[%s165 + $0x1b0] sm:$0xff]
        %v251 = vld [vmem:[%s165 + $0x1b8] sm:$0xff]
        %v252 = vld [vmem:[%s165 + $0x1c0] sm:$0xff]
        %v253 = vld [vmem:[%s165 + $0x1c8] sm:$0xff]
        %v254 = vld [vmem:[%s165 + $0x1d0] sm:$0xff]
        %v255 = vld [vmem:[%s165 + $0x1d8] sm:$0xff]
        %v256 = vld [vmem:[%s165 + $0x1e0] sm:$0xff]
        %v257 = vld [vmem:[%s165 + $0x1e8] sm:$0xff]
        %v258 = vld [vmem:[%s165 + $0x1f0] sm:$0xff]
        %v259 = vld [vmem:[%s165 + $0x1f8] sm:$0xff]
        %v260 = vld [vmem:[%s165 + $0x200] sm:$0xff]
        %v261 = vld [vmem:[%s165 + $0x208] sm:$0xff]
        %v262 = vld [vmem:[%s165 + $0x210] sm:$0xff]
        %v263 = vld [vmem:[%s165 + $0x218] sm:$0xff]
        %v264 = vld [vmem:[%s165 + $0x220] sm:$0xff]
        %v265 = vld [vmem:[%s165 + $0x228] sm:$0xff]
        %v266 = vld [vmem:[%s165 + $0x230] sm:$0xff]
        %v267 = vld [vmem:[%s165 + $0x238] sm:$0xff]
        %v268 = vld [vmem:[%s165 + $0x240] sm:$0xff]
        %v269 = vld [vmem:[%s165 + $0x248] sm:$0xff]
        %v270 = vld [vmem:[%s165 + $0x250] sm:$0xff]
        %v271 = vld [vmem:[%s165 + $0x258] sm:$0xff]
        %v272 = vld [vmem:[%s165 + $0x260] sm:$0xff]
        %v273 = vld [vmem:[%s165 + $0x268] sm:$0xff]
        %v274 = vld [vmem:[%s165 + $0x270] sm:$0xff]
        %v275 = vld [vmem:[%s165 + $0x278] sm:$0xff]
        %v276 = vld [vmem:[%s165 + $0x280] sm:$0xff]
        %v277 = vld [vmem:[%s165 + $0x288] sm:$0xff]
        %v278 = vld [vmem:[%s165 + $0x290] sm:$0xff]
        %v279 = vld [vmem:[%s165 + $0x298] sm:$0xff]
        %v280 = vld [vmem:[%s165 + $0x2a0] sm:$0xff]
        %v281 = vld [vmem:[%s165 + $0x2a8] sm:$0xff]
        %v282 = vld [vmem:[%s165 + $0x2b0] sm:$0xff]
        %v283 = vld [vmem:[%s165 + $0x2b8] sm:$0xff]
        %v284 = vld [vmem:[%s165 + $0x2c0] sm:$0xff]
        %v285 = vld [vmem:[%s165 + $0x2c8] sm:$0xff]
        %v286 = vld [vmem:[%s165 + $0x2d0] sm:$0xff]
        %v287 = vld [vmem:[%s165 + $0x2d8] sm:$0xff]
        %v288 = vld [vmem:[%s165 + $0x2e0] sm:$0xff]
        %v289 = vld [vmem:[%s165 + $0x2e8] sm:$0xff]
        %v290 = vld [vmem:[%s165 + $0x2f0] sm:$0xff]
        %v291 = vld [vmem:[%s165 + $0x2f8] sm:$0xff]
        %v292 = vstv %s195
        %v293 = vmul.f32 %v292, %v196
        %v294 = vmul.f32 %v292, %v197
        %v295 = vmul.f32 %v292, %v198
        %v296 = vmul.f32 %v292, %v199
        %v297 = vmul.f32 %v292, %v200
        %v298 = vmul.f32 %v292, %v201
        %v299 = vmul.f32 %v292, %v202
        %v300 = vmul.f32 %v292, %v203
        %v301 = vmul.f32 %v292, %v204
        %v302 = vmul.f32 %v292, %v205
        %v303 = vmul.f32 %v292, %v206
        %v304 = vmul.f32 %v292, %v207
        %v305 = vmul.f32 %v292, %v208
        %v306 = vmul.f32 %v292, %v209
        %v307 = vmul.f32 %v292, %v210
        %v308 = vmul.f32 %v292, %v211
        %v309 = vmul.f32 %v292, %v212
        %v310 = vmul.f32 %v292, %v213
        %v311 = vmul.f32 %v292, %v214
        %v312 = vmul.f32 %v292, %v215
        %v313 = vmul.f32 %v292, %v216
        %v314 = vmul.f32 %v292, %v217
        %v315 = vmul.f32 %v292, %v218
        %v316 = vmul.f32 %v292, %v219
        %v317 = vmul.f32 %v292, %v220
        %v318 = vmul.f32 %v292, %v221
        %v319 = vmul.f32 %v292, %v222
        %v320 = vmul.f32 %v292, %v223
        %v321 = vmul.f32 %v292, %v224
        %v322 = vmul.f32 %v292, %v225
        %v323 = vmul.f32 %v292, %v226
        %v324 = vmul.f32 %v292, %v227
        %v325 = vmul.f32 %v292, %v228
        %v326 = vmul.f32 %v292, %v229
        %v327 = vmul.f32 %v292, %v230
        %v328 = vmul.f32 %v292, %v231
        %v329 = vmul.f32 %v292, %v232
        %v330 = vmul.f32 %v292, %v233
        %v331 = vmul.f32 %v292, %v234
        %v332 = vmul.f32 %v292, %v235
        %v333 = vmul.f32 %v292, %v236
        %v334 = vmul.f32 %v292, %v237
        %v335 = vmul.f32 %v292, %v238
        %v336 = vmul.f32 %v292, %v239
        %v337 = vmul.f32 %v292, %v240
        %v338 = vmul.f32 %v292, %v241
        %v339 = vmul.f32 %v292, %v242
        %v340 = vmul.f32 %v292, %v243
        %v341 = vmul.f32 %v292, %v244
        %v342 = vmul.f32 %v292, %v245
        %v343 = vmul.f32 %v292, %v246
        %v344 = vmul.f32 %v292, %v247
        %v345 = vmul.f32 %v292, %v248
        %v346 = vmul.f32 %v292, %v249
        %v347 = vmul.f32 %v292, %v250
        %v348 = vmul.f32 %v292, %v251
        %v349 = vmul.f32 %v292, %v252
        %v350 = vmul.f32 %v292, %v253
        %v351 = vmul.f32 %v292, %v254
        %v352 = vmul.f32 %v292, %v255
        %v353 = vmul.f32 %v292, %v256
        %v354 = vmul.f32 %v292, %v257
        %v355 = vmul.f32 %v292, %v258
        %v356 = vmul.f32 %v292, %v259
        %v357 = vmul.f32 %v292, %v260
        %v358 = vmul.f32 %v292, %v261
        %v359 = vmul.f32 %v292, %v262
        %v360 = vmul.f32 %v292, %v263
        %v361 = vmul.f32 %v292, %v264
        %v362 = vmul.f32 %v292, %v265
        %v363 = vmul.f32 %v292, %v266
        %v364 = vmul.f32 %v292, %v267
        %v365 = vmul.f32 %v292, %v268
        %v366 = vmul.f32 %v292, %v269
        %v367 = vmul.f32 %v292, %v270
        %v368 = vmul.f32 %v292, %v271
        %v369 = vmul.f32 %v292, %v272
        %v370 = vmul.f32 %v292, %v273
        %v371 = vmul.f32 %v292, %v274
        %v372 = vmul.f32 %v292, %v275
        %v373 = vmul.f32 %v292, %v276
        %v374 = vmul.f32 %v292, %v277
        %v375 = vmul.f32 %v292, %v278
        %v376 = vmul.f32 %v292, %v279
        %v377 = vmul.f32 %v292, %v280
        %v378 = vmul.f32 %v292, %v281
        %v379 = vmul.f32 %v292, %v282
        %v380 = vmul.f32 %v292, %v283
        %v381 = vmul.f32 %v292, %v284
        %v382 = vmul.f32 %v292, %v285
        %v383 = vmul.f32 %v292, %v286
        %v384 = vmul.f32 %v292, %v287
        %v385 = vmul.f32 %v292, %v288
        %v386 = vmul.f32 %v292, %v289
        %v387 = vmul.f32 %v292, %v290
        %v388 = vmul.f32 %v292, %v291
        %v389 = vmul.f32 %v293, 2.51
        %v390 = vmul.f32 %v294, 2.51
        %v391 = vmul.f32 %v295, 2.51
        %v392 = vmul.f32 %v296, 2.51
        %v393 = vmul.f32 %v297, 2.51
        %v394 = vmul.f32 %v298, 2.51
        %v395 = vmul.f32 %v299, 2.51
        %v396 = vmul.f32 %v300, 2.51
        %v397 = vmul.f32 %v301, 2.51
        %v398 = vmul.f32 %v302, 2.51
        %v399 = vmul.f32 %v303, 2.51
        %v400 = vmul.f32 %v304, 2.51
        %v401 = vmul.f32 %v305, 2.51
        %v402 = vmul.f32 %v306, 2.51
        %v403 = vmul.f32 %v307, 2.51
        %v404 = vmul.f32 %v308, 2.51
        %v405 = vmul.f32 %v309, 2.51
        %v406 = vmul.f32 %v310, 2.51
        %v407 = vmul.f32 %v311, 2.51
        %v408 = vmul.f32 %v312, 2.51
        %v409 = vmul.f32 %v313, 2.51
        %v410 = vmul.f32 %v314, 2.51
        %v411 = vmul.f32 %v315, 2.51
        %v412 = vmul.f32 %v316, 2.51
        %v413 = vmul.f32 %v317, 2.51
        %v414 = vmul.f32 %v318, 2.51
        %v415 = vmul.f32 %v319, 2.51
        %v416 = vmul.f32 %v320, 2.51
        %v417 = vmul.f32 %v321, 2.51
        %v418 = vmul.f32 %v322, 2.51
        %v419 = vmul.f32 %v323, 2.51
        %v420 = vmul.f32 %v324, 2.51
        %v421 = vmul.f32 %v325, 2.51
        %v422 = vmul.f32 %v326, 2.51
        %v423 = vmul.f32 %v327, 2.51
        %v424 = vmul.f32 %v328, 2.51
        %v425 = vmul.f32 %v329, 2.51
        %v426 = vmul.f32 %v330, 2.51
        %v427 = vmul.f32 %v331, 2.51
        %v428 = vmul.f32 %v332, 2.51
        %v429 = vmul.f32 %v333, 2.51
        %v430 = vmul.f32 %v334, 2.51
        %v431 = vmul.f32 %v335, 2.51
        %v432 = vmul.f32 %v336, 2.51
        %v433 = vmul.f32 %v337, 2.51
        %v434 = vmul.f32 %v338, 2.51
        %v435 = vmul.f32 %v339, 2.51
        %v436 = vmul.f32 %v340, 2.51
        %v437 = vmul.f32 %v341, 2.51
        %v438 = vmul.f32 %v342, 2.51
        %v439 = vmul.f32 %v343, 2.51
        %v440 = vmul.f32 %v344, 2.51
        %v441 = vmul.f32 %v345, 2.51
        %v442 = vmul.f32 %v346, 2.51
        %v443 = vmul.f32 %v347, 2.51
        %v444 = vmul.f32 %v348, 2.51
        %v445 = vmul.f32 %v349, 2.51
        %v446 = vmul.f32 %v350, 2.51
        %v447 = vmul.f32 %v351, 2.51
        %v448 = vmul.f32 %v352, 2.51
        %v449 = vmul.f32 %v353, 2.51
        %v450 = vmul.f32 %v354, 2.51
        %v451 = vmul.f32 %v355, 2.51
        %v452 = vmul.f32 %v356, 2.51
        %v453 = vmul.f32 %v357, 2.51
        %v454 = vmul.f32 %v358, 2.51
        %v455 = vmul.f32 %v359, 2.51
        %v456 = vmul.f32 %v360, 2.51
        %v457 = vmul.f32 %v361, 2.51
        %v458 = vmul.f32 %v362, 2.51
        %v459 = vmul.f32 %v363, 2.51
        %v460 = vmul.f32 %v364, 2.51
        %v461 = vmul.f32 %v365, 2.51
        %v462 = vmul.f32 %v366, 2.51
        %v463 = vmul.f32 %v367, 2.51
        %v464 = vmul.f32 %v368, 2.51
        %v465 = vmul.f32 %v369, 2.51
        %v466 = vmul.f32 %v370, 2.51
        %v467 = vmul.f32 %v371, 2.51
        %v468 = vmul.f32 %v372, 2.51
        %v469 = vmul.f32 %v373, 2.51
        %v470 = vmul.f32 %v374, 2.51
        %v471 = vmul.f32 %v375, 2.51
        %v472 = vmul.f32 %v376, 2.51
        %v473 = vmul.f32 %v377, 2.51
        %v474 = vmul.f32 %v378, 2.51
        %v475 = vmul.f32 %v379, 2.51
        %v476 = vmul.f32 %v380, 2.51
        %v477 = vmul.f32 %v381, 2.51
        %v478 = vmul.f32 %v382, 2.51
        %v479 = vmul.f32 %v383, 2.51
        %v480 = vmul.f32 %v384, 2.51
        %v481 = vmul.f32 %v385, 2.51
        %v482 = vmul.f32 %v386, 2.51
        %v483 = vmul.f32 %v387, 2.51
        %v484 = vmul.f32 %v388, 2.51
        %v485 = vadd.f32 %v389, 0.03
        %v486 = vadd.f32 %v390, 0.03
        %v487 = vadd.f32 %v391, 0.03
        %v488 = vadd.f32 %v392, 0.03
        %v489 = vadd.f32 %v393, 0.03
        %v490 = vadd.f32 %v394, 0.03
        %v491 = vadd.f32 %v395, 0.03
        %v492 = vadd.f32 %v396, 0.03
        %v493 = vadd.f32 %v397, 0.03
        %v494 = vadd.f32 %v398, 0.03
        %v495 = vadd.f32 %v399, 0.03
        %v496 = vadd.f32 %v400, 0.03
        %v497 = vadd.f32 %v401, 0.03
        %v498 = vadd.f32 %v402, 0.03
        %v499 = vadd.f32 %v403, 0.03
        %v500 = vadd.f32 %v404, 0.03
        %v501 = vadd.f32 %v405, 0.03
        %v502 = vadd.f32 %v406, 0.03
        %v503 = vadd.f32 %v407, 0.03
        %v504 = vadd.f32 %v408, 0.03
        %v505 = vadd.f32 %v409, 0.03
        %v506 = vadd.f32 %v410, 0.03
        %v507 = vadd.f32 %v411, 0.03
        %v508 = vadd.f32 %v412, 0.03
        %v509 = vadd.f32 %v413, 0.03
        %v510 = vadd.f32 %v414, 0.03
        %v511 = vadd.f32 %v415, 0.03
        %v512 = vadd.f32 %v416, 0.03
        %v513 = vadd.f32 %v417, 0.03
        %v514 = vadd.f32 %v418, 0.03
        %v515 = vadd.f32 %v419, 0.03
        %v516 = vadd.f32 %v420, 0.03
        %v517 = vadd.f32 %v421, 0.03
        %v518 = vadd.f32 %v422, 0.03
        %v519 = vadd.f32 %v423, 0.03
        %v520 = vadd.f32 %v424, 0.03
        %v521 = vadd.f32 %v425, 0.03
        %v522 = vadd.f32 %v426, 0.03
        %v523 = vadd.f32 %v427, 0.03
        %v524 = vadd.f32 %v428, 0.03
        %v525 = vadd.f32 %v429, 0.03
        %v526 = vadd.f32 %v430, 0.03
        %v527 = vadd.f32 %v431, 0.03
        %v528 = vadd.f32 %v432, 0.03
        %v529 = vadd.f32 %v433, 0.03
        %v530 = vadd.f32 %v434, 0.03
        %v531 = vadd.f32 %v435, 0.03
        %v532 = vadd.f32 %v436, 0.03
        %v533 = vadd.f32 %v437, 0.03
        %v534 = vadd.f32 %v438, 0.03
        %v535 = vadd.f32 %v439, 0.03
        %v536 = vadd.f32 %v440, 0.03
        %v537 = vadd.f32 %v441, 0.03
        %v538 = vadd.f32 %v442, 0.03
        %v539 = vadd.f32 %v443, 0.03
        %v540 = vadd.f32 %v444, 0.03
        %v541 = vadd.f32 %v445, 0.03
        %v542 = vadd.f32 %v446, 0.03
        %v543 = vadd.f32 %v447, 0.03
        %v544 = vadd.f32 %v448, 0.03
        %v545 = vadd.f32 %v449, 0.03
        %v546 = vadd.f32 %v450, 0.03
        %v547 = vadd.f32 %v451, 0.03
        %v548 = vadd.f32 %v452, 0.03
        %v549 = vadd.f32 %v453, 0.03
        %v550 = vadd.f32 %v454, 0.03
        %v551 = vadd.f32 %v455, 0.03
        %v552 = vadd.f32 %v456, 0.03
        %v553 = vadd.f32 %v457, 0.03
        %v554 = vadd.f32 %v458, 0.03
        %v555 = vadd.f32 %v459, 0.03
        %v556 = vadd.f32 %v460, 0.03
        %v557 = vadd.f32 %v461, 0.03
        %v558 = vadd.f32 %v462, 0.03
        %v559 = vadd.f32 %v463, 0.03
        %v560 = vadd.f32 %v464, 0.03
        %v561 = vadd.f32 %v465, 0.03
        %v562 = vadd.f32 %v466, 0.03
        %v563 = vadd.f32 %v467, 0.03
        %v564 = vadd.f32 %v468, 0.03
        %v565 = vadd.f32 %v469, 0.03
        %v566 = vadd.f32 %v470, 0.03
        %v567 = vadd.f32 %v471, 0.03
        %v568 = vadd.f32 %v472, 0.03
        %v569 = vadd.f32 %v473, 0.03
        %v570 = vadd.f32 %v474, 0.03
        %v571 = vadd.f32 %v475, 0.03
        %v572 = vadd.f32 %v476, 0.03
        %v573 = vadd.f32 %v477, 0.03
        %v574 = vadd.f32 %v478, 0.03
        %v575 = vadd.f32 %v479, 0.03
        %v576 = vadd.f32 %v480, 0.03
        %v577 = vadd.f32 %v481, 0.03
        %v578 = vadd.f32 %v482, 0.03
        %v579 = vadd.f32 %v483, 0.03
        %v580 = vadd.f32 %v484, 0.03
        %v581 = vmul.f32 %v293, %v485
        %v582 = vmul.f32 %v294, %v486
        %v583 = vmul.f32 %v295, %v487
        %v584 = vmul.f32 %v296, %v488
        %v585 = vmul.f32 %v297, %v489
        %v586 = vmul.f32 %v298, %v490
        %v587 = vmul.f32 %v299, %v491
        %v588 = vmul.f32 %v300, %v492
        %v589 = vmul.f32 %v301, %v493
        %v590 = vmul.f32 %v302, %v494
        %v591 = vmul.f32 %v303, %v495
        %v592 = vmul.f32 %v304, %v496
        %v593 = vmul.f32 %v305, %v497
        %v594 = vmul.f32 %v306, %v498
        %v595 = vmul.f32 %v307, %v499
        %v596 = vmul.f32 %v308, %v500
        %v597 = vmul.f32 %v309, %v501
        %v598 = vmul.f32 %v310, %v502
        %v599 = vmul.f32 %v311, %v503
        %v600 = vmul.f32 %v312, %v504
        %v601 = vmul.f32 %v313, %v505
        %v602 = vmul.f32 %v314, %v506
        %v603 = vmul.f32 %v315, %v507
        %v604 = vmul.f32 %v316, %v508
        %v605 = vmul.f32 %v317, %v509
        %v606 = vmul.f32 %v318, %v510
        %v607 = vmul.f32 %v319, %v511
        %v608 = vmul.f32 %v320, %v512
        %v609 = vmul.f32 %v321, %v513
        %v610 = vmul.f32 %v322, %v514
        %v611 = vmul.f32 %v323, %v515
        %v612 = vmul.f32 %v324, %v516
        %v613 = vmul.f32 %v325, %v517
        %v614 = vmul.f32 %v326, %v518
        %v615 = vmul.f32 %v327, %v519
        %v616 = vmul.f32 %v328, %v520
        %v617 = vmul.f32 %v329, %v521
        %v618 = vmul.f32 %v330, %v522
        %v619 = vmul.f32 %v331, %v523
        %v620 = vmul.f32 %v332, %v524
        %v621 = vmul.f32 %v333, %v525
        %v622 = vmul.f32 %v334, %v526
        %v623 = vmul.f32 %v335, %v527
        %v624 = vmul.f32 %v336, %v528
        %v625 = vmul.f32 %v337, %v529
        %v626 = vmul.f32 %v338, %v530
        %v627 = vmul.f32 %v339, %v531
        %v628 = vmul.f32 %v340, %v532
        %v629 = vmul.f32 %v341, %v533
        %v630 = vmul.f32 %v342, %v534
        %v631 = vmul.f32 %v343, %v535
        %v632 = vmul.f32 %v344, %v536
        %v633 = vmul.f32 %v345, %v537
        %v634 = vmul.f32 %v346, %v538
        %v635 = vmul.f32 %v347, %v539
        %v636 = vmul.f32 %v348, %v540
        %v637 = vmul.f32 %v349, %v541
        %v638 = vmul.f32 %v350, %v542
        %v639 = vmul.f32 %v351, %v543
        %v640 = vmul.f32 %v352, %v544
        %v641 = vmul.f32 %v353, %v545
        %v642 = vmul.f32 %v354, %v546
        %v643 = vmul.f32 %v355, %v547
        %v644 = vmul.f32 %v356, %v548
        %v645 = vmul.f32 %v357, %v549
        %v646 = vmul.f32 %v358, %v550
        %v647 = vmul.f32 %v359, %v551
        %v648 = vmul.f32 %v360, %v552
        %v649 = vmul.f32 %v361, %v553
        %v650 = vmul.f32 %v362, %v554
        %v651 = vmul.f32 %v363, %v555
        %v652 = vmul.f32 %v364, %v556
        %v653 = vmul.f32 %v365, %v557
        %v654 = vmul.f32 %v366, %v558
        %v655 = vmul.f32 %v367, %v559
        %v656 = vmul.f32 %v368, %v560
        %v657 = vmul.f32 %v369, %v561
        %v658 = vmul.f32 %v370, %v562
        %v659 = vmul.f32 %v371, %v563
        %v660 = vmul.f32 %v372, %v564
        %v661 = vmul.f32 %v373, %v565
        %v662 = vmul.f32 %v374, %v566
        %v663 = vmul.f32 %v375, %v567
        %v664 = vmul.f32 %v376, %v568
        %v665 = vmul.f32 %v377, %v569
        %v666 = vmul.f32 %v378, %v570
        %v667 = vmul.f32 %v379, %v571
        %v668 = vmul.f32 %v380, %v572
        %v669 = vmul.f32 %v381, %v573
        %v670 = vmul.f32 %v382, %v574
        %v671 = vmul.f32 %v383, %v575
        %v672 = vmul.f32 %v384, %v576
        %v673 = vmul.f32 %v385, %v577
        %v674 = vmul.f32 %v386, %v578
        %v675 = vmul.f32 %v387, %v579
        %v676 = vmul.f32 %v388, %v580
        %v677 = vmul.f32 %v293, 2.43
        %v678 = vmul.f32 %v294, 2.43
        %v679 = vmul.f32 %v295, 2.43
        %v680 = vmul.f32 %v296, 2.43
        %v681 = vmul.f32 %v297, 2.43
        %v682 = vmul.f32 %v298, 2.43
        %v683 = vmul.f32 %v299, 2.43
        %v684 = vmul.f32 %v300, 2.43
        %v685 = vmul.f32 %v301, 2.43
        %v686 = vmul.f32 %v302, 2.43
        %v687 = vmul.f32 %v303, 2.43
        %v688 = vmul.f32 %v304, 2.43
        %v689 = vmul.f32 %v305, 2.43
        %v690 = vmul.f32 %v306, 2.43
        %v691 = vmul.f32 %v307, 2.43
        %v692 = vmul.f32 %v308, 2.43
        %v693 = vmul.f32 %v309, 2.43
        %v694 = vmul.f32 %v310, 2.43
        %v695 = vmul.f32 %v311, 2.43
        %v696 = vmul.f32 %v312, 2.43
        %v697 = vmul.f32 %v313, 2.43
        %v698 = vmul.f32 %v314, 2.43
        %v699 = vmul.f32 %v315, 2.43
        %v700 = vmul.f32 %v316, 2.43
        %v701 = vmul.f32 %v317, 2.43
        %v702 = vmul.f32 %v318, 2.43
        %v703 = vmul.f32 %v319, 2.43
        %v704 = vmul.f32 %v320, 2.43
        %v705 = vmul.f32 %v321, 2.43
        %v706 = vmul.f32 %v322, 2.43
        %v707 = vmul.f32 %v323, 2.43
        %v708 = vmul.f32 %v324, 2.43
        %v709 = vmul.f32 %v325, 2.43
        %v710 = vmul.f32 %v326, 2.43
        %v711 = vmul.f32 %v327, 2.43
        %v712 = vmul.f32 %v328, 2.43
        %v713 = vmul.f32 %v329, 2.43
        %v714 = vmul.f32 %v330, 2.43
        %v715 = vmul.f32 %v331, 2.43
        %v716 = vmul.f32 %v332, 2.43
        %v717 = vmul.f32 %v333, 2.43
        %v718 = vmul.f32 %v334, 2.43
        %v719 = vmul.f32 %v335, 2.43
        %v720 = vmul.f32 %v336, 2.43
        %v721 = vmul.f32 %v337, 2.43
        %v722 = vmul.f32 %v338, 2.43
        %v723 = vmul.f32 %v339, 2.43
        %v724 = vmul.f32 %v340, 2.43
        %v725 = vmul.f32 %v341, 2.43
        %v726 = vmul.f32 %v342, 2.43
        %v727 = vmul.f32 %v343, 2.43
        %v728 = vmul.f32 %v344, 2.43
        %v729 = vmul.f32 %v345, 2.43
        %v730 = vmul.f32 %v346, 2.43
        %v731 = vmul.f32 %v347, 2.43
        %v732 = vmul.f32 %v348, 2.43
        %v733 = vmul.f32 %v349, 2.43
        %v734 = vmul.f32 %v350, 2.43
        %v735 = vmul.f32 %v351, 2.43
        %v736 = vmul.f32 %v352, 2.43
        %v737 = vmul.f32 %v353, 2.43
        %v738 = vmul.f32 %v354, 2.43
        %v739 = vmul.f32 %v355, 2.43
        %v740 = vmul.f32 %v356, 2.43
        %v741 = vmul.f32 %v357, 2.43
        %v742 = vmul.f32 %v358, 2.43
        %v743 = vmul.f32 %v359, 2.43
        %v744 = vmul.f32 %v360, 2.43
        %v745 = vmul.f32 %v361, 2.43
        %v746 = vmul.f32 %v362, 2.43
        %v747 = vmul.f32 %v363, 2.43
        %v748 = vmul.f32 %v364, 2.43
        %v749 = vmul.f32 %v365, 2.43
        %v750 = vmul.f32 %v366, 2.43
        %v751 = vmul.f32 %v367, 2.43
        %v752 = vmul.f32 %v368, 2.43
        %v753 = vmul.f32 %v369, 2.43
        %v754 = vmul.f32 %v370, 2.43
        %v755 = vmul.f32 %v371, 2.43
        %v756 = vmul.f32 %v372, 2.43
        %v757 = vmul.f32 %v373, 2.43
        %v758 = vmul.f32 %v374, 2.43
        %v759 = vmul.f32 %v375, 2.43
        %v760 = vmul.f32 %v376, 2.43
        %v761 = vmul.f32 %v377, 2.43
        %v762 = vmul.f32 %v378, 2.43
        %v763 = vmul.f32 %v379, 2.43
        %v764 = vmul.f32 %v380, 2.43
        %v765 = vmul.f32 %v381, 2.43
        %v766 = vmul.f32 %v382, 2.43
        %v767 = vmul.f32 %v383, 2.43
        %v768 = vmul.f32 %v384, 2.43
        %v769 = vmul.f32 %v385, 2.43
        %v770 = vmul.f32 %v386, 2.43
        %v771 = vmul.f32 %v387, 2.43
        %v772 = vmul.f32 %v388, 2.43
        %v773 = vadd.f32 %v677, 0.59
        %v774 = vadd.f32 %v678, 0.59
        %v775 = vadd.f32 %v679, 0.59
        %v776 = vadd.f32 %v680, 0.59
        %v777 = vadd.f32 %v681, 0.59
        %v778 = vadd.f32 %v682, 0.59
        %v779 = vadd.f32 %v683, 0.59
        %v780 = vadd.f32 %v684, 0.59
        %v781 = vadd.f32 %v685, 0.59
        %v782 = vadd.f32 %v686, 0.59
        %v783 = vadd.f32 %v687, 0.59
        %v784 = vadd.f32 %v688, 0.59
        %v785 = vadd.f32 %v689, 0.59
        %v786 = vadd.f32 %v690, 0.59
        %v787 = vadd.f32 %v691, 0.59
        %v788 = vadd.f32 %v692, 0.59
        %v789 = vadd.f32 %v693, 0.59
        %v790 = vadd.f32 %v694, 0.59
        %v791 = vadd.f32 %v695, 0.59
        %v792 = vadd.f32 %v696, 0.59
        %v793 = vadd.f32 %v697, 0.59
        %v794 = vadd.f32 %v698, 0.59
        %v795 = vadd.f32 %v699, 0.59
        %v796 = vadd.f32 %v700, 0.59
        %v797 = vadd.f32 %v701, 0.59
        %v798 = vadd.f32 %v702, 0.59
        %v799 = vadd.f32 %v703, 0.59
        %v800 = vadd.f32 %v704, 0.59
        %v801 = vadd.f32 %v705, 0.59
        %v802 = vadd.f32 %v706, 0.59
        %v803 = vadd.f32 %v707, 0.59
        %v804 = vadd.f32 %v708, 0.59
        %v805 = vadd.f32 %v709, 0.59
        %v806 = vadd.f32 %v710, 0.59
        %v807 = vadd.f32 %v711, 0.59
        %v808 = vadd.f32 %v712, 0.59
        %v809 = vadd.f32 %v713, 0.59
        %v810 = vadd.f32 %v714, 0.59
        %v811 = vadd.f32 %v715, 0.59
        %v812 = vadd.f32 %v716, 0.59
        %v813 = vadd.f32 %v717, 0.59
        %v814 = vadd.f32 %v718, 0.59
        %v815 = vadd.f32 %v719, 0.59
        %v816 = vadd.f32 %v720, 0.59
        %v817 = vadd.f32 %v721, 0.59
        %v818 = vadd.f32 %v722, 0.59
        %v819 = vadd.f32 %v723, 0.59
        %v820 = vadd.f32 %v724, 0.59
        %v821 = vadd.f32 %v725, 0.59
        %v822 = vadd.f32 %v726, 0.59
        %v823 = vadd.f32 %v727, 0.59
        %v824 = vadd.f32 %v728, 0.59
        %v825 = vadd.f32 %v729, 0.59
        %v826 = vadd.f32 %v730, 0.59
        %v827 = vadd.f32 %v731, 0.59
        %v828 = vadd.f32 %v732, 0.59
        %v829 = vadd.f32 %v733, 0.59
        %v830 = vadd.f32 %v734, 0.59
        %v831 = vadd.f32 %v735, 0.59
        %v832 = vadd.f32 %v736, 0.59
        %v833 = vadd.f32 %v737, 0.59
        %v834 = vadd.f32 %v738, 0.59
        %v835 = vadd.f32 %v739, 0.59
        %v836 = vadd.f32 %v740, 0.59
        %v837 = vadd.f32 %v741, 0.59
        %v838 = vadd.f32 %v742, 0.59
        %v839 = vadd.f32 %v743, 0.59
        %v840 = vadd.f32 %v744, 0.59
        %v841 = vadd.f32 %v745, 0.59
        %v842 = vadd.f32 %v746, 0.59
        %v843 = vadd.f32 %v747, 0.59
        %v844 = vadd.f32 %v748, 0.59
        %v845 = vadd.f32 %v749, 0.59
        %v846 = vadd.f32 %v750, 0.59
        %v847 = vadd.f32 %v751, 0.59
        %v848 = vadd.f32 %v752, 0.59
        %v849 = vadd.f32 %v753, 0.59
        %v850 = vadd.f32 %v754, 0.59
        %v851 = vadd.f32 %v755, 0.59
        %v852 = vadd.f32 %v756, 0.59
        %v853 = vadd.f32 %v757, 0.59
        %v854 = vadd.f32 %v758, 0.59
        %v855 = vadd.f32 %v759, 0.59
        %v856 = vadd.f32 %v760, 0.59
        %v857 = vadd.f32 %v761, 0.59
        %v858 = vadd.f32 %v762, 0.59
        %v859 = vadd.f32 %v763, 0.59
        %v860 = vadd.f32 %v764, 0.59
        %v861 = vadd.f32 %v765, 0.59
        %v862 = vadd.f32 %v766, 0.59
        %v863 = vadd.f32 %v767, 0.59
        %v864 = vadd.f32 %v768, 0.59
        %v865 = vadd.f32 %v769, 0.59
        %v866 = vadd.f32 %v770, 0.59
        %v867 = vadd.f32 %v771, 0.59
        %v868 = vadd.f32 %v772, 0.59
        %v869 = vmul.f32 %v293, %v773
        %v870 = vmul.f32 %v294, %v774
        %v871 = vmul.f32 %v295, %v775
        %v872 = vmul.f32 %v296, %v776
        %v873 = vmul.f32 %v297, %v777
        %v874 = vmul.f32 %v298, %v778
        %v875 = vmul.f32 %v299, %v779
        %v876 = vmul.f32 %v300, %v780
        %v877 = vmul.f32 %v301, %v781
        %v878 = vmul.f32 %v302, %v782
        %v879 = vmul.f32 %v303, %v783
        %v880 = vmul.f32 %v304, %v784
        %v881 = vmul.f32 %v305, %v785
        %v882 = vmul.f32 %v306, %v786
        %v883 = vmul.f32 %v307, %v787
        %v884 = vmul.f32 %v308, %v788
        %v885 = vmul.f32 %v309, %v789
        %v886 = vmul.f32 %v310, %v790
        %v887 = vmul.f32 %v311, %v791
        %v888 = vmul.f32 %v312, %v792
        %v889 = vmul.f32 %v313, %v793
        %v890 = vmul.f32 %v314, %v794
        %v891 = vmul.f32 %v315, %v795
        %v892 = vmul.f32 %v316, %v796
        %v893 = vmul.f32 %v317, %v797
        %v894 = vmul.f32 %v318, %v798
        %v895 = vmul.f32 %v319, %v799
        %v896 = vmul.f32 %v320, %v800
        %v897 = vmul.f32 %v321, %v801
        %v898 = vmul.f32 %v322, %v802
        %v899 = vmul.f32 %v323, %v803
        %v900 = vmul.f32 %v324, %v804
        %v901 = vmul.f32 %v325, %v805
        %v902 = vmul.f32 %v326, %v806
        %v903 = vmul.f32 %v327, %v807
        %v904 = vmul.f32 %v328, %v808
        %v905 = vmul.f32 %v329, %v809
        %v906 = vmul.f32 %v330, %v810
        %v907 = vmul.f32 %v331, %v811
        %v908 = vmul.f32 %v332, %v812
        %v909 = vmul.f32 %v333, %v813
        %v910 = vmul.f32 %v334, %v814
        %v911 = vmul.f32 %v335, %v815
        %v912 = vmul.f32 %v336, %v816
        %v913 = vmul.f32 %v337, %v817
        %v914 = vmul.f32 %v338, %v818
        %v915 = vmul.f32 %v339, %v819
        %v916 = vmul.f32 %v340, %v820
        %v917 = vmul.f32 %v341, %v821
        %v918 = vmul.f32 %v342, %v822
        %v919 = vmul.f32 %v343, %v823
        %v920 = vmul.f32 %v344, %v824
        %v921 = vmul.f32 %v345, %v825
        %v922 = vmul.f32 %v346, %v826
        %v923 = vmul.f32 %v347, %v827
        %v924 = vmul.f32 %v348, %v828
        %v925 = vmul.f32 %v349, %v829
        %v926 = vmul.f32 %v350, %v830
        %v927 = vmul.f32 %v351, %v831
        %v928 = vmul.f32 %v352, %v832
        %v929 = vmul.f32 %v353, %v833
        %v930 = vmul.f32 %v354, %v834
        %v931 = vmul.f32 %v355, %v835
        %v932 = vmul.f32 %v356, %v836
        %v933 = vmul.f32 %v357, %v837
        %v934 = vmul.f32 %v358, %v838
        %v935 = vmul.f32 %v359, %v839
        %v936 = vmul.f32 %v360, %v840
        %v937 = vmul.f32 %v361, %v841
        %v938 = vmul.f32 %v362, %v842
        %v939 = vmul.f32 %v363, %v843
        %v940 = vmul.f32 %v364, %v844
        %v941 = vmul.f32 %v365, %v845
        %v942 = vmul.f32 %v366, %v846
        %v943 = vmul.f32 %v367, %v847
        %v944 = vmul.f32 %v368, %v848
        %v945 = vmul.f32 %v369, %v849
        %v946 = vmul.f32 %v370, %v850
        %v947 = vmul.f32 %v371, %v851
        %v948 = vmul.f32 %v372, %v852
        %v949 = vmul.f32 %v373, %v853
        %v950 = vmul.f32 %v374, %v854
        %v951 = vmul.f32 %v375, %v855
        %v952 = vmul.f32 %v376, %v856
        %v953 = vmul.f32 %v377, %v857
        %v954 = vmul.f32 %v378, %v858
        %v955 = vmul.f32 %v379, %v859
        %v956 = vmul.f32 %v380, %v860
        %v957 = vmul.f32 %v381, %v861
        %v958 = vmul.f32 %v382, %v862
        %v959 = vmul.f32 %v383, %v863
        %v960 = vmul.f32 %v384, %v864
        %v961 = vmul.f32 %v385, %v865
        %v962 = vmul.f32 %v386, %v866
        %v963 = vmul.f32 %v387, %v867
        %v964 = vmul.f32 %v388, %v868
        %v965 = vadd.f32 %v869, 0.14
        %v966 = vadd.f32 %v870, 0.14
        %v967 = vadd.f32 %v871, 0.14
        %v968 = vadd.f32 %v872, 0.14
        %v969 = vadd.f32 %v873, 0.14
        %v970 = vadd.f32 %v874, 0.14
        %v971 = vadd.f32 %v875, 0.14
        %v972 = vadd.f32 %v876, 0.14
        %v973 = vadd.f32 %v877, 0.14
        %v974 = vadd.f32 %v878, 0.14
        %v975 = vadd.f32 %v879, 0.14
        %v976 = vadd.f32 %v880, 0.14
        %v977 = vadd.f32 %v881, 0.14
        %v978 = vadd.f32 %v882, 0.14
        %v979 = vadd.f32 %v883, 0.14
        %v980 = vadd.f32 %v884, 0.14
        %v981 = vadd.f32 %v885, 0.14
        %v982 = vadd.f32 %v886, 0.14
        %v983 = vadd.f32 %v887, 0.14
        %v984 = vadd.f32 %v888, 0.14
        %v985 = vadd.f32 %v889, 0.14
        %v986 = vadd.f32 %v890, 0.14
        %v987 = vadd.f32 %v891, 0.14
        %v988 = vadd.f32 %v892, 0.14
        %v989 = vadd.f32 %v893, 0.14
        %v990 = vadd.f32 %v894, 0.14
        %v991 = vadd.f32 %v895, 0.14
        %v992 = vadd.f32 %v896, 0.14
        %v993 = vadd.f32 %v897, 0.14
        %v994 = vadd.f32 %v898, 0.14
        %v995 = vadd.f32 %v899, 0.14
        %v996 = vadd.f32 %v900, 0.14
        %v997 = vadd.f32 %v901, 0.14
        %v998 = vadd.f32 %v902, 0.14
        %v999 = vadd.f32 %v903, 0.14
        %v1000 = vadd.f32 %v904, 0.14
        %v1001 = vadd.f32 %v905, 0.14
        %v1002 = vadd.f32 %v906, 0.14
        %v1003 = vadd.f32 %v907, 0.14
        %v1004 = vadd.f32 %v908, 0.14
        %v1005 = vadd.f32 %v909, 0.14
        %v1006 = vadd.f32 %v910, 0.14
        %v1007 = vadd.f32 %v911, 0.14
        %v1008 = vadd.f32 %v912, 0.14
        %v1009 = vadd.f32 %v913, 0.14
        %v1010 = vadd.f32 %v914, 0.14
        %v1011 = vadd.f32 %v915, 0.14
        %v1012 = vadd.f32 %v916, 0.14
        %v1013 = vadd.f32 %v917, 0.14
        %v1014 = vadd.f32 %v918, 0.14
        %v1015 = vadd.f32 %v919, 0.14
        %v1016 = vadd.f32 %v920, 0.14
        %v1017 = vadd.f32 %v921, 0.14
        %v1018 = vadd.f32 %v922, 0.14
        %v1019 = vadd.f32 %v923, 0.14
        %v1020 = vadd.f32 %v924, 0.14
        %v1021 = vadd.f32 %v925, 0.14
        %v1022 = vadd.f32 %v926, 0.14
        %v1023 = vadd.f32 %v927, 0.14
        %v1024 = vadd.f32 %v928, 0.14
        %v1025 = vadd.f32 %v929, 0.14
        %v1026 = vadd.f32 %v930, 0.14
        %v1027 = vadd.f32 %v931, 0.14
        %v1028 = vadd.f32 %v932, 0.14
        %v1029 = vadd.f32 %v933, 0.14
        %v1030 = vadd.f32 %v934, 0.14
        %v1031 = vadd.f32 %v935, 0.14
        %v1032 = vadd.f32 %v936, 0.14
        %v1033 = vadd.f32 %v937, 0.14
        %v1034 = vadd.f32 %v938, 0.14
        %v1035 = vadd.f32 %v939, 0.14
        %v1036 = vadd.f32 %v940, 0.14
        %v1037 = vadd.f32 %v941, 0.14
        %v1038 = vadd.f32 %v942, 0.14
        %v1039 = vadd.f32 %v943, 0.14
        %v1040 = vadd.f32 %v944, 0.14
        %v1041 = vadd.f32 %v945, 0.14
        %v1042 = vadd.f32 %v946, 0.14
        %v1043 = vadd.f32 %v947, 0.14
        %v1044 = vadd.f32 %v948, 0.14
        %v1045 = vadd.f32 %v949, 0.14
        %v1046 = vadd.f32 %v950, 0.14
        %v1047 = vadd.f32 %v951, 0.14
        %v1048 = vadd.f32 %v952, 0.14
        %v1049 = vadd.f32 %v953, 0.14
        %v1050 = vadd.f32 %v954, 0.14
        %v1051 = vadd.f32 %v955, 0.14
        %v1052 = vadd.f32 %v956, 0.14
        %v1053 = vadd.f32 %v957, 0.14
        %v1054 = vadd.f32 %v958, 0.14
        %v1055 = vadd.f32 %v959, 0.14
        %v1056 = vadd.f32 %v960, 0.14
        %v1057 = vadd.f32 %v961, 0.14
        %v1058 = vadd.f32 %v962, 0.14
        %v1059 = vadd.f32 %v963, 0.14
        %v1060 = vadd.f32 %v964, 0.14
        %v1061 = vrcp.pop %v965
        %v1062 = vmul.f32 %v581, %v1061
        %v1063 = vrcp.pop %v966
        %v1064 = vmul.f32 %v582, %v1063
        %v1065 = vrcp.pop %v967
        %v1066 = vmul.f32 %v583, %v1065
        %v1067 = vrcp.pop %v968
        %v1068 = vmul.f32 %v584, %v1067
        %v1069 = vrcp.pop %v969
        %v1070 = vmul.f32 %v585, %v1069
        %v1071 = vrcp.pop %v970
        %v1072 = vmul.f32 %v586, %v1071
        %v1073 = vrcp.pop %v971
        %v1074 = vmul.f32 %v587, %v1073
        %v1075 = vrcp.pop %v972
        %v1076 = vmul.f32 %v588, %v1075
        %v1077 = vrcp.pop %v973
        %v1078 = vmul.f32 %v589, %v1077
        %v1079 = vrcp.pop %v974
        %v1080 = vmul.f32 %v590, %v1079
        %v1081 = vrcp.pop %v975
        %v1082 = vmul.f32 %v591, %v1081
        %v1083 = vrcp.pop %v976
        %v1084 = vmul.f32 %v592, %v1083
        %v1085 = vrcp.pop %v977
        %v1086 = vmul.f32 %v593, %v1085
        %v1087 = vrcp.pop %v978
        %v1088 = vmul.f32 %v594, %v1087
        %v1089 = vrcp.pop %v979
        %v1090 = vmul.f32 %v595, %v1089
        %v1091 = vrcp.pop %v980
        %v1092 = vmul.f32 %v596, %v1091
        %v1093 = vrcp.pop %v981
        %v1094 = vmul.f32 %v597, %v1093
        %v1095 = vrcp.pop %v982
        %v1096 = vmul.f32 %v598, %v1095
        %v1097 = vrcp.pop %v983
        %v1098 = vmul.f32 %v599, %v1097
        %v1099 = vrcp.pop %v984
        %v1100 = vmul.f32 %v600, %v1099
        %v1101 = vrcp.pop %v985
        %v1102 = vmul.f32 %v601, %v1101
        %v1103 = vrcp.pop %v986
        %v1104 = vmul.f32 %v602, %v1103
        %v1105 = vrcp.pop %v987
        %v1106 = vmul.f32 %v603, %v1105
        %v1107 = vrcp.pop %v988
        %v1108 = vmul.f32 %v604, %v1107
        %v1109 = vrcp.pop %v989
        %v1110 = vmul.f32 %v605, %v1109
        %v1111 = vrcp.pop %v990
        %v1112 = vmul.f32 %v606, %v1111
        %v1113 = vrcp.pop %v991
        %v1114 = vmul.f32 %v607, %v1113
        %v1115 = vrcp.pop %v992
        %v1116 = vmul.f32 %v608, %v1115
        %v1117 = vrcp.pop %v993
        %v1118 = vmul.f32 %v609, %v1117
        %v1119 = vrcp.pop %v994
        %v1120 = vmul.f32 %v610, %v1119
        %v1121 = vrcp.pop %v995
        %v1122 = vmul.f32 %v611, %v1121
        %v1123 = vrcp.pop %v996
        %v1124 = vmul.f32 %v612, %v1123
        %v1125 = vrcp.pop %v997
        %v1126 = vmul.f32 %v613, %v1125
        %v1127 = vrcp.pop %v998
        %v1128 = vmul.f32 %v614, %v1127
        %v1129 = vrcp.pop %v999
        %v1130 = vmul.f32 %v615, %v1129
        %v1131 = vrcp.pop %v1000
        %v1132 = vmul.f32 %v616, %v1131
        %v1133 = vrcp.pop %v1001
        %v1134 = vmul.f32 %v617, %v1133
        %v1135 = vrcp.pop %v1002
        %v1136 = vmul.f32 %v618, %v1135
        %v1137 = vrcp.pop %v1003
        %v1138 = vmul.f32 %v619, %v1137
        %v1139 = vrcp.pop %v1004
        %v1140 = vmul.f32 %v620, %v1139
        %v1141 = vrcp.pop %v1005
        %v1142 = vmul.f32 %v621, %v1141
        %v1143 = vrcp.pop %v1006
        %v1144 = vmul.f32 %v622, %v1143
        %v1145 = vrcp.pop %v1007
        %v1146 = vmul.f32 %v623, %v1145
        %v1147 = vrcp.pop %v1008
        %v1148 = vmul.f32 %v624, %v1147
        %v1149 = vrcp.pop %v1009
        %v1150 = vmul.f32 %v625, %v1149
        %v1151 = vrcp.pop %v1010
        %v1152 = vmul.f32 %v626, %v1151
        %v1153 = vrcp.pop %v1011
        %v1154 = vmul.f32 %v627, %v1153
        %v1155 = vrcp.pop %v1012
        %v1156 = vmul.f32 %v628, %v1155
        %v1157 = vrcp.pop %v1013
        %v1158 = vmul.f32 %v629, %v1157
        %v1159 = vrcp.pop %v1014
        %v1160 = vmul.f32 %v630, %v1159
        %v1161 = vrcp.pop %v1015
        %v1162 = vmul.f32 %v631, %v1161
        %v1163 = vrcp.pop %v1016
        %v1164 = vmul.f32 %v632, %v1163
        %v1165 = vrcp.pop %v1017
        %v1166 = vmul.f32 %v633, %v1165
        %v1167 = vrcp.pop %v1018
        %v1168 = vmul.f32 %v634, %v1167
        %v1169 = vrcp.pop %v1019
        %v1170 = vmul.f32 %v635, %v1169
        %v1171 = vrcp.pop %v1020
        %v1172 = vmul.f32 %v636, %v1171
        %v1173 = vrcp.pop %v1021
        %v1174 = vmul.f32 %v637, %v1173
        %v1175 = vrcp.pop %v1022
        %v1176 = vmul.f32 %v638, %v1175
        %v1177 = vrcp.pop %v1023
        %v1178 = vmul.f32 %v639, %v1177
        %v1179 = vrcp.pop %v1024
        %v1180 = vmul.f32 %v640, %v1179
        %v1181 = vrcp.pop %v1025
        %v1182 = vmul.f32 %v641, %v1181
        %v1183 = vrcp.pop %v1026
        %v1184 = vmul.f32 %v642, %v1183
        %v1185 = vrcp.pop %v1027
        %v1186 = vmul.f32 %v643, %v1185
        %v1187 = vrcp.pop %v1028
        %v1188 = vmul.f32 %v644, %v1187
        %v1189 = vrcp.pop %v1029
        %v1190 = vmul.f32 %v645, %v1189
        %v1191 = vrcp.pop %v1030
        %v1192 = vmul.f32 %v646, %v1191
        %v1193 = vrcp.pop %v1031
        %v1194 = vmul.f32 %v647, %v1193
        %v1195 = vrcp.pop %v1032
        %v1196 = vmul.f32 %v648, %v1195
        %v1197 = vrcp.pop %v1033
        %v1198 = vmul.f32 %v649, %v1197
        %v1199 = vrcp.pop %v1034
        %v1200 = vmul.f32 %v650, %v1199
        %v1201 = vrcp.pop %v1035
        %v1202 = vmul.f32 %v651, %v1201
        %v1203 = vrcp.pop %v1036
        %v1204 = vmul.f32 %v652, %v1203
        %v1205 = vrcp.pop %v1037
        %v1206 = vmul.f32 %v653, %v1205
        %v1207 = vrcp.pop %v1038
        %v1208 = vmul.f32 %v654, %v1207
        %v1209 = vrcp.pop %v1039
        %v1210 = vmul.f32 %v655, %v1209
        %v1211 = vrcp.pop %v1040
        %v1212 = vmul.f32 %v656, %v1211
        %v1213 = vrcp.pop %v1041
        %v1214 = vmul.f32 %v657, %v1213
        %v1215 = vrcp.pop %v1042
        %v1216 = vmul.f32 %v658, %v1215
        %v1217 = vrcp.pop %v1043
        %v1218 = vmul.f32 %v659, %v1217
        %v1219 = vrcp.pop %v1044
        %v1220 = vmul.f32 %v660, %v1219
        %v1221 = vrcp.pop %v1045
        %v1222 = vmul.f32 %v661, %v1221
        %v1223 = vrcp.pop %v1046
        %v1224 = vmul.f32 %v662, %v1223
        %v1225 = vrcp.pop %v1047
        %v1226 = vmul.f32 %v663, %v1225
        %v1227 = vrcp.pop %v1048
        %v1228 = vmul.f32 %v664, %v1227
        %v1229 = vrcp.pop %v1049
        %v1230 = vmul.f32 %v665, %v1229
        %v1231 = vrcp.pop %v1050
        %v1232 = vmul.f32 %v666, %v1231
        %v1233 = vrcp.pop %v1051
        %v1234 = vmul.f32 %v667, %v1233
        %v1235 = vrcp.pop %v1052
        %v1236 = vmul.f32 %v668, %v1235
        %v1237 = vrcp.pop %v1053
        %v1238 = vmul.f32 %v669, %v1237
        %v1239 = vrcp.pop %v1054
        %v1240 = vmul.f32 %v670, %v1239
        %v1241 = vrcp.pop %v1055
        %v1242 = vmul.f32 %v671, %v1241
        %v1243 = vrcp.pop %v1056
        %v1244 = vmul.f32 %v672, %v1243
        %v1245 = vrcp.pop %v1057
        %v1246 = vmul.f32 %v673, %v1245
        %v1247 = vrcp.pop %v1058
        %v1248 = vmul.f32 %v674, %v1247
        %v1249 = vrcp.pop %v1059
        %v1250 = vmul.f32 %v675, %v1249
        %v1251 = vrcp.pop %v1060
        %v1252 = vmul.f32 %v676, %v1251
        %v1253 = vmax.f32 %v1062, 0.0
        %v1254 = vmax.f32 %v1064, 0.0
        %v1255 = vmax.f32 %v1066, 0.0
        %v1256 = vmax.f32 %v1068, 0.0
        %v1257 = vmax.f32 %v1070, 0.0
        %v1258 = vmax.f32 %v1072, 0.0
        %v1259 = vmax.f32 %v1074, 0.0
        %v1260 = vmax.f32 %v1076, 0.0
        %v1261 = vmax.f32 %v1078, 0.0
        %v1262 = vmax.f32 %v1080, 0.0
        %v1263 = vmax.f32 %v1082, 0.0
        %v1264 = vmax.f32 %v1084, 0.0
        %v1265 = vmax.f32 %v1086, 0.0
        %v1266 = vmax.f32 %v1088, 0.0
        %v1267 = vmax.f32 %v1090, 0.0
        %v1268 = vmax.f32 %v1092, 0.0
        %v1269 = vmax.f32 %v1094, 0.0
        %v1270 = vmax.f32 %v1096, 0.0
        %v1271 = vmax.f32 %v1098, 0.0
        %v1272 = vmax.f32 %v1100, 0.0
        %v1273 = vmax.f32 %v1102, 0.0
        %v1274 = vmax.f32 %v1104, 0.0
        %v1275 = vmax.f32 %v1106, 0.0
        %v1276 = vmax.f32 %v1108, 0.0
        %v1277 = vmax.f32 %v1110, 0.0
        %v1278 = vmax.f32 %v1112, 0.0
        %v1279 = vmax.f32 %v1114, 0.0
        %v1280 = vmax.f32 %v1116, 0.0
        %v1281 = vmax.f32 %v1118, 0.0
        %v1282 = vmax.f32 %v1120, 0.0
        %v1283 = vmax.f32 %v1122, 0.0
        %v1284 = vmax.f32 %v1124, 0.0
        %v1285 = vmax.f32 %v1126, 0.0
        %v1286 = vmax.f32 %v1128, 0.0
        %v1287 = vmax.f32 %v1130, 0.0
        %v1288 = vmax.f32 %v1132, 0.0
        %v1289 = vmax.f32 %v1134, 0.0
        %v1290 = vmax.f32 %v1136, 0.0
        %v1291 = vmax.f32 %v1138, 0.0
        %v1292 = vmax.f32 %v1140, 0.0
        %v1293 = vmax.f32 %v1142, 0.0
        %v1294 = vmax.f32 %v1144, 0.0
        %v1295 = vmax.f32 %v1146, 0.0
        %v1296 = vmax.f32 %v1148, 0.0
        %v1297 = vmax.f32 %v1150, 0.0
        %v1298 = vmax.f32 %v1152, 0.0
        %v1299 = vmax.f32 %v1154, 0.0
        %v1300 = vmax.f32 %v1156, 0.0
        %v1301 = vmax.f32 %v1158, 0.0
        %v1302 = vmax.f32 %v1160, 0.0
        %v1303 = vmax.f32 %v1162, 0.0
        %v1304 = vmax.f32 %v1164, 0.0
        %v1305 = vmax.f32 %v1166, 0.0
        %v1306 = vmax.f32 %v1168, 0.0
        %v1307 = vmax.f32 %v1170, 0.0
        %v1308 = vmax.f32 %v1172, 0.0
        %v1309 = vmax.f32 %v1174, 0.0
        %v1310 = vmax.f32 %v1176, 0.0
        %v1311 = vmax.f32 %v1178, 0.0
        %v1312 = vmax.f32 %v1180, 0.0
        %v1313 = vmax.f32 %v1182, 0.0
        %v1314 = vmax.f32 %v1184, 0.0
        %v1315 = vmax.f32 %v1186, 0.0
        %v1316 = vmax.f32 %v1188, 0.0
        %v1317 = vmax.f32 %v1190, 0.0
        %v1318 = vmax.f32 %v1192, 0.0
        %v1319 = vmax.f32 %v1194, 0.0
        %v1320 = vmax.f32 %v1196, 0.0
        %v1321 = vmax.f32 %v1198, 0.0
        %v1322 = vmax.f32 %v1200, 0.0
        %v1323 = vmax.f32 %v1202, 0.0
        %v1324 = vmax.f32 %v1204, 0.0
        %v1325 = vmax.f32 %v1206, 0.0
        %v1326 = vmax.f32 %v1208, 0.0
        %v1327 = vmax.f32 %v1210, 0.0
        %v1328 = vmax.f32 %v1212, 0.0
        %v1329 = vmax.f32 %v1214, 0.0
        %v1330 = vmax.f32 %v1216, 0.0
        %v1331 = vmax.f32 %v1218, 0.0
        %v1332 = vmax.f32 %v1220, 0.0
        %v1333 = vmax.f32 %v1222, 0.0
        %v1334 = vmax.f32 %v1224, 0.0
        %v1335 = vmax.f32 %v1226, 0.0
        %v1336 = vmax.f32 %v1228, 0.0
        %v1337 = vmax.f32 %v1230, 0.0
        %v1338 = vmax.f32 %v1232, 0.0
        %v1339 = vmax.f32 %v1234, 0.0
        %v1340 = vmax.f32 %v1236, 0.0
        %v1341 = vmax.f32 %v1238, 0.0
        %v1342 = vmax.f32 %v1240, 0.0
        %v1343 = vmax.f32 %v1242, 0.0
        %v1344 = vmax.f32 %v1244, 0.0
        %v1345 = vmax.f32 %v1246, 0.0
        %v1346 = vmax.f32 %v1248, 0.0
        %v1347 = vmax.f32 %v1250, 0.0
        %v1348 = vmax.f32 %v1252, 0.0
        %v1349 = vmin.f32 %v1253, 1.0
        %v1350 = vmin.f32 %v1254, 1.0
        %v1351 = vmin.f32 %v1255, 1.0
        %v1352 = vmin.f32 %v1256, 1.0
        %v1353 = vmin.f32 %v1257, 1.0
        %v1354 = vmin.f32 %v1258, 1.0
        %v1355 = vmin.f32 %v1259, 1.0
        %v1356 = vmin.f32 %v1260, 1.0
        %v1357 = vmin.f32 %v1261, 1.0
        %v1358 = vmin.f32 %v1262, 1.0
        %v1359 = vmin.f32 %v1263, 1.0
        %v1360 = vmin.f32 %v1264, 1.0
        %v1361 = vmin.f32 %v1265, 1.0
        %v1362 = vmin.f32 %v1266, 1.0
        %v1363 = vmin.f32 %v1267, 1.0
        %v1364 = vmin.f32 %v1268, 1.0
        %v1365 = vmin.f32 %v1269, 1.0
        %v1366 = vmin.f32 %v1270, 1.0
        %v1367 = vmin.f32 %v1271, 1.0
        %v1368 = vmin.f32 %v1272, 1.0
        %v1369 = vmin.f32 %v1273, 1.0
        %v1370 = vmin.f32 %v1274, 1.0
        %v1371 = vmin.f32 %v1275, 1.0
        %v1372 = vmin.f32 %v1276, 1.0
        %v1373 = vmin.f32 %v1277, 1.0
        %v1374 = vmin.f32 %v1278, 1.0
        %v1375 = vmin.f32 %v1279, 1.0
        %v1376 = vmin.f32 %v1280, 1.0
        %v1377 = vmin.f32 %v1281, 1.0
        %v1378 = vmin.f32 %v1282, 1.0
        %v1379 = vmin.f32 %v1283, 1.0
        %v1380 = vmin.f32 %v1284, 1.0
        %v1381 = vmin.f32 %v1285, 1.0
        %v1382 = vmin.f32 %v1286, 1.0
        %v1383 = vmin.f32 %v1287, 1.0
        %v1384 = vmin.f32 %v1288, 1.0
        %v1385 = vmin.f32 %v1289, 1.0
        %v1386 = vmin.f32 %v1290, 1.0
        %v1387 = vmin.f32 %v1291, 1.0
        %v1388 = vmin.f32 %v1292, 1.0
        %v1389 = vmin.f32 %v1293, 1.0
        %v1390 = vmin.f32 %v1294, 1.0
        %v1391 = vmin.f32 %v1295, 1.0
        %v1392 = vmin.f32 %v1296, 1.0
        %v1393 = vmin.f32 %v1297, 1.0
        %v1394 = vmin.f32 %v1298, 1.0
        %v1395 = vmin.f32 %v1299, 1.0
        %v1396 = vmin.f32 %v1300, 1.0
        %v1397 = vmin.f32 %v1301, 1.0
        %v1398 = vmin.f32 %v1302, 1.0
        %v1399 = vmin.f32 %v1303, 1.0
        %v1400 = vmin.f32 %v1304, 1.0
        %v1401 = vmin.f32 %v1305, 1.0
        %v1402 = vmin.f32 %v1306, 1.0
        %v1403 = vmin.f32 %v1307, 1.0
        %v1404 = vmin.f32 %v1308, 1.0
        %v1405 = vmin.f32 %v1309, 1.0
        %v1406 = vmin.f32 %v1310, 1.0
        %v1407 = vmin.f32 %v1311, 1.0
        %v1408 = vmin.f32 %v1312, 1.0
        %v1409 = vmin.f32 %v1313, 1.0
        %v1410 = vmin.f32 %v1314, 1.0
        %v1411 = vmin.f32 %v1315, 1.0
        %v1412 = vmin.f32 %v1316, 1.0
        %v1413 = vmin.f32 %v1317, 1.0
        %v1414 = vmin.f32 %v1318, 1.0
        %v1415 = vmin.f32 %v1319, 1.0
        %v1416 = vmin.f32 %v1320, 1.0
        %v1417 = vmin.f32 %v1321, 1.0
        %v1418 = vmin.f32 %v1322, 1.0
        %v1419 = vmin.f32 %v1323, 1.0
        %v1420 = vmin.f32 %v1324, 1.0
        %v1421 = vmin.f32 %v1325, 1.0
        %v1422 = vmin.f32 %v1326, 1.0
        %v1423 = vmin.f32 %v1327, 1.0
        %v1424 = vmin.f32 %v1328, 1.0
        %v1425 = vmin.f32 %v1329, 1.0
        %v1426 = vmin.f32 %v1330, 1.0
        %v1427 = vmin.f32 %v1331, 1.0
        %v1428 = vmin.f32 %v1332, 1.0
        %v1429 = vmin.f32 %v1333, 1.0
        %v1430 = vmin.f32 %v1334, 1.0
        %v1431 = vmin.f32 %v1335, 1.0
        %v1432 = vmin.f32 %v1336, 1.0
        %v1433 = vmin.f32 %v1337, 1.0
        %v1434 = vmin.f32 %v1338, 1.0
        %v1435 = vmin.f32 %v1339, 1.0
        %v1436 = vmin.f32 %v1340, 1.0
        %v1437 = vmin.f32 %v1341, 1.0
        %v1438 = vmin.f32 %v1342, 1.0
        %v1439 = vmin.f32 %v1343, 1.0
        %v1440 = vmin.f32 %v1344, 1.0
        %v1441 = vmin.f32 %v1345, 1.0
        %v1442 = vmin.f32 %v1346, 1.0
        %v1443 = vmin.f32 %v1347, 1.0
        %v1444 = vmin.f32 %v1348, 1.0
        %v1445 = vmul.f32 %v1349, 0.1904
        %v1446 = vmul.f32 %v1350, 0.1904
        %v1447 = vmul.f32 %v1351, 0.1904
        %v1448 = vmul.f32 %v1352, 0.1904
        %v1449 = vmul.f32 %v1353, 0.1904
        %v1450 = vmul.f32 %v1354, 0.1904
        %v1451 = vmul.f32 %v1355, 0.1904
        %v1452 = vmul.f32 %v1356, 0.1904
        %v1453 = vmul.f32 %v1357, 0.1904
        %v1454 = vmul.f32 %v1358, 0.1904
        %v1455 = vmul.f32 %v1359, 0.1904
        %v1456 = vmul.f32 %v1360, 0.1904
        %v1457 = vmul.f32 %v1361, 0.1904
        %v1458 = vmul.f32 %v1362, 0.1904
        %v1459 = vmul.f32 %v1363, 0.1904
        %v1460 = vmul.f32 %v1364, 0.1904
        %v1461 = vmul.f32 %v1365, 0.1904
        %v1462 = vmul.f32 %v1366, 0.1904
        %v1463 = vmul.f32 %v1367, 0.1904
        %v1464 = vmul.f32 %v1368, 0.1904
        %v1465 = vmul.f32 %v1369, 0.1904
        %v1466 = vmul.f32 %v1370, 0.1904
        %v1467 = vmul.f32 %v1371, 0.1904
        %v1468 = vmul.f32 %v1372, 0.1904
        %v1469 = vmul.f32 %v1373, 0.1904
        %v1470 = vmul.f32 %v1374, 0.1904
        %v1471 = vmul.f32 %v1375, 0.1904
        %v1472 = vmul.f32 %v1376, 0.1904
        %v1473 = vmul.f32 %v1377, 0.1904
        %v1474 = vmul.f32 %v1378, 0.1904
        %v1475 = vmul.f32 %v1379, 0.1904
        %v1476 = vmul.f32 %v1380, 0.1904
        %v1477 = vmul.f32 %v1381, 0.7646
        %v1478 = vmul.f32 %v1382, 0.7646
        %v1479 = vmul.f32 %v1383, 0.7646
        %v1480 = vmul.f32 %v1384, 0.7646
        %v1481 = vmul.f32 %v1385, 0.7646
        %v1482 = vmul.f32 %v1386, 0.7646
        %v1483 = vmul.f32 %v1387, 0.7646
        %v1484 = vmul.f32 %v1388, 0.7646
        %v1485 = vmul.f32 %v1389, 0.7646
        %v1486 = vmul.f32 %v1390, 0.7646
        %v1487 = vmul.f32 %v1391, 0.7646
        %v1488 = vmul.f32 %v1392, 0.7646
        %v1489 = vmul.f32 %v1393, 0.7646
        %v1490 = vmul.f32 %v1394, 0.7646
        %v1491 = vmul.f32 %v1395, 0.7646
        %v1492 = vmul.f32 %v1396, 0.7646
        %v1493 = vmul.f32 %v1397, 0.7646
        %v1494 = vmul.f32 %v1398, 0.7646
        %v1495 = vmul.f32 %v1399, 0.7646
        %v1496 = vmul.f32 %v1400, 0.7646
        %v1497 = vmul.f32 %v1401, 0.7646
        %v1498 = vmul.f32 %v1402, 0.7646
        %v1499 = vmul.f32 %v1403, 0.7646
        %v1500 = vmul.f32 %v1404, 0.7646
        %v1501 = vmul.f32 %v1405, 0.7646
        %v1502 = vmul.f32 %v1406, 0.7646
        %v1503 = vmul.f32 %v1407, 0.7646
        %v1504 = vmul.f32 %v1408, 0.7646
        %v1505 = vmul.f32 %v1409, 0.7646
        %v1506 = vmul.f32 %v1410, 0.7646
        %v1507 = vmul.f32 %v1411, 0.7646
        %v1508 = vmul.f32 %v1412, 0.7646
        %v1509 = vadd.f32 %v1445, %v1477
        %v1510 = vadd.f32 %v1446, %v1478
        %v1511 = vadd.f32 %v1447, %v1479
        %v1512 = vadd.f32 %v1448, %v1480
        %v1513 = vadd.f32 %v1449, %v1481
        %v1514 = vadd.f32 %v1450, %v1482
        %v1515 = vadd.f32 %v1451, %v1483
        %v1516 = vadd.f32 %v1452, %v1484
        %v1517 = vadd.f32 %v1453, %v1485
        %v1518 = vadd.f32 %v1454, %v1486
        %v1519 = vadd.f32 %v1455, %v1487
        %v1520 = vadd.f32 %v1456, %v1488
        %v1521 = vadd.f32 %v1457, %v1489
        %v1522 = vadd.f32 %v1458, %v1490
        %v1523 = vadd.f32 %v1459, %v1491
        %v1524 = vadd.f32 %v1460, %v1492
        %v1525 = vadd.f32 %v1461, %v1493
        %v1526 = vadd.f32 %v1462, %v1494
        %v1527 = vadd.f32 %v1463, %v1495
        %v1528 = vadd.f32 %v1464, %v1496
        %v1529 = vadd.f32 %v1465, %v1497
        %v1530 = vadd.f32 %v1466, %v1498
        %v1531 = vadd.f32 %v1467, %v1499
        %v1532 = vadd.f32 %v1468, %v1500
        %v1533 = vadd.f32 %v1469, %v1501
        %v1534 = vadd.f32 %v1470, %v1502
        %v1535 = vadd.f32 %v1471, %v1503
        %v1536 = vadd.f32 %v1472, %v1504
        %v1537 = vadd.f32 %v1473, %v1505
        %v1538 = vadd.f32 %v1474, %v1506
        %v1539 = vadd.f32 %v1475, %v1507
        %v1540 = vadd.f32 %v1476, %v1508
        %v1541 = vmul.f32 %v1413, 0.045
        %v1542 = vmul.f32 %v1414, 0.045
        %v1543 = vmul.f32 %v1415, 0.045
        %v1544 = vmul.f32 %v1416, 0.045
        %v1545 = vmul.f32 %v1417, 0.045
        %v1546 = vmul.f32 %v1418, 0.045
        %v1547 = vmul.f32 %v1419, 0.045
        %v1548 = vmul.f32 %v1420, 0.045
        %v1549 = vmul.f32 %v1421, 0.045
        %v1550 = vmul.f32 %v1422, 0.045
        %v1551 = vmul.f32 %v1423, 0.045
        %v1552 = vmul.f32 %v1424, 0.045
        %v1553 = vmul.f32 %v1425, 0.045
        %v1554 = vmul.f32 %v1426, 0.045
        %v1555 = vmul.f32 %v1427, 0.045
        %v1556 = vmul.f32 %v1428, 0.045
        %v1557 = vmul.f32 %v1429, 0.045
        %v1558 = vmul.f32 %v1430, 0.045
        %v1559 = vmul.f32 %v1431, 0.045
        %v1560 = vmul.f32 %v1432, 0.045
        %v1561 = vmul.f32 %v1433, 0.045
        %v1562 = vmul.f32 %v1434, 0.045
        %v1563 = vmul.f32 %v1435, 0.045
        %v1564 = vmul.f32 %v1436, 0.045
        %v1565 = vmul.f32 %v1437, 0.045
        %v1566 = vmul.f32 %v1438, 0.045
        %v1567 = vmul.f32 %v1439, 0.045
        %v1568 = vmul.f32 %v1440, 0.045
        %v1569 = vmul.f32 %v1441, 0.045
        %v1570 = vmul.f32 %v1442, 0.045
        %v1571 = vmul.f32 %v1443, 0.045
        %v1572 = vmul.f32 %v1444, 0.045
        %v1573 = vadd.f32 %v1509, %v1541
        %v1574 = vadd.f32 %v1510, %v1542
        %v1575 = vadd.f32 %v1511, %v1543
        %v1576 = vadd.f32 %v1512, %v1544
        %v1577 = vadd.f32 %v1513, %v1545
        %v1578 = vadd.f32 %v1514, %v1546
        %v1579 = vadd.f32 %v1515, %v1547
        %v1580 = vadd.f32 %v1516, %v1548
        %v1581 = vadd.f32 %v1517, %v1549
        %v1582 = vadd.f32 %v1518, %v1550
        %v1583 = vadd.f32 %v1519, %v1551
        %v1584 = vadd.f32 %v1520, %v1552
        %v1585 = vadd.f32 %v1521, %v1553
        %v1586 = vadd.f32 %v1522, %v1554
        %v1587 = vadd.f32 %v1523, %v1555
        %v1588 = vadd.f32 %v1524, %v1556
        %v1589 = vadd.f32 %v1525, %v1557
        %v1590 = vadd.f32 %v1526, %v1558
        %v1591 = vadd.f32 %v1527, %v1559
        %v1592 = vadd.f32 %v1528, %v1560
        %v1593 = vadd.f32 %v1529, %v1561
        %v1594 = vadd.f32 %v1530, %v1562
        %v1595 = vadd.f32 %v1531, %v1563
        %v1596 = vadd.f32 %v1532, %v1564
        %v1597 = vadd.f32 %v1533, %v1565
        %v1598 = vadd.f32 %v1534, %v1566
        %v1599 = vadd.f32 %v1535, %v1567
        %v1600 = vadd.f32 %v1536, %v1568
        %v1601 = vadd.f32 %v1537, %v1569
        %v1602 = vadd.f32 %v1538, %v1570
        %v1603 = vadd.f32 %v1539, %v1571
        %v1604 = vadd.f32 %v1540, %v1572
        %v1605 = vmul.f32 %v1573, 200.0
        %v1606 = vmul.f32 %v1574, 200.0
        %v1607 = vmul.f32 %v1575, 200.0
        %v1608 = vmul.f32 %v1576, 200.0
        %v1609 = vmul.f32 %v1577, 200.0
        %v1610 = vmul.f32 %v1578, 200.0
        %v1611 = vmul.f32 %v1579, 200.0
        %v1612 = vmul.f32 %v1580, 200.0
        %v1613 = vmul.f32 %v1581, 200.0
        %v1614 = vmul.f32 %v1582, 200.0
        %v1615 = vmul.f32 %v1583, 200.0
        %v1616 = vmul.f32 %v1584, 200.0
        %v1617 = vmul.f32 %v1585, 200.0
        %v1618 = vmul.f32 %v1586, 200.0
        %v1619 = vmul.f32 %v1587, 200.0
        %v1620 = vmul.f32 %v1588, 200.0
        %v1621 = vmul.f32 %v1589, 200.0
        %v1622 = vmul.f32 %v1590, 200.0
        %v1623 = vmul.f32 %v1591, 200.0
        %v1624 = vmul.f32 %v1592, 200.0
        %v1625 = vmul.f32 %v1593, 200.0
        %v1626 = vmul.f32 %v1594, 200.0
        %v1627 = vmul.f32 %v1595, 200.0
        %v1628 = vmul.f32 %v1596, 200.0
        %v1629 = vmul.f32 %v1597, 200.0
        %v1630 = vmul.f32 %v1598, 200.0
        %v1631 = vmul.f32 %v1599, 200.0
        %v1632 = vmul.f32 %v1600, 200.0
        %v1633 = vmul.f32 %v1601, 200.0
        %v1634 = vmul.f32 %v1602, 200.0
        %v1635 = vmul.f32 %v1603, 200.0
        %v1636 = vmul.f32 %v1604, 200.0
        %v1637 = vpow.f32 %v1605, 0.45454547
        %v1638 = vpow.f32 %v1606, 0.45454547
        %v1639 = vpow.f32 %v1607, 0.45454547
        %v1640 = vpow.f32 %v1608, 0.45454547
        %v1641 = vpow.f32 %v1609, 0.45454547
        %v1642 = vpow.f32 %v1610, 0.45454547
        %v1643 = vpow.f32 %v1611, 0.45454547
        %v1644 = vpow.f32 %v1612, 0.45454547
        %v1645 = vpow.f32 %v1613, 0.45454547
        %v1646 = vpow.f32 %v1614, 0.45454547
        %v1647 = vpow.f32 %v1615, 0.45454547
        %v1648 = vpow.f32 %v1616, 0.45454547
        %v1649 = vpow.f32 %v1617, 0.45454547
        %v1650 = vpow.f32 %v1618, 0.45454547
        %v1651 = vpow.f32 %v1619, 0.45454547
        %v1652 = vpow.f32 %v1620, 0.45454547
        %v1653 = vpow.f32 %v1621, 0.45454547
        %v1654 = vpow.f32 %v1622, 0.45454547
        %v1655 = vpow.f32 %v1623, 0.45454547
        %v1656 = vpow.f32 %v1624, 0.45454547
        %v1657 = vpow.f32 %v1625, 0.45454547
        %v1658 = vpow.f32 %v1626, 0.45454547
        %v1659 = vpow.f32 %v1627, 0.45454547
        %v1660 = vpow.f32 %v1628, 0.45454547
        %v1661 = vpow.f32 %v1629, 0.45454547
        %v1662 = vpow.f32 %v1630, 0.45454547
        %v1663 = vpow.f32 %v1631, 0.45454547
        %v1664 = vpow.f32 %v1632, 0.45454547
        %v1665 = vpow.f32 %v1633, 0.45454547
        %v1666 = vpow.f32 %v1634, 0.45454547
        %v1667 = vpow.f32 %v1635, 0.45454547
        %v1668 = vpow.f32 %v1636, 0.45454547
        %v1669 = vpack.c.bf16 %v1639, %v1637
        %v1670 = vpack.c.bf16 %v1640, %v1638
        %v1671 = vpack.c.bf16 %v1643, %v1641
        %v1672 = vpack.c.bf16 %v1644, %v1642
        %v1673 = vpack.c.bf16 %v1647, %v1645
        %v1674 = vpack.c.bf16 %v1648, %v1646
        %v1675 = vpack.c.bf16 %v1651, %v1649
        %v1676 = vpack.c.bf16 %v1652, %v1650
        %v1677 = vpack.c.bf16 %v1655, %v1653
        %v1678 = vpack.c.bf16 %v1656, %v1654
        %v1679 = vpack.c.bf16 %v1659, %v1657
        %v1680 = vpack.c.bf16 %v1660, %v1658
        %v1681 = vpack.c.bf16 %v1663, %v1661
        %v1682 = vpack.c.bf16 %v1664, %v1662
        %v1683 = vpack.c.bf16 %v1667, %v1665
        %v1684 = vpack.c.bf16 %v1668, %v1666
        %v1701 = vunpack.c.l.b16 %v1669
        %v1702 = vunpack.c.l.b16 %v1670
        %v1703 = vunpack.c.h.b16 %v1669
        %v1704 = vunpack.c.h.b16 %v1670
        %v1705 = vunpack.c.l.b16 %v1671
        %v1706 = vunpack.c.l.b16 %v1672
        %v1707 = vunpack.c.h.b16 %v1671
        %v1708 = vunpack.c.h.b16 %v1672
        %v1709 = vunpack.c.l.b16 %v1673
        %v1710 = vunpack.c.l.b16 %v1674
        %v1711 = vunpack.c.h.b16 %v1673
        %v1712 = vunpack.c.h.b16 %v1674
        %v1713 = vunpack.c.l.b16 %v1675
        %v1714 = vunpack.c.l.b16 %v1676
        %v1715 = vunpack.c.h.b16 %v1675
        %v1716 = vunpack.c.h.b16 %v1676
        %v1717 = vunpack.c.l.b16 %v1677
        %v1718 = vunpack.c.l.b16 %v1678
        %v1719 = vunpack.c.h.b16 %v1677
        %v1720 = vunpack.c.h.b16 %v1678
        %v1721 = vunpack.c.l.b16 %v1679
        %v1722 = vunpack.c.l.b16 %v1680
        %v1723 = vunpack.c.h.b16 %v1679
        %v1724 = vunpack.c.h.b16 %v1680
        %v1725 = vunpack.c.l.b16 %v1681
        %v1726 = vunpack.c.l.b16 %v1682
        %v1727 = vunpack.c.h.b16 %v1681
        %v1728 = vunpack.c.h.b16 %v1682
        %v1729 = vunpack.c.l.b16 %v1683
        %v1730 = vunpack.c.l.b16 %v1684
        %v1731 = vunpack.c.h.b16 %v1683
        %v1732 = vunpack.c.h.b16 %v1684
        %v1733 = vpack.c.b16 %v1702, %v1701
        %v1734 = vpack.c.b16 %v1704, %v1703
        %v1735 = vpack.c.b16 %v1706, %v1705
        %v1736 = vpack.c.b16 %v1708, %v1707
        %v1737 = vpack.c.b16 %v1710, %v1709
        %v1738 = vpack.c.b16 %v1712, %v1711
        %v1739 = vpack.c.b16 %v1714, %v1713
        %v1740 = vpack.c.b16 %v1716, %v1715
        %v1741 = vpack.c.b16 %v1718, %v1717
        %v1742 = vpack.c.b16 %v1720, %v1719
        %v1743 = vpack.c.b16 %v1722, %v1721
        %v1744 = vpack.c.b16 %v1724, %v1723
        %v1745 = vpack.c.b16 %v1726, %v1725
        %v1746 = vpack.c.b16 %v1728, %v1727
        %v1747 = vpack.c.b16 %v1730, %v1729
        %v1748 = vpack.c.b16 %v1732, %v1731
        %1765 = vst [vmem:[%s193] sm:$0xff] %v1733
        %1766 = vst [vmem:[%s193 + $0x8] sm:$0xff] %v1734
        %1767 = vst [vmem:[%s193 + $0x10] sm:$0xff] %v1735
        %1768 = vst [vmem:[%s193 + $0x18] sm:$0xff] %v1736
        %1769 = vst [vmem:[%s193 + $0x20] sm:$0xff] %v1737
        %1770 = vst [vmem:[%s193 + $0x28] sm:$0xff] %v1738
        %1771 = vst [vmem:[%s193 + $0x30] sm:$0xff] %v1739
        %1772 = vst [vmem:[%s193 + $0x38] sm:$0xff] %v1740
        %1773 = vst [vmem:[%s193 + $0x40] sm:$0xff] %v1741
        %1774 = vst [vmem:[%s193 + $0x48] sm:$0xff] %v1742
        %1775 = vst [vmem:[%s193 + $0x50] sm:$0xff] %v1743
        %1776 = vst [vmem:[%s193 + $0x58] sm:$0xff] %v1744
        %1777 = vst [vmem:[%s193 + $0x60] sm:$0xff] %v1745
        %1778 = vst [vmem:[%s193 + $0x68] sm:$0xff] %v1746
        %1779 = vst [vmem:[%s193 + $0x70] sm:$0xff] %v1747
        %1780 = vst [vmem:[%s193 + $0x78] sm:$0xff] %v1748
        %s1781 = smul.u32 16, %s17
        %p1782 = scmp.lt.s32.totalorder %s1781, 31
        %s1783 = scalar_select %p1782, %s1781, 31
        %s1784 = smul.addr %s1783, 2
        %s1785 = smul.addr %s1784, 4
        %s1786 = scalar_lea.vmem %s2, %s1785
        // Predicated region
        $region33: #{aces_forward.2} parent=27 // pred_check
          %p1787 = pneg %p82
        $region34: #{aces_forward.2} parent=27 // pred_check_branch
          %1789 = sbr.rel (%p1787) target = $region36
        $region35: #{aces_forward.2} parent=27 // pred_region
          %s1790 = smul.u32 16, %s17
        $region36: #{aces_forward.2} parent=27 // pred_fallthru
          _
      $region28: #{aces_forward.2} parent=5 // pred_fallthru
        _
      %p1791 = scmp.le.s32.totalorder 2, %s12
      // Predicated region
      $region37: #{aces_forward.2} parent=5 // pred_check
        %p1792 = pneg %p1791
      $region38: #{aces_forward.2} parent=5 // pred_check_branch
        %1794 = sbr.rel (%p1792) target = $region40
      $region39: #{aces_forward.2} parent=5 // pred_region
        %s1795 = ssub.s32 %s12, 2
        // Predicated region
        $region41: #{aces_forward.2} parent=39 // pred_check
          %p1796 = pneg %p88
        $region42: #{aces_forward.2} parent=39 // pred_check_branch
          %1798 = sbr.rel (%p1796) target = $region44
        $region43: #{aces_forward.2} parent=39 // pred_region
          %s1799 = smul.u32 16, %s18
          %p1800 = scmp.lt.s32.totalorder %s1799, 31
          %s1801 = scalar_select %p1800, %s1799, 31
          %s1802 = smul.addr %s1801, 2
          %s1803 = smul.addr %s1802, 4
          %s1804 = scalar_lea.vmem %s2, %s1803
        $region44: #{aces_forward.2} parent=39 // pred_fallthru
          _
      $region40: #{aces_forward.2} parent=5 // pred_fallthru
        _
    $region6: #{aces_forward.2} parent=1 // loop_footer
      %s16 = sadd.s32 1, %s12
    $region7: #{aces_forward.2} parent=1 // loop_footer_branch
      %11 = sbr.rel target = $region3
    $region8: #{aces_forward.2} parent=1 // loop_exit
      _
    %1805 = vsyncpa [#allocation4], 1
    %s1806 = scalar_lea.sflag [#allocation4], 1
    %1807 = vsyncpa %s1806, 1

</llo_original>
